<compile_context>
chip_gen: v7x
topology: tpu7x:2x2x1
jax: 0.10.0
libtpu: 0.0.40
codegen_flags: <defaults>
</compile_context>

<pallas_src>
import functools

import jax
import jax.numpy as jnp
from jax.experimental import pallas as pl
from jax.experimental.pallas import tpu as pltpu

EPS = 1e-5  # nn.InstanceNorm2d default eps

# 3x3 tap offsets (dy, dx), tap-major order matching the weight flattening.
_TAPS = tuple((ky - 1, kx - 1) for ky in range(3) for kx in range(3))


# ----------------------------------------------------------------------------
# In-kernel helpers
# ----------------------------------------------------------------------------
def _conv3x3_in(x, w_ref, b_ref, masks, *, width, apply_relu):
    """3x3 same-conv (roll + mask VPU MACs) + InstanceNorm2d + optional ReLU.

    x      : [Cin, HW]      activation, spatial flattened on the lane axis
    w_ref  : [Cout, 9*Cin]  flattened weights, tap-major / cin-minor
    b_ref  : [Cout, 1]      bias
    masks  : [9, HW]        per-tap validity masks (zero-padding at borders)
    """
    cin, hw = x.shape
    cout = w_ref.shape[0]
    acc = jnp.zeros((cout, hw), jnp.float32)
    for t, (dy, dx) in enumerate(_TAPS):
        # out[p] needs in[p + dy*W + dx]  ->  roll by -(dy*W + dx) (mod HW)
        shift = (-(dy * width + dx)) % hw
        xs = x if shift == 0 else pltpu.roll(x, shift, 1)
        xs = xs * masks[t:t + 1, :]                 # zero wrapped (padded) taps
        for ci in range(cin):
            k = t * cin + ci
            # [Cout,1] * [1,HW] broadcast MAC on the VPU (MXU skipped: dim=4)
            acc = acc + w_ref[:, k:k + 1] * xs[ci:ci + 1, :]
    acc = acc + b_ref[...]            # cancelled by IN, kept for fidelity
    # InstanceNorm2d (affine=False): per-channel stats over the lane axis
    mean = jnp.mean(acc, axis=1, keepdims=True)
    var = jnp.mean(jnp.square(acc - mean), axis=1, keepdims=True)
    y = (acc - mean) * jax.lax.rsqrt(var + EPS)
    if apply_relu:
        y = jnp.maximum(y, 0.0)
    return y


def _style_attention_kernel(masks_ref, content_ref, style_ref,
                            cw0_ref, cb0_ref, cw1_ref, cb1_ref,
                            sw0_ref, sb0_ref, sw1_ref, sb1_ref,
                            content_out_ref, style_upd_ref, content_upd_ref,
                            *, width):
    """One grid step == one image: both conv branches + mask/residual fusion."""
    masks = masks_ref[...]            # [9, HW]
    content = content_ref[...]        # [C, HW]
    style = style_ref[...]            # [C, HW]

    conv = functools.partial(_conv3x3_in, masks=masks, width=width,
                             apply_relu=True)

    # TODO(synk): the PyTorch forward calls self.style_mask_net, which is never
    # defined in __init__; interpreted here as self.style_conv_block.
    s = conv(style, sw0_ref, sb0_ref)
    style_update = conv(s, sw1_ref, sb1_ref)

    c = conv(content, cw0_ref, cb0_ref)
    content_update = conv(c, cw1_ref, cb1_ref)

    # style_mask = sigmoid(style_update); divide goes to the EUP slot.
    style_mask = pl.reciprocal(1.0 + jnp.exp(-style_update), approx=True)
    content_update = content_update * style_mask
    content_output = content_update + content

    content_out_ref[...] = content_output
    style_upd_ref[...] = style_update
    content_upd_ref[...] = content_update


# ----------------------------------------------------------------------------
# Host-side glue (pure reshapes / tiny constant tables, no big HBM tensors)
# ----------------------------------------------------------------------------
def _tap_masks(h, w):
    """[9, H*W] validity masks for the 9 taps of a padding=1 3x3 conv."""
    idx = jnp.arange(h * w, dtype=jnp.int32)
    hh = idx // w
    ww = idx % w
    rows = []
    for dy, dx in _TAPS:
        valid = ((hh + dy >= 0) & (hh + dy < h) &
                 (ww + dx >= 0) & (ww + dx < w))
        rows.append(valid.astype(jnp.float32))
    return jnp.stack(rows, axis=0)


def _flatten_weight(wt):
    """[Cout, Cin, 3, 3] -> [Cout, 9*Cin], tap-major / cin-minor."""
    cout = wt.shape[0]
    return jnp.transpose(wt, (0, 2, 3, 1)).reshape(cout, -1)


@jax.jit
def style_attention_block_forward(content_nchw, style_nchw, params):
    """Inputs/outputs are NCHW to match the PyTorch module."""
    n, c, h, w = content_nchw.shape
    hw = h * w
    content = content_nchw.reshape(n, c, hw).astype(jnp.float32)
    style = style_nchw.reshape(n, c, hw).astype(jnp.float32)
    masks = _tap_masks(h, w)

    def full(shape):
        zeros = (0,) * len(shape)
        return pl.BlockSpec(shape, lambda i: zeros)

    img = pl.BlockSpec((None, c, hw), lambda i: (i, 0, 0))   # one image / step
    wspec = full((c, 9 * c))
    bspec = full((c, 1))

    kern = functools.partial(_style_attention_kernel, width=w)
    out_sds = jax.ShapeDtypeStruct((n, c, hw), jnp.float32)

    content_out, style_update, content_update = pl.pallas_call(
        kern,
        grid=(n,),
        in_specs=[full((9, hw)), img, img,
                  wspec, bspec, wspec, bspec,
                  wspec, bspec, wspec, bspec],
        out_specs=(img, img, img),
        out_shape=(out_sds, out_sds, out_sds),
        compiler_params=pltpu.CompilerParams(
            dimension_semantics=("parallel",)),
    )(masks, content, style,
      _flatten_weight(params["content_w0"]), params["content_b0"].reshape(c, 1),
      _flatten_weight(params["content_w1"]), params["content_b1"].reshape(c, 1),
      _flatten_weight(params["style_w0"]), params["style_b0"].reshape(c, 1),
      _flatten_weight(params["style_w1"]), params["style_b1"].reshape(c, 1))

    content_output = content_out.reshape(n, c, h, w)
    content_update = content_update.reshape(n, c, h, w)
    style_update = style_update.reshape(n, c, h, w)
    style_output = jnp.concatenate([style_update, content_output], axis=1)
    return content_output, style_output, content_update


# ----------------------------------------------------------------------------
# Pure-JAX reference (for correctness verification only)
# ----------------------------------------------------------------------------
def _reference_forward(content, style, params):
    def conv_in_relu(x, w, b):
        y = jax.lax.conv_general_dilated(
            x, w, window_strides=(1, 1), padding=((1, 1), (1, 1)),
            dimension_numbers=("NCHW", "OIHW", "NCHW"),
            precision=jax.lax.Precision.HIGHEST)
        y = y + b.reshape(1, -1, 1, 1)
        mean = y.mean(axis=(2, 3), keepdims=True)
        var = jnp.square(y - mean).mean(axis=(2, 3), keepdims=True)
        y = (y - mean) * jax.lax.rsqrt(var + EPS)
        return jnp.maximum(y, 0.0)

    def block(x, w0, b0, w1, b1):
        return conv_in_relu(conv_in_relu(x, w0, b0), w1, b1)

    style_update = block(style, params["style_w0"], params["style_b0"],
                         params["style_w1"], params["style_b1"])
    content_update = block(content, params["content_w0"], params["content_b0"],
                           params["content_w1"], params["content_b1"])
    style_mask = jax.nn.sigmoid(style_update)
    content_update = content_update * style_mask
    content_output = content_update + content
    style_output = jnp.concatenate([style_update, content_output], axis=1)
    return content_output, style_output, content_update


# ----------------------------------------------------------------------------
# Deterministic parameter init (synthetic weights; shapes match nn.Conv2d)
# ----------------------------------------------------------------------------
def init_params(dim, key):
    keys = jax.random.split(key, 8)
    scale = 1.0 / (dim * 9) ** 0.5             # ~ PyTorch conv default bound

    def conv_w(k):
        return jax.random.uniform(k, (dim, dim, 3, 3), jnp.float32,
                                  minval=-scale, maxval=scale)

    def conv_b(k):
        return jax.random.uniform(k, (dim,), jnp.float32,
                                  minval=-scale, maxval=scale)

    return {
        "content_w0": conv_w(keys[0]), "content_b0": conv_b(keys[1]),
        "content_w1": conv_w(keys[2]), "content_b1": conv_b(keys[3]),
        "style_w0": conv_w(keys[4]), "style_b0": conv_b(keys[5]),
        "style_w1": conv_w(keys[6]), "style_b1": conv_b(keys[7]),
    }


if __name__ == "__main__":
    dim = 4
    N, H, W = 2, 16, 16
    key = jax.random.PRNGKey(0)
    k_c, k_s, k_p = jax.random.split(key, 3)

    content = jax.random.normal(k_c, (N, dim, H, W), jnp.float32)   # NCHW
    style = jax.random.normal(k_s, (N, dim, H, W), jnp.float32)     # NCHW
    params = init_params(dim, k_p)

    outs = jax.block_until_ready(
        style_attention_block_forward(content, style, params))
    content_output, style_output, content_update = outs

    assert content_output.shape == (N, dim, H, W)
    assert style_output.shape == (N, 2 * dim, H, W)
    assert content_update.shape == (N, dim, H, W)

    # Numerical check against the plain-JAX/XLA reference (tolerance absorbs
    # the approx-reciprocal sigmoid and accumulation-order differences).
    refs = _reference_forward(content, style, params)
    for got, want in zip(outs, refs):
        assert float(jnp.max(jnp.abs(got - want))) < 2e-2

    print("KERNEL_OK")
</pallas_src>

<mosaic_0001>
module attributes {stable_mosaic.version = 11 : i64} {
  func.func @_style_attention_kernel(%arg0: i32, %arg1: memref<9x256xf32, #tpu.memory_space<vmem>>, %arg2: memref<1x4x256xf32, #tpu.memory_space<vmem>>, %arg3: memref<1x4x256xf32, #tpu.memory_space<vmem>>, %arg4: memref<4x36xf32, #tpu.memory_space<vmem>>, %arg5: memref<4x1xf32, #tpu.memory_space<vmem>>, %arg6: memref<4x36xf32, #tpu.memory_space<vmem>>, %arg7: memref<4x1xf32, #tpu.memory_space<vmem>>, %arg8: memref<4x36xf32, #tpu.memory_space<vmem>>, %arg9: memref<4x1xf32, #tpu.memory_space<vmem>>, %arg10: memref<4x36xf32, #tpu.memory_space<vmem>>, %arg11: memref<4x1xf32, #tpu.memory_space<vmem>>, %arg12: memref<1x4x256xf32, #tpu.memory_space<vmem>>, %arg13: memref<1x4x256xf32, #tpu.memory_space<vmem>>, %arg14: memref<1x4x256xf32, #tpu.memory_space<vmem>>) attributes {dimension_semantics = [#tpu.dimension_semantics<parallel>], iteration_bounds = array<i64: 2>, scalar_prefetch = 0 : i64, scratch_operands = 0 : i64, tpu.core_type = #tpu.core_type<tc>, window_params = [{pipeline_mode = #tpu.pipeline_mode<synchronous>, transform_indices = @transform_0, window_bounds = array<i64: 9, 256>}, {transform_indices = @transform_1, window_bounds = array<i64: 1, 4, 256>}, {transform_indices = @transform_2, window_bounds = array<i64: 1, 4, 256>}, {pipeline_mode = #tpu.pipeline_mode<synchronous>, transform_indices = @transform_3, window_bounds = array<i64: 4, 36>}, {pipeline_mode = #tpu.pipeline_mode<synchronous>, transform_indices = @transform_4, window_bounds = array<i64: 4, 1>}, {pipeline_mode = #tpu.pipeline_mode<synchronous>, transform_indices = @transform_5, window_bounds = array<i64: 4, 36>}, {pipeline_mode = #tpu.pipeline_mode<synchronous>, transform_indices = @transform_6, window_bounds = array<i64: 4, 1>}, {pipeline_mode = #tpu.pipeline_mode<synchronous>, transform_indices = @transform_7, window_bounds = array<i64: 4, 36>}, {pipeline_mode = #tpu.pipeline_mode<synchronous>, transform_indices = @transform_8, window_bounds = array<i64: 4, 1>}, {pipeline_mode = #tpu.pipeline_mode<synchronous>, transform_indices = @transform_9, window_bounds = array<i64: 4, 36>}, {pipeline_mode = #tpu.pipeline_mode<synchronous>, transform_indices = @transform_10, window_bounds = array<i64: 4, 1>}, {transform_indices = @transform_11, window_bounds = array<i64: 1, 4, 256>}, {transform_indices = @transform_12, window_bounds = array<i64: 1, 4, 256>}, {transform_indices = @transform_13, window_bounds = array<i64: 1, 4, 256>}]} {
    %c0 = arith.constant 0 : index
    %c0_0 = arith.constant 0 : index
    %0 = vector.load %arg1[%c0, %c0_0] : memref<9x256xf32, #tpu.memory_space<vmem>>, vector<9x256xf32>
    %c0_1 = arith.constant 0 : index
    %c0_2 = arith.constant 0 : index
    %c0_3 = arith.constant 0 : index
    %1 = vector.load %arg2[%c0_1, %c0_2, %c0_3] : memref<1x4x256xf32, #tpu.memory_space<vmem>>, vector<1x4x256xf32>
    %2 = vector.shape_cast %1 : vector<1x4x256xf32> to vector<4x256xf32>
    %c0_4 = arith.constant 0 : index
    %c0_5 = arith.constant 0 : index
    %c0_6 = arith.constant 0 : index
    %3 = vector.load %arg3[%c0_4, %c0_5, %c0_6] : memref<1x4x256xf32, #tpu.memory_space<vmem>>, vector<1x4x256xf32>
    %4 = vector.shape_cast %3 : vector<1x4x256xf32> to vector<4x256xf32>
    %cst = arith.constant 0.000000e+00 : f32
    %5 = vector.broadcast %cst : f32 to vector<4x256xf32>
    %c17_i32 = arith.constant 17 : i32
    %6 = tpu.dynamic_rotate %4 by %c17_i32 dim 1 : vector<4x256xf32>, i32 -> vector<4x256xf32>
    %7 = vector.extract_strided_slice %0 {offsets = [0, 0], sizes = [1, 256], strides = [1, 1]} : vector<9x256xf32> to vector<1x256xf32>
    %8 = vector.broadcast %7 : vector<1x256xf32> to vector<4x256xf32>
    %9 = arith.mulf %6, %8 : vector<4x256xf32>
    %c0_7 = arith.constant 0 : index
    %c0_8 = arith.constant 0 : index
    %10 = vector.load %arg8[%c0_7, %c0_8] : memref<4x36xf32, #tpu.memory_space<vmem>>, vector<4x1xf32>
    %11 = vector.extract_strided_slice %9 {offsets = [0, 0], sizes = [1, 256], strides = [1, 1]} : vector<4x256xf32> to vector<1x256xf32>
    %12 = vector.broadcast %10 : vector<4x1xf32> to vector<4x256xf32>
    %13 = vector.broadcast %11 : vector<1x256xf32> to vector<4x256xf32>
    %14 = arith.mulf %12, %13 : vector<4x256xf32>
    %15 = arith.addf %5, %14 : vector<4x256xf32>
    %c0_9 = arith.constant 0 : index
    %c1 = arith.constant 1 : index
    %16 = vector.load %arg8[%c0_9, %c1] : memref<4x36xf32, #tpu.memory_space<vmem>>, vector<4x1xf32>
    %17 = vector.extract_strided_slice %9 {offsets = [1, 0], sizes = [1, 256], strides = [1, 1]} : vector<4x256xf32> to vector<1x256xf32>
    %18 = vector.broadcast %16 : vector<4x1xf32> to vector<4x256xf32>
    %19 = vector.broadcast %17 : vector<1x256xf32> to vector<4x256xf32>
    %20 = arith.mulf %18, %19 : vector<4x256xf32>
    %21 = arith.addf %15, %20 : vector<4x256xf32>
    %c0_10 = arith.constant 0 : index
    %c2 = arith.constant 2 : index
    %22 = vector.load %arg8[%c0_10, %c2] : memref<4x36xf32, #tpu.memory_space<vmem>>, vector<4x1xf32>
    %23 = vector.extract_strided_slice %9 {offsets = [2, 0], sizes = [1, 256], strides = [1, 1]} : vector<4x256xf32> to vector<1x256xf32>
    %24 = vector.broadcast %22 : vector<4x1xf32> to vector<4x256xf32>
    %25 = vector.broadcast %23 : vector<1x256xf32> to vector<4x256xf32>
    %26 = arith.mulf %24, %25 : vector<4x256xf32>
    %27 = arith.addf %21, %26 : vector<4x256xf32>
    %c0_11 = arith.constant 0 : index
    %c3 = arith.constant 3 : index
    %28 = vector.load %arg8[%c0_11, %c3] : memref<4x36xf32, #tpu.memory_space<vmem>>, vector<4x1xf32>
    %29 = vector.extract_strided_slice %9 {offsets = [3, 0], sizes = [1, 256], strides = [1, 1]} : vector<4x256xf32> to vector<1x256xf32>
    %30 = vector.broadcast %28 : vector<4x1xf32> to vector<4x256xf32>
    %31 = vector.broadcast %29 : vector<1x256xf32> to vector<4x256xf32>
    %32 = arith.mulf %30, %31 : vector<4x256xf32>
    %33 = arith.addf %27, %32 : vector<4x256xf32>
    %c16_i32 = arith.constant 16 : i32
    %34 = tpu.dynamic_rotate %4 by %c16_i32 dim 1 : vector<4x256xf32>, i32 -> vector<4x256xf32>
    %35 = vector.extract_strided_slice %0 {offsets = [1, 0], sizes = [1, 256], strides = [1, 1]} : vector<9x256xf32> to vector<1x256xf32>
    %36 = vector.broadcast %35 : vector<1x256xf32> to vector<4x256xf32>
    %37 = arith.mulf %34, %36 : vector<4x256xf32>
    %c0_12 = arith.constant 0 : index
    %c4 = arith.constant 4 : index
    %38 = vector.load %arg8[%c0_12, %c4] : memref<4x36xf32, #tpu.memory_space<vmem>>, vector<4x1xf32>
    %39 = vector.extract_strided_slice %37 {offsets = [0, 0], sizes = [1, 256], strides = [1, 1]} : vector<4x256xf32> to vector<1x256xf32>
    %40 = vector.broadcast %38 : vector<4x1xf32> to vector<4x256xf32>
    %41 = vector.broadcast %39 : vector<1x256xf32> to vector<4x256xf32>
    %42 = arith.mulf %40, %41 : vector<4x256xf32>
    %43 = arith.addf %33, %42 : vector<4x256xf32>
    %c0_13 = arith.constant 0 : index
    %c5 = arith.constant 5 : index
    %44 = vector.load %arg8[%c0_13, %c5] : memref<4x36xf32, #tpu.memory_space<vmem>>, vector<4x1xf32>
    %45 = vector.extract_strided_slice %37 {offsets = [1, 0], sizes = [1, 256], strides = [1, 1]} : vector<4x256xf32> to vector<1x256xf32>
    %46 = vector.broadcast %44 : vector<4x1xf32> to vector<4x256xf32>
    %47 = vector.broadcast %45 : vector<1x256xf32> to vector<4x256xf32>
    %48 = arith.mulf %46, %47 : vector<4x256xf32>
    %49 = arith.addf %43, %48 : vector<4x256xf32>
    %c0_14 = arith.constant 0 : index
    %c6 = arith.constant 6 : index
    %50 = vector.load %arg8[%c0_14, %c6] : memref<4x36xf32, #tpu.memory_space<vmem>>, vector<4x1xf32>
    %51 = vector.extract_strided_slice %37 {offsets = [2, 0], sizes = [1, 256], strides = [1, 1]} : vector<4x256xf32> to vector<1x256xf32>
    %52 = vector.broadcast %50 : vector<4x1xf32> to vector<4x256xf32>
    %53 = vector.broadcast %51 : vector<1x256xf32> to vector<4x256xf32>
    %54 = arith.mulf %52, %53 : vector<4x256xf32>
    %55 = arith.addf %49, %54 : vector<4x256xf32>
    %c0_15 = arith.constant 0 : index
    %c7 = arith.constant 7 : index
    %56 = vector.load %arg8[%c0_15, %c7] : memref<4x36xf32, #tpu.memory_space<vmem>>, vector<4x1xf32>
    %57 = vector.extract_strided_slice %37 {offsets = [3, 0], sizes = [1, 256], strides = [1, 1]} : vector<4x256xf32> to vector<1x256xf32>
    %58 = vector.broadcast %56 : vector<4x1xf32> to vector<4x256xf32>
    %59 = vector.broadcast %57 : vector<1x256xf32> to vector<4x256xf32>
    %60 = arith.mulf %58, %59 : vector<4x256xf32>
    %61 = arith.addf %55, %60 : vector<4x256xf32>
    %c15_i32 = arith.constant 15 : i32
    %62 = tpu.dynamic_rotate %4 by %c15_i32 dim 1 : vector<4x256xf32>, i32 -> vector<4x256xf32>
    %63 = vector.extract_strided_slice %0 {offsets = [2, 0], sizes = [1, 256], strides = [1, 1]} : vector<9x256xf32> to vector<1x256xf32>
    %64 = vector.broadcast %63 : vector<1x256xf32> to vector<4x256xf32>
    %65 = arith.mulf %62, %64 : vector<4x256xf32>
    %c0_16 = arith.constant 0 : index
    %c8 = arith.constant 8 : index
    %66 = vector.load %arg8[%c0_16, %c8] : memref<4x36xf32, #tpu.memory_space<vmem>>, vector<4x1xf32>
    %67 = vector.extract_strided_slice %65 {offsets = [0, 0], sizes = [1, 256], strides = [1, 1]} : vector<4x256xf32> to vector<1x256xf32>
    %68 = vector.broadcast %66 : vector<4x1xf32> to vector<4x256xf32>
    %69 = vector.broadcast %67 : vector<1x256xf32> to vector<4x256xf32>
    %70 = arith.mulf %68, %69 : vector<4x256xf32>
    %71 = arith.addf %61, %70 : vector<4x256xf32>
    %c0_17 = arith.constant 0 : index
    %c9 = arith.constant 9 : index
    %72 = vector.load %arg8[%c0_17, %c9] : memref<4x36xf32, #tpu.memory_space<vmem>>, vector<4x1xf32>
    %73 = vector.extract_strided_slice %65 {offsets = [1, 0], sizes = [1, 256], strides = [1, 1]} : vector<4x256xf32> to vector<1x256xf32>
    %74 = vector.broadcast %72 : vector<4x1xf32> to vector<4x256xf32>
    %75 = vector.broadcast %73 : vector<1x256xf32> to vector<4x256xf32>
    %76 = arith.mulf %74, %75 : vector<4x256xf32>
    %77 = arith.addf %71, %76 : vector<4x256xf32>
    %c0_18 = arith.constant 0 : index
    %c10 = arith.constant 10 : index
    %78 = vector.load %arg8[%c0_18, %c10] : memref<4x36xf32, #tpu.memory_space<vmem>>, vector<4x1xf32>
    %79 = vector.extract_strided_slice %65 {offsets = [2, 0], sizes = [1, 256], strides = [1, 1]} : vector<4x256xf32> to vector<1x256xf32>
    %80 = vector.broadcast %78 : vector<4x1xf32> to vector<4x256xf32>
    %81 = vector.broadcast %79 : vector<1x256xf32> to vector<4x256xf32>
    %82 = arith.mulf %80, %81 : vector<4x256xf32>
    %83 = arith.addf %77, %82 : vector<4x256xf32>
    %c0_19 = arith.constant 0 : index
    %c11 = arith.constant 11 : index
    %84 = vector.load %arg8[%c0_19, %c11] : memref<4x36xf32, #tpu.memory_space<vmem>>, vector<4x1xf32>
    %85 = vector.extract_strided_slice %65 {offsets = [3, 0], sizes = [1, 256], strides = [1, 1]} : vector<4x256xf32> to vector<1x256xf32>
    %86 = vector.broadcast %84 : vector<4x1xf32> to vector<4x256xf32>
    %87 = vector.broadcast %85 : vector<1x256xf32> to vector<4x256xf32>
    %88 = arith.mulf %86, %87 : vector<4x256xf32>
    %89 = arith.addf %83, %88 : vector<4x256xf32>
    %c1_i32 = arith.constant 1 : i32
    %90 = tpu.dynamic_rotate %4 by %c1_i32 dim 1 : vector<4x256xf32>, i32 -> vector<4x256xf32>
    %91 = vector.extract_strided_slice %0 {offsets = [3, 0], sizes = [1, 256], strides = [1, 1]} : vector<9x256xf32> to vector<1x256xf32>
    %92 = vector.broadcast %91 : vector<1x256xf32> to vector<4x256xf32>
    %93 = arith.mulf %90, %92 : vector<4x256xf32>
    %c0_20 = arith.constant 0 : index
    %c12 = arith.constant 12 : index
    %94 = vector.load %arg8[%c0_20, %c12] : memref<4x36xf32, #tpu.memory_space<vmem>>, vector<4x1xf32>
    %95 = vector.extract_strided_slice %93 {offsets = [0, 0], sizes = [1, 256], strides = [1, 1]} : vector<4x256xf32> to vector<1x256xf32>
    %96 = vector.broadcast %94 : vector<4x1xf32> to vector<4x256xf32>
    %97 = vector.broadcast %95 : vector<1x256xf32> to vector<4x256xf32>
    %98 = arith.mulf %96, %97 : vector<4x256xf32>
    %99 = arith.addf %89, %98 : vector<4x256xf32>
    %c0_21 = arith.constant 0 : index
    %c13 = arith.constant 13 : index
    %100 = vector.load %arg8[%c0_21, %c13] : memref<4x36xf32, #tpu.memory_space<vmem>>, vector<4x1xf32>
    %101 = vector.extract_strided_slice %93 {offsets = [1, 0], sizes = [1, 256], strides = [1, 1]} : vector<4x256xf32> to vector<1x256xf32>
    %102 = vector.broadcast %100 : vector<4x1xf32> to vector<4x256xf32>
    %103 = vector.broadcast %101 : vector<1x256xf32> to vector<4x256xf32>
    %104 = arith.mulf %102, %103 : vector<4x256xf32>
    %105 = arith.addf %99, %104 : vector<4x256xf32>
    %c0_22 = arith.constant 0 : index
    %c14 = arith.constant 14 : index
    %106 = vector.load %arg8[%c0_22, %c14] : memref<4x36xf32, #tpu.memory_space<vmem>>, vector<4x1xf32>
    %107 = vector.extract_strided_slice %93 {offsets = [2, 0], sizes = [1, 256], strides = [1, 1]} : vector<4x256xf32> to vector<1x256xf32>
    %108 = vector.broadcast %106 : vector<4x1xf32> to vector<4x256xf32>
    %109 = vector.broadcast %107 : vector<1x256xf32> to vector<4x256xf32>
    %110 = arith.mulf %108, %109 : vector<4x256xf32>
    %111 = arith.addf %105, %110 : vector<4x256xf32>
    %c0_23 = arith.constant 0 : index
    %c15 = arith.constant 15 : index
    %112 = vector.load %arg8[%c0_23, %c15] : memref<4x36xf32, #tpu.memory_space<vmem>>, vector<4x1xf32>
    %113 = vector.extract_strided_slice %93 {offsets = [3, 0], sizes = [1, 256], strides = [1, 1]} : vector<4x256xf32> to vector<1x256xf32>
    %114 = vector.broadcast %112 : vector<4x1xf32> to vector<4x256xf32>
    %115 = vector.broadcast %113 : vector<1x256xf32> to vector<4x256xf32>
    %116 = arith.mulf %114, %115 : vector<4x256xf32>
    %117 = arith.addf %111, %116 : vector<4x256xf32>
    %118 = vector.extract_strided_slice %0 {offsets = [4, 0], sizes = [1, 256], strides = [1, 1]} : vector<9x256xf32> to vector<1x256xf32>
    %119 = vector.broadcast %118 : vector<1x256xf32> to vector<4x256xf32>
    %120 = arith.mulf %4, %119 : vector<4x256xf32>
    %c0_24 = arith.constant 0 : index
    %c16 = arith.constant 16 : index
    %121 = vector.load %arg8[%c0_24, %c16] : memref<4x36xf32, #tpu.memory_space<vmem>>, vector<4x1xf32>
    %122 = vector.extract_strided_slice %120 {offsets = [0, 0], sizes = [1, 256], strides = [1, 1]} : vector<4x256xf32> to vector<1x256xf32>
    %123 = vector.broadcast %121 : vector<4x1xf32> to vector<4x256xf32>
    %124 = vector.broadcast %122 : vector<1x256xf32> to vector<4x256xf32>
    %125 = arith.mulf %123, %124 : vector<4x256xf32>
    %126 = arith.addf %117, %125 : vector<4x256xf32>
    %c0_25 = arith.constant 0 : index
    %c17 = arith.constant 17 : index
    %127 = vector.load %arg8[%c0_25, %c17] : memref<4x36xf32, #tpu.memory_space<vmem>>, vector<4x1xf32>
    %128 = vector.extract_strided_slice %120 {offsets = [1, 0], sizes = [1, 256], strides = [1, 1]} : vector<4x256xf32> to vector<1x256xf32>
    %129 = vector.broadcast %127 : vector<4x1xf32> to vector<4x256xf32>
    %130 = vector.broadcast %128 : vector<1x256xf32> to vector<4x256xf32>
    %131 = arith.mulf %129, %130 : vector<4x256xf32>
    %132 = arith.addf %126, %131 : vector<4x256xf32>
    %c0_26 = arith.constant 0 : index
    %c18 = arith.constant 18 : index
    %133 = vector.load %arg8[%c0_26, %c18] : memref<4x36xf32, #tpu.memory_space<vmem>>, vector<4x1xf32>
    %134 = vector.extract_strided_slice %120 {offsets = [2, 0], sizes = [1, 256], strides = [1, 1]} : vector<4x256xf32> to vector<1x256xf32>
    %135 = vector.broadcast %133 : vector<4x1xf32> to vector<4x256xf32>
    %136 = vector.broadcast %134 : vector<1x256xf32> to vector<4x256xf32>
    %137 = arith.mulf %135, %136 : vector<4x256xf32>
    %138 = arith.addf %132, %137 : vector<4x256xf32>
    %c0_27 = arith.constant 0 : index
    %c19 = arith.constant 19 : index
    %139 = vector.load %arg8[%c0_27, %c19] : memref<4x36xf32, #tpu.memory_space<vmem>>, vector<4x1xf32>
    %140 = vector.extract_strided_slice %120 {offsets = [3, 0], sizes = [1, 256], strides = [1, 1]} : vector<4x256xf32> to vector<1x256xf32>
    %141 = vector.broadcast %139 : vector<4x1xf32> to vector<4x256xf32>
    %142 = vector.broadcast %140 : vector<1x256xf32> to vector<4x256xf32>
    %143 = arith.mulf %141, %142 : vector<4x256xf32>
    %144 = arith.addf %138, %143 : vector<4x256xf32>
    %c255_i32 = arith.constant 255 : i32
    %145 = tpu.dynamic_rotate %4 by %c255_i32 dim 1 : vector<4x256xf32>, i32 -> vector<4x256xf32>
    %146 = vector.extract_strided_slice %0 {offsets = [5, 0], sizes = [1, 256], strides = [1, 1]} : vector<9x256xf32> to vector<1x256xf32>
    %147 = vector.broadcast %146 : vector<1x256xf32> to vector<4x256xf32>
    %148 = arith.mulf %145, %147 : vector<4x256xf32>
    %c0_28 = arith.constant 0 : index
    %c20 = arith.constant 20 : index
    %149 = vector.load %arg8[%c0_28, %c20] : memref<4x36xf32, #tpu.memory_space<vmem>>, vector<4x1xf32>
    %150 = vector.extract_strided_slice %148 {offsets = [0, 0], sizes = [1, 256], strides = [1, 1]} : vector<4x256xf32> to vector<1x256xf32>
    %151 = vector.broadcast %149 : vector<4x1xf32> to vector<4x256xf32>
    %152 = vector.broadcast %150 : vector<1x256xf32> to vector<4x256xf32>
    %153 = arith.mulf %151, %152 : vector<4x256xf32>
    %154 = arith.addf %144, %153 : vector<4x256xf32>
    %c0_29 = arith.constant 0 : index
    %c21 = arith.constant 21 : index
    %155 = vector.load %arg8[%c0_29, %c21] : memref<4x36xf32, #tpu.memory_space<vmem>>, vector<4x1xf32>
    %156 = vector.extract_strided_slice %148 {offsets = [1, 0], sizes = [1, 256], strides = [1, 1]} : vector<4x256xf32> to vector<1x256xf32>
    %157 = vector.broadcast %155 : vector<4x1xf32> to vector<4x256xf32>
    %158 = vector.broadcast %156 : vector<1x256xf32> to vector<4x256xf32>
    %159 = arith.mulf %157, %158 : vector<4x256xf32>
    %160 = arith.addf %154, %159 : vector<4x256xf32>
    %c0_30 = arith.constant 0 : index
    %c22 = arith.constant 22 : index
    %161 = vector.load %arg8[%c0_30, %c22] : memref<4x36xf32, #tpu.memory_space<vmem>>, vector<4x1xf32>
    %162 = vector.extract_strided_slice %148 {offsets = [2, 0], sizes = [1, 256], strides = [1, 1]} : vector<4x256xf32> to vector<1x256xf32>
    %163 = vector.broadcast %161 : vector<4x1xf32> to vector<4x256xf32>
    %164 = vector.broadcast %162 : vector<1x256xf32> to vector<4x256xf32>
    %165 = arith.mulf %163, %164 : vector<4x256xf32>
    %166 = arith.addf %160, %165 : vector<4x256xf32>
    %c0_31 = arith.constant 0 : index
    %c23 = arith.constant 23 : index
    %167 = vector.load %arg8[%c0_31, %c23] : memref<4x36xf32, #tpu.memory_space<vmem>>, vector<4x1xf32>
    %168 = vector.extract_strided_slice %148 {offsets = [3, 0], sizes = [1, 256], strides = [1, 1]} : vector<4x256xf32> to vector<1x256xf32>
    %169 = vector.broadcast %167 : vector<4x1xf32> to vector<4x256xf32>
    %170 = vector.broadcast %168 : vector<1x256xf32> to vector<4x256xf32>
    %171 = arith.mulf %169, %170 : vector<4x256xf32>
    %172 = arith.addf %166, %171 : vector<4x256xf32>
    %c241_i32 = arith.constant 241 : i32
    %173 = tpu.dynamic_rotate %4 by %c241_i32 dim 1 : vector<4x256xf32>, i32 -> vector<4x256xf32>
    %174 = vector.extract_strided_slice %0 {offsets = [6, 0], sizes = [1, 256], strides = [1, 1]} : vector<9x256xf32> to vector<1x256xf32>
    %175 = vector.broadcast %174 : vector<1x256xf32> to vector<4x256xf32>
    %176 = arith.mulf %173, %175 : vector<4x256xf32>
    %c0_32 = arith.constant 0 : index
    %c24 = arith.constant 24 : index
    %177 = vector.load %arg8[%c0_32, %c24] : memref<4x36xf32, #tpu.memory_space<vmem>>, vector<4x1xf32>
    %178 = vector.extract_strided_slice %176 {offsets = [0, 0], sizes = [1, 256], strides = [1, 1]} : vector<4x256xf32> to vector<1x256xf32>
    %179 = vector.broadcast %177 : vector<4x1xf32> to vector<4x256xf32>
    %180 = vector.broadcast %178 : vector<1x256xf32> to vector<4x256xf32>
    %181 = arith.mulf %179, %180 : vector<4x256xf32>
    %182 = arith.addf %172, %181 : vector<4x256xf32>
    %c0_33 = arith.constant 0 : index
    %c25 = arith.constant 25 : index
    %183 = vector.load %arg8[%c0_33, %c25] : memref<4x36xf32, #tpu.memory_space<vmem>>, vector<4x1xf32>
    %184 = vector.extract_strided_slice %176 {offsets = [1, 0], sizes = [1, 256], strides = [1, 1]} : vector<4x256xf32> to vector<1x256xf32>
    %185 = vector.broadcast %183 : vector<4x1xf32> to vector<4x256xf32>
    %186 = vector.broadcast %184 : vector<1x256xf32> to vector<4x256xf32>
    %187 = arith.mulf %185, %186 : vector<4x256xf32>
    %188 = arith.addf %182, %187 : vector<4x256xf32>
    %c0_34 = arith.constant 0 : index
    %c26 = arith.constant 26 : index
    %189 = vector.load %arg8[%c0_34, %c26] : memref<4x36xf32, #tpu.memory_space<vmem>>, vector<4x1xf32>
    %190 = vector.extract_strided_slice %176 {offsets = [2, 0], sizes = [1, 256], strides = [1, 1]} : vector<4x256xf32> to vector<1x256xf32>
    %191 = vector.broadcast %189 : vector<4x1xf32> to vector<4x256xf32>
    %192 = vector.broadcast %190 : vector<1x256xf32> to vector<4x256xf32>
    %193 = arith.mulf %191, %192 : vector<4x256xf32>
    %194 = arith.addf %188, %193 : vector<4x256xf32>
    %c0_35 = arith.constant 0 : index
    %c27 = arith.constant 27 : index
    %195 = vector.load %arg8[%c0_35, %c27] : memref<4x36xf32, #tpu.memory_space<vmem>>, vector<4x1xf32>
    %196 = vector.extract_strided_slice %176 {offsets = [3, 0], sizes = [1, 256], strides = [1, 1]} : vector<4x256xf32> to vector<1x256xf32>
    %197 = vector.broadcast %195 : vector<4x1xf32> to vector<4x256xf32>
    %198 = vector.broadcast %196 : vector<1x256xf32> to vector<4x256xf32>
    %199 = arith.mulf %197, %198 : vector<4x256xf32>
    %200 = arith.addf %194, %199 : vector<4x256xf32>
    %c240_i32 = arith.constant 240 : i32
    %201 = tpu.dynamic_rotate %4 by %c240_i32 dim 1 : vector<4x256xf32>, i32 -> vector<4x256xf32>
    %202 = vector.extract_strided_slice %0 {offsets = [7, 0], sizes = [1, 256], strides = [1, 1]} : vector<9x256xf32> to vector<1x256xf32>
    %203 = vector.broadcast %202 : vector<1x256xf32> to vector<4x256xf32>
    %204 = arith.mulf %201, %203 : vector<4x256xf32>
    %c0_36 = arith.constant 0 : index
    %c28 = arith.constant 28 : index
    %205 = vector.load %arg8[%c0_36, %c28] : memref<4x36xf32, #tpu.memory_space<vmem>>, vector<4x1xf32>
    %206 = vector.extract_strided_slice %204 {offsets = [0, 0], sizes = [1, 256], strides = [1, 1]} : vector<4x256xf32> to vector<1x256xf32>
    %207 = vector.broadcast %205 : vector<4x1xf32> to vector<4x256xf32>
    %208 = vector.broadcast %206 : vector<1x256xf32> to vector<4x256xf32>
    %209 = arith.mulf %207, %208 : vector<4x256xf32>
    %210 = arith.addf %200, %209 : vector<4x256xf32>
    %c0_37 = arith.constant 0 : index
    %c29 = arith.constant 29 : index
    %211 = vector.load %arg8[%c0_37, %c29] : memref<4x36xf32, #tpu.memory_space<vmem>>, vector<4x1xf32>
    %212 = vector.extract_strided_slice %204 {offsets = [1, 0], sizes = [1, 256], strides = [1, 1]} : vector<4x256xf32> to vector<1x256xf32>
    %213 = vector.broadcast %211 : vector<4x1xf32> to vector<4x256xf32>
    %214 = vector.broadcast %212 : vector<1x256xf32> to vector<4x256xf32>
    %215 = arith.mulf %213, %214 : vector<4x256xf32>
    %216 = arith.addf %210, %215 : vector<4x256xf32>
    %c0_38 = arith.constant 0 : index
    %c30 = arith.constant 30 : index
    %217 = vector.load %arg8[%c0_38, %c30] : memref<4x36xf32, #tpu.memory_space<vmem>>, vector<4x1xf32>
    %218 = vector.extract_strided_slice %204 {offsets = [2, 0], sizes = [1, 256], strides = [1, 1]} : vector<4x256xf32> to vector<1x256xf32>
    %219 = vector.broadcast %217 : vector<4x1xf32> to vector<4x256xf32>
    %220 = vector.broadcast %218 : vector<1x256xf32> to vector<4x256xf32>
    %221 = arith.mulf %219, %220 : vector<4x256xf32>
    %222 = arith.addf %216, %221 : vector<4x256xf32>
    %c0_39 = arith.constant 0 : index
    %c31 = arith.constant 31 : index
    %223 = vector.load %arg8[%c0_39, %c31] : memref<4x36xf32, #tpu.memory_space<vmem>>, vector<4x1xf32>
    %224 = vector.extract_strided_slice %204 {offsets = [3, 0], sizes = [1, 256], strides = [1, 1]} : vector<4x256xf32> to vector<1x256xf32>
    %225 = vector.broadcast %223 : vector<4x1xf32> to vector<4x256xf32>
    %226 = vector.broadcast %224 : vector<1x256xf32> to vector<4x256xf32>
    %227 = arith.mulf %225, %226 : vector<4x256xf32>
    %228 = arith.addf %222, %227 : vector<4x256xf32>
    %c239_i32 = arith.constant 239 : i32
    %229 = tpu.dynamic_rotate %4 by %c239_i32 dim 1 : vector<4x256xf32>, i32 -> vector<4x256xf32>
    %230 = vector.extract_strided_slice %0 {offsets = [8, 0], sizes = [1, 256], strides = [1, 1]} : vector<9x256xf32> to vector<1x256xf32>
    %231 = vector.broadcast %230 : vector<1x256xf32> to vector<4x256xf32>
    %232 = arith.mulf %229, %231 : vector<4x256xf32>
    %c0_40 = arith.constant 0 : index
    %c32 = arith.constant 32 : index
    %233 = vector.load %arg8[%c0_40, %c32] : memref<4x36xf32, #tpu.memory_space<vmem>>, vector<4x1xf32>
    %234 = vector.extract_strided_slice %232 {offsets = [0, 0], sizes = [1, 256], strides = [1, 1]} : vector<4x256xf32> to vector<1x256xf32>
    %235 = vector.broadcast %233 : vector<4x1xf32> to vector<4x256xf32>
    %236 = vector.broadcast %234 : vector<1x256xf32> to vector<4x256xf32>
    %237 = arith.mulf %235, %236 : vector<4x256xf32>
    %238 = arith.addf %228, %237 : vector<4x256xf32>
    %c0_41 = arith.constant 0 : index
    %c33 = arith.constant 33 : index
    %239 = vector.load %arg8[%c0_41, %c33] : memref<4x36xf32, #tpu.memory_space<vmem>>, vector<4x1xf32>
    %240 = vector.extract_strided_slice %232 {offsets = [1, 0], sizes = [1, 256], strides = [1, 1]} : vector<4x256xf32> to vector<1x256xf32>
    %241 = vector.broadcast %239 : vector<4x1xf32> to vector<4x256xf32>
    %242 = vector.broadcast %240 : vector<1x256xf32> to vector<4x256xf32>
    %243 = arith.mulf %241, %242 : vector<4x256xf32>
    %244 = arith.addf %238, %243 : vector<4x256xf32>
    %c0_42 = arith.constant 0 : index
    %c34 = arith.constant 34 : index
    %245 = vector.load %arg8[%c0_42, %c34] : memref<4x36xf32, #tpu.memory_space<vmem>>, vector<4x1xf32>
    %246 = vector.extract_strided_slice %232 {offsets = [2, 0], sizes = [1, 256], strides = [1, 1]} : vector<4x256xf32> to vector<1x256xf32>
    %247 = vector.broadcast %245 : vector<4x1xf32> to vector<4x256xf32>
    %248 = vector.broadcast %246 : vector<1x256xf32> to vector<4x256xf32>
    %249 = arith.mulf %247, %248 : vector<4x256xf32>
    %250 = arith.addf %244, %249 : vector<4x256xf32>
    %c0_43 = arith.constant 0 : index
    %c35 = arith.constant 35 : index
    %251 = vector.load %arg8[%c0_43, %c35] : memref<4x36xf32, #tpu.memory_space<vmem>>, vector<4x1xf32>
    %252 = vector.extract_strided_slice %232 {offsets = [3, 0], sizes = [1, 256], strides = [1, 1]} : vector<4x256xf32> to vector<1x256xf32>
    %253 = vector.broadcast %251 : vector<4x1xf32> to vector<4x256xf32>
    %254 = vector.broadcast %252 : vector<1x256xf32> to vector<4x256xf32>
    %255 = arith.mulf %253, %254 : vector<4x256xf32>
    %256 = arith.addf %250, %255 : vector<4x256xf32>
    %c0_44 = arith.constant 0 : index
    %c0_45 = arith.constant 0 : index
    %257 = vector.load %arg9[%c0_44, %c0_45] : memref<4x1xf32, #tpu.memory_space<vmem>>, vector<4x1xf32>
    %258 = vector.broadcast %257 : vector<4x1xf32> to vector<4x256xf32>
    %259 = arith.addf %256, %258 : vector<4x256xf32>
    %cst_46 = arith.constant dense<0.000000e+00> : vector<4xf32>
    %260 = vector.multi_reduction <add>, %259, %cst_46 [1] : vector<4x256xf32> to vector<4xf32>
    %261 = vector.shape_cast %260 : vector<4xf32> to vector<4x1xf32>
    %cst_47 = arith.constant 2.560000e+02 : f32
    %262 = vector.broadcast %cst_47 : f32 to vector<4x1xf32>
    %263 = arith.divf %261, %262 : vector<4x1xf32>
    %264 = vector.broadcast %263 : vector<4x1xf32> to vector<4x256xf32>
    %265 = arith.subf %259, %264 : vector<4x256xf32>
    %266 = arith.mulf %265, %265 : vector<4x256xf32>
    %cst_48 = arith.constant dense<0.000000e+00> : vector<4xf32>
    %267 = vector.multi_reduction <add>, %266, %cst_48 [1] : vector<4x256xf32> to vector<4xf32>
    %268 = vector.shape_cast %267 : vector<4xf32> to vector<4x1xf32>
    %cst_49 = arith.constant 2.560000e+02 : f32
    %269 = vector.broadcast %cst_49 : f32 to vector<4x1xf32>
    %270 = arith.divf %268, %269 : vector<4x1xf32>
    %271 = vector.broadcast %263 : vector<4x1xf32> to vector<4x256xf32>
    %272 = arith.subf %259, %271 : vector<4x256xf32>
    %cst_50 = arith.constant 9.99999974E-6 : f32
    %273 = vector.broadcast %cst_50 : f32 to vector<4x1xf32>
    %274 = arith.addf %270, %273 : vector<4x1xf32>
    %275 = math.rsqrt %274 : vector<4x1xf32>
    %276 = vector.broadcast %275 : vector<4x1xf32> to vector<4x256xf32>
    %277 = arith.mulf %272, %276 : vector<4x256xf32>
    %cst_51 = arith.constant 0.000000e+00 : f32
    %278 = vector.broadcast %cst_51 : f32 to vector<4x256xf32>
    %279 = arith.maximumf %277, %278 : vector<4x256xf32>
    %cst_52 = arith.constant 0.000000e+00 : f32
    %280 = vector.broadcast %cst_52 : f32 to vector<4x256xf32>
    %c17_i32_53 = arith.constant 17 : i32
    %281 = tpu.dynamic_rotate %279 by %c17_i32_53 dim 1 : vector<4x256xf32>, i32 -> vector<4x256xf32>
    %282 = vector.extract_strided_slice %0 {offsets = [0, 0], sizes = [1, 256], strides = [1, 1]} : vector<9x256xf32> to vector<1x256xf32>
    %283 = vector.broadcast %282 : vector<1x256xf32> to vector<4x256xf32>
    %284 = arith.mulf %281, %283 : vector<4x256xf32>
    %c0_54 = arith.constant 0 : index
    %c0_55 = arith.constant 0 : index
    %285 = vector.load %arg10[%c0_54, %c0_55] : memref<4x36xf32, #tpu.memory_space<vmem>>, vector<4x1xf32>
    %286 = vector.extract_strided_slice %284 {offsets = [0, 0], sizes = [1, 256], strides = [1, 1]} : vector<4x256xf32> to vector<1x256xf32>
    %287 = vector.broadcast %285 : vector<4x1xf32> to vector<4x256xf32>
    %288 = vector.broadcast %286 : vector<1x256xf32> to vector<4x256xf32>
    %289 = arith.mulf %287, %288 : vector<4x256xf32>
    %290 = arith.addf %280, %289 : vector<4x256xf32>
    %c0_56 = arith.constant 0 : index
    %c1_57 = arith.constant 1 : index
    %291 = vector.load %arg10[%c0_56, %c1_57] : memref<4x36xf32, #tpu.memory_space<vmem>>, vector<4x1xf32>
    %292 = vector.extract_strided_slice %284 {offsets = [1, 0], sizes = [1, 256], strides = [1, 1]} : vector<4x256xf32> to vector<1x256xf32>
    %293 = vector.broadcast %291 : vector<4x1xf32> to vector<4x256xf32>
    %294 = vector.broadcast %292 : vector<1x256xf32> to vector<4x256xf32>
    %295 = arith.mulf %293, %294 : vector<4x256xf32>
    %296 = arith.addf %290, %295 : vector<4x256xf32>
    %c0_58 = arith.constant 0 : index
    %c2_59 = arith.constant 2 : index
    %297 = vector.load %arg10[%c0_58, %c2_59] : memref<4x36xf32, #tpu.memory_space<vmem>>, vector<4x1xf32>
    %298 = vector.extract_strided_slice %284 {offsets = [2, 0], sizes = [1, 256], strides = [1, 1]} : vector<4x256xf32> to vector<1x256xf32>
    %299 = vector.broadcast %297 : vector<4x1xf32> to vector<4x256xf32>
    %300 = vector.broadcast %298 : vector<1x256xf32> to vector<4x256xf32>
    %301 = arith.mulf %299, %300 : vector<4x256xf32>
    %302 = arith.addf %296, %301 : vector<4x256xf32>
    %c0_60 = arith.constant 0 : index
    %c3_61 = arith.constant 3 : index
    %303 = vector.load %arg10[%c0_60, %c3_61] : memref<4x36xf32, #tpu.memory_space<vmem>>, vector<4x1xf32>
    %304 = vector.extract_strided_slice %284 {offsets = [3, 0], sizes = [1, 256], strides = [1, 1]} : vector<4x256xf32> to vector<1x256xf32>
    %305 = vector.broadcast %303 : vector<4x1xf32> to vector<4x256xf32>
    %306 = vector.broadcast %304 : vector<1x256xf32> to vector<4x256xf32>
    %307 = arith.mulf %305, %306 : vector<4x256xf32>
    %308 = arith.addf %302, %307 : vector<4x256xf32>
    %c16_i32_62 = arith.constant 16 : i32
    %309 = tpu.dynamic_rotate %279 by %c16_i32_62 dim 1 : vector<4x256xf32>, i32 -> vector<4x256xf32>
    %310 = vector.extract_strided_slice %0 {offsets = [1, 0], sizes = [1, 256], strides = [1, 1]} : vector<9x256xf32> to vector<1x256xf32>
    %311 = vector.broadcast %310 : vector<1x256xf32> to vector<4x256xf32>
    %312 = arith.mulf %309, %311 : vector<4x256xf32>
    %c0_63 = arith.constant 0 : index
    %c4_64 = arith.constant 4 : index
    %313 = vector.load %arg10[%c0_63, %c4_64] : memref<4x36xf32, #tpu.memory_space<vmem>>, vector<4x1xf32>
    %314 = vector.extract_strided_slice %312 {offsets = [0, 0], sizes = [1, 256], strides = [1, 1]} : vector<4x256xf32> to vector<1x256xf32>
    %315 = vector.broadcast %313 : vector<4x1xf32> to vector<4x256xf32>
    %316 = vector.broadcast %314 : vector<1x256xf32> to vector<4x256xf32>
    %317 = arith.mulf %315, %316 : vector<4x256xf32>
    %318 = arith.addf %308, %317 : vector<4x256xf32>
    %c0_65 = arith.constant 0 : index
    %c5_66 = arith.constant 5 : index
    %319 = vector.load %arg10[%c0_65, %c5_66] : memref<4x36xf32, #tpu.memory_space<vmem>>, vector<4x1xf32>
    %320 = vector.extract_strided_slice %312 {offsets = [1, 0], sizes = [1, 256], strides = [1, 1]} : vector<4x256xf32> to vector<1x256xf32>
    %321 = vector.broadcast %319 : vector<4x1xf32> to vector<4x256xf32>
    %322 = vector.broadcast %320 : vector<1x256xf32> to vector<4x256xf32>
    %323 = arith.mulf %321, %322 : vector<4x256xf32>
    %324 = arith.addf %318, %323 : vector<4x256xf32>
    %c0_67 = arith.constant 0 : index
    %c6_68 = arith.constant 6 : index
    %325 = vector.load %arg10[%c0_67, %c6_68] : memref<4x36xf32, #tpu.memory_space<vmem>>, vector<4x1xf32>
    %326 = vector.extract_strided_slice %312 {offsets = [2, 0], sizes = [1, 256], strides = [1, 1]} : vector<4x256xf32> to vector<1x256xf32>
    %327 = vector.broadcast %325 : vector<4x1xf32> to vector<4x256xf32>
    %328 = vector.broadcast %326 : vector<1x256xf32> to vector<4x256xf32>
    %329 = arith.mulf %327, %328 : vector<4x256xf32>
    %330 = arith.addf %324, %329 : vector<4x256xf32>
    %c0_69 = arith.constant 0 : index
    %c7_70 = arith.constant 7 : index
    %331 = vector.load %arg10[%c0_69, %c7_70] : memref<4x36xf32, #tpu.memory_space<vmem>>, vector<4x1xf32>
    %332 = vector.extract_strided_slice %312 {offsets = [3, 0], sizes = [1, 256], strides = [1, 1]} : vector<4x256xf32> to vector<1x256xf32>
    %333 = vector.broadcast %331 : vector<4x1xf32> to vector<4x256xf32>
    %334 = vector.broadcast %332 : vector<1x256xf32> to vector<4x256xf32>
    %335 = arith.mulf %333, %334 : vector<4x256xf32>
    %336 = arith.addf %330, %335 : vector<4x256xf32>
    %c15_i32_71 = arith.constant 15 : i32
    %337 = tpu.dynamic_rotate %279 by %c15_i32_71 dim 1 : vector<4x256xf32>, i32 -> vector<4x256xf32>
    %338 = vector.extract_strided_slice %0 {offsets = [2, 0], sizes = [1, 256], strides = [1, 1]} : vector<9x256xf32> to vector<1x256xf32>
    %339 = vector.broadcast %338 : vector<1x256xf32> to vector<4x256xf32>
    %340 = arith.mulf %337, %339 : vector<4x256xf32>
    %c0_72 = arith.constant 0 : index
    %c8_73 = arith.constant 8 : index
    %341 = vector.load %arg10[%c0_72, %c8_73] : memref<4x36xf32, #tpu.memory_space<vmem>>, vector<4x1xf32>
    %342 = vector.extract_strided_slice %340 {offsets = [0, 0], sizes = [1, 256], strides = [1, 1]} : vector<4x256xf32> to vector<1x256xf32>
    %343 = vector.broadcast %341 : vector<4x1xf32> to vector<4x256xf32>
    %344 = vector.broadcast %342 : vector<1x256xf32> to vector<4x256xf32>
    %345 = arith.mulf %343, %344 : vector<4x256xf32>
    %346 = arith.addf %336, %345 : vector<4x256xf32>
    %c0_74 = arith.constant 0 : index
    %c9_75 = arith.constant 9 : index
    %347 = vector.load %arg10[%c0_74, %c9_75] : memref<4x36xf32, #tpu.memory_space<vmem>>, vector<4x1xf32>
    %348 = vector.extract_strided_slice %340 {offsets = [1, 0], sizes = [1, 256], strides = [1, 1]} : vector<4x256xf32> to vector<1x256xf32>
    %349 = vector.broadcast %347 : vector<4x1xf32> to vector<4x256xf32>
    %350 = vector.broadcast %348 : vector<1x256xf32> to vector<4x256xf32>
    %351 = arith.mulf %349, %350 : vector<4x256xf32>
    %352 = arith.addf %346, %351 : vector<4x256xf32>
    %c0_76 = arith.constant 0 : index
    %c10_77 = arith.constant 10 : index
    %353 = vector.load %arg10[%c0_76, %c10_77] : memref<4x36xf32, #tpu.memory_space<vmem>>, vector<4x1xf32>
    %354 = vector.extract_strided_slice %340 {offsets = [2, 0], sizes = [1, 256], strides = [1, 1]} : vector<4x256xf32> to vector<1x256xf32>
    %355 = vector.broadcast %353 : vector<4x1xf32> to vector<4x256xf32>
    %356 = vector.broadcast %354 : vector<1x256xf32> to vector<4x256xf32>
    %357 = arith.mulf %355, %356 : vector<4x256xf32>
    %358 = arith.addf %352, %357 : vector<4x256xf32>
    %c0_78 = arith.constant 0 : index
    %c11_79 = arith.constant 11 : index
    %359 = vector.load %arg10[%c0_78, %c11_79] : memref<4x36xf32, #tpu.memory_space<vmem>>, vector<4x1xf32>
    %360 = vector.extract_strided_slice %340 {offsets = [3, 0], sizes = [1, 256], strides = [1, 1]} : vector<4x256xf32> to vector<1x256xf32>
    %361 = vector.broadcast %359 : vector<4x1xf32> to vector<4x256xf32>
    %362 = vector.broadcast %360 : vector<1x256xf32> to vector<4x256xf32>
    %363 = arith.mulf %361, %362 : vector<4x256xf32>
    %364 = arith.addf %358, %363 : vector<4x256xf32>
    %c1_i32_80 = arith.constant 1 : i32
    %365 = tpu.dynamic_rotate %279 by %c1_i32_80 dim 1 : vector<4x256xf32>, i32 -> vector<4x256xf32>
    %366 = vector.extract_strided_slice %0 {offsets = [3, 0], sizes = [1, 256], strides = [1, 1]} : vector<9x256xf32> to vector<1x256xf32>
    %367 = vector.broadcast %366 : vector<1x256xf32> to vector<4x256xf32>
    %368 = arith.mulf %365, %367 : vector<4x256xf32>
    %c0_81 = arith.constant 0 : index
    %c12_82 = arith.constant 12 : index
    %369 = vector.load %arg10[%c0_81, %c12_82] : memref<4x36xf32, #tpu.memory_space<vmem>>, vector<4x1xf32>
    %370 = vector.extract_strided_slice %368 {offsets = [0, 0], sizes = [1, 256], strides = [1, 1]} : vector<4x256xf32> to vector<1x256xf32>
    %371 = vector.broadcast %369 : vector<4x1xf32> to vector<4x256xf32>
    %372 = vector.broadcast %370 : vector<1x256xf32> to vector<4x256xf32>
    %373 = arith.mulf %371, %372 : vector<4x256xf32>
    %374 = arith.addf %364, %373 : vector<4x256xf32>
    %c0_83 = arith.constant 0 : index
    %c13_84 = arith.constant 13 : index
    %375 = vector.load %arg10[%c0_83, %c13_84] : memref<4x36xf32, #tpu.memory_space<vmem>>, vector<4x1xf32>
    %376 = vector.extract_strided_slice %368 {offsets = [1, 0], sizes = [1, 256], strides = [1, 1]} : vector<4x256xf32> to vector<1x256xf32>
    %377 = vector.broadcast %375 : vector<4x1xf32> to vector<4x256xf32>
    %378 = vector.broadcast %376 : vector<1x256xf32> to vector<4x256xf32>
    %379 = arith.mulf %377, %378 : vector<4x256xf32>
    %380 = arith.addf %374, %379 : vector<4x256xf32>
    %c0_85 = arith.constant 0 : index
    %c14_86 = arith.constant 14 : index
    %381 = vector.load %arg10[%c0_85, %c14_86] : memref<4x36xf32, #tpu.memory_space<vmem>>, vector<4x1xf32>
    %382 = vector.extract_strided_slice %368 {offsets = [2, 0], sizes = [1, 256], strides = [1, 1]} : vector<4x256xf32> to vector<1x256xf32>
    %383 = vector.broadcast %381 : vector<4x1xf32> to vector<4x256xf32>
    %384 = vector.broadcast %382 : vector<1x256xf32> to vector<4x256xf32>
    %385 = arith.mulf %383, %384 : vector<4x256xf32>
    %386 = arith.addf %380, %385 : vector<4x256xf32>
    %c0_87 = arith.constant 0 : index
    %c15_88 = arith.constant 15 : index
    %387 = vector.load %arg10[%c0_87, %c15_88] : memref<4x36xf32, #tpu.memory_space<vmem>>, vector<4x1xf32>
    %388 = vector.extract_strided_slice %368 {offsets = [3, 0], sizes = [1, 256], strides = [1, 1]} : vector<4x256xf32> to vector<1x256xf32>
    %389 = vector.broadcast %387 : vector<4x1xf32> to vector<4x256xf32>
    %390 = vector.broadcast %388 : vector<1x256xf32> to vector<4x256xf32>
    %391 = arith.mulf %389, %390 : vector<4x256xf32>
    %392 = arith.addf %386, %391 : vector<4x256xf32>
    %393 = vector.extract_strided_slice %0 {offsets = [4, 0], sizes = [1, 256], strides = [1, 1]} : vector<9x256xf32> to vector<1x256xf32>
    %394 = vector.broadcast %393 : vector<1x256xf32> to vector<4x256xf32>
    %395 = arith.mulf %279, %394 : vector<4x256xf32>
    %c0_89 = arith.constant 0 : index
    %c16_90 = arith.constant 16 : index
    %396 = vector.load %arg10[%c0_89, %c16_90] : memref<4x36xf32, #tpu.memory_space<vmem>>, vector<4x1xf32>
    %397 = vector.extract_strided_slice %395 {offsets = [0, 0], sizes = [1, 256], strides = [1, 1]} : vector<4x256xf32> to vector<1x256xf32>
    %398 = vector.broadcast %396 : vector<4x1xf32> to vector<4x256xf32>
    %399 = vector.broadcast %397 : vector<1x256xf32> to vector<4x256xf32>
    %400 = arith.mulf %398, %399 : vector<4x256xf32>
    %401 = arith.addf %392, %400 : vector<4x256xf32>
    %c0_91 = arith.constant 0 : index
    %c17_92 = arith.constant 17 : index
    %402 = vector.load %arg10[%c0_91, %c17_92] : memref<4x36xf32, #tpu.memory_space<vmem>>, vector<4x1xf32>
    %403 = vector.extract_strided_slice %395 {offsets = [1, 0], sizes = [1, 256], strides = [1, 1]} : vector<4x256xf32> to vector<1x256xf32>
    %404 = vector.broadcast %402 : vector<4x1xf32> to vector<4x256xf32>
    %405 = vector.broadcast %403 : vector<1x256xf32> to vector<4x256xf32>
    %406 = arith.mulf %404, %405 : vector<4x256xf32>
    %407 = arith.addf %401, %406 : vector<4x256xf32>
    %c0_93 = arith.constant 0 : index
    %c18_94 = arith.constant 18 : index
    %408 = vector.load %arg10[%c0_93, %c18_94] : memref<4x36xf32, #tpu.memory_space<vmem>>, vector<4x1xf32>
    %409 = vector.extract_strided_slice %395 {offsets = [2, 0], sizes = [1, 256], strides = [1, 1]} : vector<4x256xf32> to vector<1x256xf32>
    %410 = vector.broadcast %408 : vector<4x1xf32> to vector<4x256xf32>
    %411 = vector.broadcast %409 : vector<1x256xf32> to vector<4x256xf32>
    %412 = arith.mulf %410, %411 : vector<4x256xf32>
    %413 = arith.addf %407, %412 : vector<4x256xf32>
    %c0_95 = arith.constant 0 : index
    %c19_96 = arith.constant 19 : index
    %414 = vector.load %arg10[%c0_95, %c19_96] : memref<4x36xf32, #tpu.memory_space<vmem>>, vector<4x1xf32>
    %415 = vector.extract_strided_slice %395 {offsets = [3, 0], sizes = [1, 256], strides = [1, 1]} : vector<4x256xf32> to vector<1x256xf32>
    %416 = vector.broadcast %414 : vector<4x1xf32> to vector<4x256xf32>
    %417 = vector.broadcast %415 : vector<1x256xf32> to vector<4x256xf32>
    %418 = arith.mulf %416, %417 : vector<4x256xf32>
    %419 = arith.addf %413, %418 : vector<4x256xf32>
    %c255_i32_97 = arith.constant 255 : i32
    %420 = tpu.dynamic_rotate %279 by %c255_i32_97 dim 1 : vector<4x256xf32>, i32 -> vector<4x256xf32>
    %421 = vector.extract_strided_slice %0 {offsets = [5, 0], sizes = [1, 256], strides = [1, 1]} : vector<9x256xf32> to vector<1x256xf32>
    %422 = vector.broadcast %421 : vector<1x256xf32> to vector<4x256xf32>
    %423 = arith.mulf %420, %422 : vector<4x256xf32>
    %c0_98 = arith.constant 0 : index
    %c20_99 = arith.constant 20 : index
    %424 = vector.load %arg10[%c0_98, %c20_99] : memref<4x36xf32, #tpu.memory_space<vmem>>, vector<4x1xf32>
    %425 = vector.extract_strided_slice %423 {offsets = [0, 0], sizes = [1, 256], strides = [1, 1]} : vector<4x256xf32> to vector<1x256xf32>
    %426 = vector.broadcast %424 : vector<4x1xf32> to vector<4x256xf32>
    %427 = vector.broadcast %425 : vector<1x256xf32> to vector<4x256xf32>
    %428 = arith.mulf %426, %427 : vector<4x256xf32>
    %429 = arith.addf %419, %428 : vector<4x256xf32>
    %c0_100 = arith.constant 0 : index
    %c21_101 = arith.constant 21 : index
    %430 = vector.load %arg10[%c0_100, %c21_101] : memref<4x36xf32, #tpu.memory_space<vmem>>, vector<4x1xf32>
    %431 = vector.extract_strided_slice %423 {offsets = [1, 0], sizes = [1, 256], strides = [1, 1]} : vector<4x256xf32> to vector<1x256xf32>
    %432 = vector.broadcast %430 : vector<4x1xf32> to vector<4x256xf32>
    %433 = vector.broadcast %431 : vector<1x256xf32> to vector<4x256xf32>
    %434 = arith.mulf %432, %433 : vector<4x256xf32>
    %435 = arith.addf %429, %434 : vector<4x256xf32>
    %c0_102 = arith.constant 0 : index
    %c22_103 = arith.constant 22 : index
    %436 = vector.load %arg10[%c0_102, %c22_103] : memref<4x36xf32, #tpu.memory_space<vmem>>, vector<4x1xf32>
    %437 = vector.extract_strided_slice %423 {offsets = [2, 0], sizes = [1, 256], strides = [1, 1]} : vector<4x256xf32> to vector<1x256xf32>
    %438 = vector.broadcast %436 : vector<4x1xf32> to vector<4x256xf32>
    %439 = vector.broadcast %437 : vector<1x256xf32> to vector<4x256xf32>
    %440 = arith.mulf %438, %439 : vector<4x256xf32>
    %441 = arith.addf %435, %440 : vector<4x256xf32>
    %c0_104 = arith.constant 0 : index
    %c23_105 = arith.constant 23 : index
    %442 = vector.load %arg10[%c0_104, %c23_105] : memref<4x36xf32, #tpu.memory_space<vmem>>, vector<4x1xf32>
    %443 = vector.extract_strided_slice %423 {offsets = [3, 0], sizes = [1, 256], strides = [1, 1]} : vector<4x256xf32> to vector<1x256xf32>
    %444 = vector.broadcast %442 : vector<4x1xf32> to vector<4x256xf32>
    %445 = vector.broadcast %443 : vector<1x256xf32> to vector<4x256xf32>
    %446 = arith.mulf %444, %445 : vector<4x256xf32>
    %447 = arith.addf %441, %446 : vector<4x256xf32>
    %c241_i32_106 = arith.constant 241 : i32
    %448 = tpu.dynamic_rotate %279 by %c241_i32_106 dim 1 : vector<4x256xf32>, i32 -> vector<4x256xf32>
    %449 = vector.extract_strided_slice %0 {offsets = [6, 0], sizes = [1, 256], strides = [1, 1]} : vector<9x256xf32> to vector<1x256xf32>
    %450 = vector.broadcast %449 : vector<1x256xf32> to vector<4x256xf32>
    %451 = arith.mulf %448, %450 : vector<4x256xf32>
    %c0_107 = arith.constant 0 : index
    %c24_108 = arith.constant 24 : index
    %452 = vector.load %arg10[%c0_107, %c24_108] : memref<4x36xf32, #tpu.memory_space<vmem>>, vector<4x1xf32>
    %453 = vector.extract_strided_slice %451 {offsets = [0, 0], sizes = [1, 256], strides = [1, 1]} : vector<4x256xf32> to vector<1x256xf32>
    %454 = vector.broadcast %452 : vector<4x1xf32> to vector<4x256xf32>
    %455 = vector.broadcast %453 : vector<1x256xf32> to vector<4x256xf32>
    %456 = arith.mulf %454, %455 : vector<4x256xf32>
    %457 = arith.addf %447, %456 : vector<4x256xf32>
    %c0_109 = arith.constant 0 : index
    %c25_110 = arith.constant 25 : index
    %458 = vector.load %arg10[%c0_109, %c25_110] : memref<4x36xf32, #tpu.memory_space<vmem>>, vector<4x1xf32>
    %459 = vector.extract_strided_slice %451 {offsets = [1, 0], sizes = [1, 256], strides = [1, 1]} : vector<4x256xf32> to vector<1x256xf32>
    %460 = vector.broadcast %458 : vector<4x1xf32> to vector<4x256xf32>
    %461 = vector.broadcast %459 : vector<1x256xf32> to vector<4x256xf32>
    %462 = arith.mulf %460, %461 : vector<4x256xf32>
    %463 = arith.addf %457, %462 : vector<4x256xf32>
    %c0_111 = arith.constant 0 : index
    %c26_112 = arith.constant 26 : index
    %464 = vector.load %arg10[%c0_111, %c26_112] : memref<4x36xf32, #tpu.memory_space<vmem>>, vector<4x1xf32>
    %465 = vector.extract_strided_slice %451 {offsets = [2, 0], sizes = [1, 256], strides = [1, 1]} : vector<4x256xf32> to vector<1x256xf32>
    %466 = vector.broadcast %464 : vector<4x1xf32> to vector<4x256xf32>
    %467 = vector.broadcast %465 : vector<1x256xf32> to vector<4x256xf32>
    %468 = arith.mulf %466, %467 : vector<4x256xf32>
    %469 = arith.addf %463, %468 : vector<4x256xf32>
    %c0_113 = arith.constant 0 : index
    %c27_114 = arith.constant 27 : index
    %470 = vector.load %arg10[%c0_113, %c27_114] : memref<4x36xf32, #tpu.memory_space<vmem>>, vector<4x1xf32>
    %471 = vector.extract_strided_slice %451 {offsets = [3, 0], sizes = [1, 256], strides = [1, 1]} : vector<4x256xf32> to vector<1x256xf32>
    %472 = vector.broadcast %470 : vector<4x1xf32> to vector<4x256xf32>
    %473 = vector.broadcast %471 : vector<1x256xf32> to vector<4x256xf32>
    %474 = arith.mulf %472, %473 : vector<4x256xf32>
    %475 = arith.addf %469, %474 : vector<4x256xf32>
    %c240_i32_115 = arith.constant 240 : i32
    %476 = tpu.dynamic_rotate %279 by %c240_i32_115 dim 1 : vector<4x256xf32>, i32 -> vector<4x256xf32>
    %477 = vector.extract_strided_slice %0 {offsets = [7, 0], sizes = [1, 256], strides = [1, 1]} : vector<9x256xf32> to vector<1x256xf32>
    %478 = vector.broadcast %477 : vector<1x256xf32> to vector<4x256xf32>
    %479 = arith.mulf %476, %478 : vector<4x256xf32>
    %c0_116 = arith.constant 0 : index
    %c28_117 = arith.constant 28 : index
    %480 = vector.load %arg10[%c0_116, %c28_117] : memref<4x36xf32, #tpu.memory_space<vmem>>, vector<4x1xf32>
    %481 = vector.extract_strided_slice %479 {offsets = [0, 0], sizes = [1, 256], strides = [1, 1]} : vector<4x256xf32> to vector<1x256xf32>
    %482 = vector.broadcast %480 : vector<4x1xf32> to vector<4x256xf32>
    %483 = vector.broadcast %481 : vector<1x256xf32> to vector<4x256xf32>
    %484 = arith.mulf %482, %483 : vector<4x256xf32>
    %485 = arith.addf %475, %484 : vector<4x256xf32>
    %c0_118 = arith.constant 0 : index
    %c29_119 = arith.constant 29 : index
    %486 = vector.load %arg10[%c0_118, %c29_119] : memref<4x36xf32, #tpu.memory_space<vmem>>, vector<4x1xf32>
    %487 = vector.extract_strided_slice %479 {offsets = [1, 0], sizes = [1, 256], strides = [1, 1]} : vector<4x256xf32> to vector<1x256xf32>
    %488 = vector.broadcast %486 : vector<4x1xf32> to vector<4x256xf32>
    %489 = vector.broadcast %487 : vector<1x256xf32> to vector<4x256xf32>
    %490 = arith.mulf %488, %489 : vector<4x256xf32>
    %491 = arith.addf %485, %490 : vector<4x256xf32>
    %c0_120 = arith.constant 0 : index
    %c30_121 = arith.constant 30 : index
    %492 = vector.load %arg10[%c0_120, %c30_121] : memref<4x36xf32, #tpu.memory_space<vmem>>, vector<4x1xf32>
    %493 = vector.extract_strided_slice %479 {offsets = [2, 0], sizes = [1, 256], strides = [1, 1]} : vector<4x256xf32> to vector<1x256xf32>
    %494 = vector.broadcast %492 : vector<4x1xf32> to vector<4x256xf32>
    %495 = vector.broadcast %493 : vector<1x256xf32> to vector<4x256xf32>
    %496 = arith.mulf %494, %495 : vector<4x256xf32>
    %497 = arith.addf %491, %496 : vector<4x256xf32>
    %c0_122 = arith.constant 0 : index
    %c31_123 = arith.constant 31 : index
    %498 = vector.load %arg10[%c0_122, %c31_123] : memref<4x36xf32, #tpu.memory_space<vmem>>, vector<4x1xf32>
    %499 = vector.extract_strided_slice %479 {offsets = [3, 0], sizes = [1, 256], strides = [1, 1]} : vector<4x256xf32> to vector<1x256xf32>
    %500 = vector.broadcast %498 : vector<4x1xf32> to vector<4x256xf32>
    %501 = vector.broadcast %499 : vector<1x256xf32> to vector<4x256xf32>
    %502 = arith.mulf %500, %501 : vector<4x256xf32>
    %503 = arith.addf %497, %502 : vector<4x256xf32>
    %c239_i32_124 = arith.constant 239 : i32
    %504 = tpu.dynamic_rotate %279 by %c239_i32_124 dim 1 : vector<4x256xf32>, i32 -> vector<4x256xf32>
    %505 = vector.extract_strided_slice %0 {offsets = [8, 0], sizes = [1, 256], strides = [1, 1]} : vector<9x256xf32> to vector<1x256xf32>
    %506 = vector.broadcast %505 : vector<1x256xf32> to vector<4x256xf32>
    %507 = arith.mulf %504, %506 : vector<4x256xf32>
    %c0_125 = arith.constant 0 : index
    %c32_126 = arith.constant 32 : index
    %508 = vector.load %arg10[%c0_125, %c32_126] : memref<4x36xf32, #tpu.memory_space<vmem>>, vector<4x1xf32>
    %509 = vector.extract_strided_slice %507 {offsets = [0, 0], sizes = [1, 256], strides = [1, 1]} : vector<4x256xf32> to vector<1x256xf32>
    %510 = vector.broadcast %508 : vector<4x1xf32> to vector<4x256xf32>
    %511 = vector.broadcast %509 : vector<1x256xf32> to vector<4x256xf32>
    %512 = arith.mulf %510, %511 : vector<4x256xf32>
    %513 = arith.addf %503, %512 : vector<4x256xf32>
    %c0_127 = arith.constant 0 : index
    %c33_128 = arith.constant 33 : index
    %514 = vector.load %arg10[%c0_127, %c33_128] : memref<4x36xf32, #tpu.memory_space<vmem>>, vector<4x1xf32>
    %515 = vector.extract_strided_slice %507 {offsets = [1, 0], sizes = [1, 256], strides = [1, 1]} : vector<4x256xf32> to vector<1x256xf32>
    %516 = vector.broadcast %514 : vector<4x1xf32> to vector<4x256xf32>
    %517 = vector.broadcast %515 : vector<1x256xf32> to vector<4x256xf32>
    %518 = arith.mulf %516, %517 : vector<4x256xf32>
    %519 = arith.addf %513, %518 : vector<4x256xf32>
    %c0_129 = arith.constant 0 : index
    %c34_130 = arith.constant 34 : index
    %520 = vector.load %arg10[%c0_129, %c34_130] : memref<4x36xf32, #tpu.memory_space<vmem>>, vector<4x1xf32>
    %521 = vector.extract_strided_slice %507 {offsets = [2, 0], sizes = [1, 256], strides = [1, 1]} : vector<4x256xf32> to vector<1x256xf32>
    %522 = vector.broadcast %520 : vector<4x1xf32> to vector<4x256xf32>
    %523 = vector.broadcast %521 : vector<1x256xf32> to vector<4x256xf32>
    %524 = arith.mulf %522, %523 : vector<4x256xf32>
    %525 = arith.addf %519, %524 : vector<4x256xf32>
    %c0_131 = arith.constant 0 : index
    %c35_132 = arith.constant 35 : index
    %526 = vector.load %arg10[%c0_131, %c35_132] : memref<4x36xf32, #tpu.memory_space<vmem>>, vector<4x1xf32>
    %527 = vector.extract_strided_slice %507 {offsets = [3, 0], sizes = [1, 256], strides = [1, 1]} : vector<4x256xf32> to vector<1x256xf32>
    %528 = vector.broadcast %526 : vector<4x1xf32> to vector<4x256xf32>
    %529 = vector.broadcast %527 : vector<1x256xf32> to vector<4x256xf32>
    %530 = arith.mulf %528, %529 : vector<4x256xf32>
    %531 = arith.addf %525, %530 : vector<4x256xf32>
    %c0_133 = arith.constant 0 : index
    %c0_134 = arith.constant 0 : index
    %532 = vector.load %arg11[%c0_133, %c0_134] : memref<4x1xf32, #tpu.memory_space<vmem>>, vector<4x1xf32>
    %533 = vector.broadcast %532 : vector<4x1xf32> to vector<4x256xf32>
    %534 = arith.addf %531, %533 : vector<4x256xf32>
    %cst_135 = arith.constant dense<0.000000e+00> : vector<4xf32>
    %535 = vector.multi_reduction <add>, %534, %cst_135 [1] : vector<4x256xf32> to vector<4xf32>
    %536 = vector.shape_cast %535 : vector<4xf32> to vector<4x1xf32>
    %cst_136 = arith.constant 2.560000e+02 : f32
    %537 = vector.broadcast %cst_136 : f32 to vector<4x1xf32>
    %538 = arith.divf %536, %537 : vector<4x1xf32>
    %539 = vector.broadcast %538 : vector<4x1xf32> to vector<4x256xf32>
    %540 = arith.subf %534, %539 : vector<4x256xf32>
    %541 = arith.mulf %540, %540 : vector<4x256xf32>
    %cst_137 = arith.constant dense<0.000000e+00> : vector<4xf32>
    %542 = vector.multi_reduction <add>, %541, %cst_137 [1] : vector<4x256xf32> to vector<4xf32>
    %543 = vector.shape_cast %542 : vector<4xf32> to vector<4x1xf32>
    %cst_138 = arith.constant 2.560000e+02 : f32
    %544 = vector.broadcast %cst_138 : f32 to vector<4x1xf32>
    %545 = arith.divf %543, %544 : vector<4x1xf32>
    %546 = vector.broadcast %538 : vector<4x1xf32> to vector<4x256xf32>
    %547 = arith.subf %534, %546 : vector<4x256xf32>
    %cst_139 = arith.constant 9.99999974E-6 : f32
    %548 = vector.broadcast %cst_139 : f32 to vector<4x1xf32>
    %549 = arith.addf %545, %548 : vector<4x1xf32>
    %550 = math.rsqrt %549 : vector<4x1xf32>
    %551 = vector.broadcast %550 : vector<4x1xf32> to vector<4x256xf32>
    %552 = arith.mulf %547, %551 : vector<4x256xf32>
    %cst_140 = arith.constant 0.000000e+00 : f32
    %553 = vector.broadcast %cst_140 : f32 to vector<4x256xf32>
    %554 = arith.maximumf %552, %553 : vector<4x256xf32>
    %cst_141 = arith.constant 0.000000e+00 : f32
    %555 = vector.broadcast %cst_141 : f32 to vector<4x256xf32>
    %c17_i32_142 = arith.constant 17 : i32
    %556 = tpu.dynamic_rotate %2 by %c17_i32_142 dim 1 : vector<4x256xf32>, i32 -> vector<4x256xf32>
    %557 = vector.extract_strided_slice %0 {offsets = [0, 0], sizes = [1, 256], strides = [1, 1]} : vector<9x256xf32> to vector<1x256xf32>
    %558 = vector.broadcast %557 : vector<1x256xf32> to vector<4x256xf32>
    %559 = arith.mulf %556, %558 : vector<4x256xf32>
    %c0_143 = arith.constant 0 : index
    %c0_144 = arith.constant 0 : index
    %560 = vector.load %arg4[%c0_143, %c0_144] : memref<4x36xf32, #tpu.memory_space<vmem>>, vector<4x1xf32>
    %561 = vector.extract_strided_slice %559 {offsets = [0, 0], sizes = [1, 256], strides = [1, 1]} : vector<4x256xf32> to vector<1x256xf32>
    %562 = vector.broadcast %560 : vector<4x1xf32> to vector<4x256xf32>
    %563 = vector.broadcast %561 : vector<1x256xf32> to vector<4x256xf32>
    %564 = arith.mulf %562, %563 : vector<4x256xf32>
    %565 = arith.addf %555, %564 : vector<4x256xf32>
    %c0_145 = arith.constant 0 : index
    %c1_146 = arith.constant 1 : index
    %566 = vector.load %arg4[%c0_145, %c1_146] : memref<4x36xf32, #tpu.memory_space<vmem>>, vector<4x1xf32>
    %567 = vector.extract_strided_slice %559 {offsets = [1, 0], sizes = [1, 256], strides = [1, 1]} : vector<4x256xf32> to vector<1x256xf32>
    %568 = vector.broadcast %566 : vector<4x1xf32> to vector<4x256xf32>
    %569 = vector.broadcast %567 : vector<1x256xf32> to vector<4x256xf32>
    %570 = arith.mulf %568, %569 : vector<4x256xf32>
    %571 = arith.addf %565, %570 : vector<4x256xf32>
    %c0_147 = arith.constant 0 : index
    %c2_148 = arith.constant 2 : index
    %572 = vector.load %arg4[%c0_147, %c2_148] : memref<4x36xf32, #tpu.memory_space<vmem>>, vector<4x1xf32>
    %573 = vector.extract_strided_slice %559 {offsets = [2, 0], sizes = [1, 256], strides = [1, 1]} : vector<4x256xf32> to vector<1x256xf32>
    %574 = vector.broadcast %572 : vector<4x1xf32> to vector<4x256xf32>
    %575 = vector.broadcast %573 : vector<1x256xf32> to vector<4x256xf32>
    %576 = arith.mulf %574, %575 : vector<4x256xf32>
    %577 = arith.addf %571, %576 : vector<4x256xf32>
    %c0_149 = arith.constant 0 : index
    %c3_150 = arith.constant 3 : index
    %578 = vector.load %arg4[%c0_149, %c3_150] : memref<4x36xf32, #tpu.memory_space<vmem>>, vector<4x1xf32>
    %579 = vector.extract_strided_slice %559 {offsets = [3, 0], sizes = [1, 256], strides = [1, 1]} : vector<4x256xf32> to vector<1x256xf32>
    %580 = vector.broadcast %578 : vector<4x1xf32> to vector<4x256xf32>
    %581 = vector.broadcast %579 : vector<1x256xf32> to vector<4x256xf32>
    %582 = arith.mulf %580, %581 : vector<4x256xf32>
    %583 = arith.addf %577, %582 : vector<4x256xf32>
    %c16_i32_151 = arith.constant 16 : i32
    %584 = tpu.dynamic_rotate %2 by %c16_i32_151 dim 1 : vector<4x256xf32>, i32 -> vector<4x256xf32>
    %585 = vector.extract_strided_slice %0 {offsets = [1, 0], sizes = [1, 256], strides = [1, 1]} : vector<9x256xf32> to vector<1x256xf32>
    %586 = vector.broadcast %585 : vector<1x256xf32> to vector<4x256xf32>
    %587 = arith.mulf %584, %586 : vector<4x256xf32>
    %c0_152 = arith.constant 0 : index
    %c4_153 = arith.constant 4 : index
    %588 = vector.load %arg4[%c0_152, %c4_153] : memref<4x36xf32, #tpu.memory_space<vmem>>, vector<4x1xf32>
    %589 = vector.extract_strided_slice %587 {offsets = [0, 0], sizes = [1, 256], strides = [1, 1]} : vector<4x256xf32> to vector<1x256xf32>
    %590 = vector.broadcast %588 : vector<4x1xf32> to vector<4x256xf32>
    %591 = vector.broadcast %589 : vector<1x256xf32> to vector<4x256xf32>
    %592 = arith.mulf %590, %591 : vector<4x256xf32>
    %593 = arith.addf %583, %592 : vector<4x256xf32>
    %c0_154 = arith.constant 0 : index
    %c5_155 = arith.constant 5 : index
    %594 = vector.load %arg4[%c0_154, %c5_155] : memref<4x36xf32, #tpu.memory_space<vmem>>, vector<4x1xf32>
    %595 = vector.extract_strided_slice %587 {offsets = [1, 0], sizes = [1, 256], strides = [1, 1]} : vector<4x256xf32> to vector<1x256xf32>
    %596 = vector.broadcast %594 : vector<4x1xf32> to vector<4x256xf32>
    %597 = vector.broadcast %595 : vector<1x256xf32> to vector<4x256xf32>
    %598 = arith.mulf %596, %597 : vector<4x256xf32>
    %599 = arith.addf %593, %598 : vector<4x256xf32>
    %c0_156 = arith.constant 0 : index
    %c6_157 = arith.constant 6 : index
    %600 = vector.load %arg4[%c0_156, %c6_157] : memref<4x36xf32, #tpu.memory_space<vmem>>, vector<4x1xf32>
    %601 = vector.extract_strided_slice %587 {offsets = [2, 0], sizes = [1, 256], strides = [1, 1]} : vector<4x256xf32> to vector<1x256xf32>
    %602 = vector.broadcast %600 : vector<4x1xf32> to vector<4x256xf32>
    %603 = vector.broadcast %601 : vector<1x256xf32> to vector<4x256xf32>
    %604 = arith.mulf %602, %603 : vector<4x256xf32>
    %605 = arith.addf %599, %604 : vector<4x256xf32>
    %c0_158 = arith.constant 0 : index
    %c7_159 = arith.constant 7 : index
    %606 = vector.load %arg4[%c0_158, %c7_159] : memref<4x36xf32, #tpu.memory_space<vmem>>, vector<4x1xf32>
    %607 = vector.extract_strided_slice %587 {offsets = [3, 0], sizes = [1, 256], strides = [1, 1]} : vector<4x256xf32> to vector<1x256xf32>
    %608 = vector.broadcast %606 : vector<4x1xf32> to vector<4x256xf32>
    %609 = vector.broadcast %607 : vector<1x256xf32> to vector<4x256xf32>
    %610 = arith.mulf %608, %609 : vector<4x256xf32>
    %611 = arith.addf %605, %610 : vector<4x256xf32>
    %c15_i32_160 = arith.constant 15 : i32
    %612 = tpu.dynamic_rotate %2 by %c15_i32_160 dim 1 : vector<4x256xf32>, i32 -> vector<4x256xf32>
    %613 = vector.extract_strided_slice %0 {offsets = [2, 0], sizes = [1, 256], strides = [1, 1]} : vector<9x256xf32> to vector<1x256xf32>
    %614 = vector.broadcast %613 : vector<1x256xf32> to vector<4x256xf32>
    %615 = arith.mulf %612, %614 : vector<4x256xf32>
    %c0_161 = arith.constant 0 : index
    %c8_162 = arith.constant 8 : index
    %616 = vector.load %arg4[%c0_161, %c8_162] : memref<4x36xf32, #tpu.memory_space<vmem>>, vector<4x1xf32>
    %617 = vector.extract_strided_slice %615 {offsets = [0, 0], sizes = [1, 256], strides = [1, 1]} : vector<4x256xf32> to vector<1x256xf32>
    %618 = vector.broadcast %616 : vector<4x1xf32> to vector<4x256xf32>
    %619 = vector.broadcast %617 : vector<1x256xf32> to vector<4x256xf32>
    %620 = arith.mulf %618, %619 : vector<4x256xf32>
    %621 = arith.addf %611, %620 : vector<4x256xf32>
    %c0_163 = arith.constant 0 : index
    %c9_164 = arith.constant 9 : index
    %622 = vector.load %arg4[%c0_163, %c9_164] : memref<4x36xf32, #tpu.memory_space<vmem>>, vector<4x1xf32>
    %623 = vector.extract_strided_slice %615 {offsets = [1, 0], sizes = [1, 256], strides = [1, 1]} : vector<4x256xf32> to vector<1x256xf32>
    %624 = vector.broadcast %622 : vector<4x1xf32> to vector<4x256xf32>
    %625 = vector.broadcast %623 : vector<1x256xf32> to vector<4x256xf32>
    %626 = arith.mulf %624, %625 : vector<4x256xf32>
    %627 = arith.addf %621, %626 : vector<4x256xf32>
    %c0_165 = arith.constant 0 : index
    %c10_166 = arith.constant 10 : index
    %628 = vector.load %arg4[%c0_165, %c10_166] : memref<4x36xf32, #tpu.memory_space<vmem>>, vector<4x1xf32>
    %629 = vector.extract_strided_slice %615 {offsets = [2, 0], sizes = [1, 256], strides = [1, 1]} : vector<4x256xf32> to vector<1x256xf32>
    %630 = vector.broadcast %628 : vector<4x1xf32> to vector<4x256xf32>
    %631 = vector.broadcast %629 : vector<1x256xf32> to vector<4x256xf32>
    %632 = arith.mulf %630, %631 : vector<4x256xf32>
    %633 = arith.addf %627, %632 : vector<4x256xf32>
    %c0_167 = arith.constant 0 : index
    %c11_168 = arith.constant 11 : index
    %634 = vector.load %arg4[%c0_167, %c11_168] : memref<4x36xf32, #tpu.memory_space<vmem>>, vector<4x1xf32>
    %635 = vector.extract_strided_slice %615 {offsets = [3, 0], sizes = [1, 256], strides = [1, 1]} : vector<4x256xf32> to vector<1x256xf32>
    %636 = vector.broadcast %634 : vector<4x1xf32> to vector<4x256xf32>
    %637 = vector.broadcast %635 : vector<1x256xf32> to vector<4x256xf32>
    %638 = arith.mulf %636, %637 : vector<4x256xf32>
    %639 = arith.addf %633, %638 : vector<4x256xf32>
    %c1_i32_169 = arith.constant 1 : i32
    %640 = tpu.dynamic_rotate %2 by %c1_i32_169 dim 1 : vector<4x256xf32>, i32 -> vector<4x256xf32>
    %641 = vector.extract_strided_slice %0 {offsets = [3, 0], sizes = [1, 256], strides = [1, 1]} : vector<9x256xf32> to vector<1x256xf32>
    %642 = vector.broadcast %641 : vector<1x256xf32> to vector<4x256xf32>
    %643 = arith.mulf %640, %642 : vector<4x256xf32>
    %c0_170 = arith.constant 0 : index
    %c12_171 = arith.constant 12 : index
    %644 = vector.load %arg4[%c0_170, %c12_171] : memref<4x36xf32, #tpu.memory_space<vmem>>, vector<4x1xf32>
    %645 = vector.extract_strided_slice %643 {offsets = [0, 0], sizes = [1, 256], strides = [1, 1]} : vector<4x256xf32> to vector<1x256xf32>
    %646 = vector.broadcast %644 : vector<4x1xf32> to vector<4x256xf32>
    %647 = vector.broadcast %645 : vector<1x256xf32> to vector<4x256xf32>
    %648 = arith.mulf %646, %647 : vector<4x256xf32>
    %649 = arith.addf %639, %648 : vector<4x256xf32>
    %c0_172 = arith.constant 0 : index
    %c13_173 = arith.constant 13 : index
    %650 = vector.load %arg4[%c0_172, %c13_173] : memref<4x36xf32, #tpu.memory_space<vmem>>, vector<4x1xf32>
    %651 = vector.extract_strided_slice %643 {offsets = [1, 0], sizes = [1, 256], strides = [1, 1]} : vector<4x256xf32> to vector<1x256xf32>
    %652 = vector.broadcast %650 : vector<4x1xf32> to vector<4x256xf32>
    %653 = vector.broadcast %651 : vector<1x256xf32> to vector<4x256xf32>
    %654 = arith.mulf %652, %653 : vector<4x256xf32>
    %655 = arith.addf %649, %654 : vector<4x256xf32>
    %c0_174 = arith.constant 0 : index
    %c14_175 = arith.constant 14 : index
    %656 = vector.load %arg4[%c0_174, %c14_175] : memref<4x36xf32, #tpu.memory_space<vmem>>, vector<4x1xf32>
    %657 = vector.extract_strided_slice %643 {offsets = [2, 0], sizes = [1, 256], strides = [1, 1]} : vector<4x256xf32> to vector<1x256xf32>
    %658 = vector.broadcast %656 : vector<4x1xf32> to vector<4x256xf32>
    %659 = vector.broadcast %657 : vector<1x256xf32> to vector<4x256xf32>
    %660 = arith.mulf %658, %659 : vector<4x256xf32>
    %661 = arith.addf %655, %660 : vector<4x256xf32>
    %c0_176 = arith.constant 0 : index
    %c15_177 = arith.constant 15 : index
    %662 = vector.load %arg4[%c0_176, %c15_177] : memref<4x36xf32, #tpu.memory_space<vmem>>, vector<4x1xf32>
    %663 = vector.extract_strided_slice %643 {offsets = [3, 0], sizes = [1, 256], strides = [1, 1]} : vector<4x256xf32> to vector<1x256xf32>
    %664 = vector.broadcast %662 : vector<4x1xf32> to vector<4x256xf32>
    %665 = vector.broadcast %663 : vector<1x256xf32> to vector<4x256xf32>
    %666 = arith.mulf %664, %665 : vector<4x256xf32>
    %667 = arith.addf %661, %666 : vector<4x256xf32>
    %668 = vector.extract_strided_slice %0 {offsets = [4, 0], sizes = [1, 256], strides = [1, 1]} : vector<9x256xf32> to vector<1x256xf32>
    %669 = vector.broadcast %668 : vector<1x256xf32> to vector<4x256xf32>
    %670 = arith.mulf %2, %669 : vector<4x256xf32>
    %c0_178 = arith.constant 0 : index
    %c16_179 = arith.constant 16 : index
    %671 = vector.load %arg4[%c0_178, %c16_179] : memref<4x36xf32, #tpu.memory_space<vmem>>, vector<4x1xf32>
    %672 = vector.extract_strided_slice %670 {offsets = [0, 0], sizes = [1, 256], strides = [1, 1]} : vector<4x256xf32> to vector<1x256xf32>
    %673 = vector.broadcast %671 : vector<4x1xf32> to vector<4x256xf32>
    %674 = vector.broadcast %672 : vector<1x256xf32> to vector<4x256xf32>
    %675 = arith.mulf %673, %674 : vector<4x256xf32>
    %676 = arith.addf %667, %675 : vector<4x256xf32>
    %c0_180 = arith.constant 0 : index
    %c17_181 = arith.constant 17 : index
    %677 = vector.load %arg4[%c0_180, %c17_181] : memref<4x36xf32, #tpu.memory_space<vmem>>, vector<4x1xf32>
    %678 = vector.extract_strided_slice %670 {offsets = [1, 0], sizes = [1, 256], strides = [1, 1]} : vector<4x256xf32> to vector<1x256xf32>
    %679 = vector.broadcast %677 : vector<4x1xf32> to vector<4x256xf32>
    %680 = vector.broadcast %678 : vector<1x256xf32> to vector<4x256xf32>
    %681 = arith.mulf %679, %680 : vector<4x256xf32>
    %682 = arith.addf %676, %681 : vector<4x256xf32>
    %c0_182 = arith.constant 0 : index
    %c18_183 = arith.constant 18 : index
    %683 = vector.load %arg4[%c0_182, %c18_183] : memref<4x36xf32, #tpu.memory_space<vmem>>, vector<4x1xf32>
    %684 = vector.extract_strided_slice %670 {offsets = [2, 0], sizes = [1, 256], strides = [1, 1]} : vector<4x256xf32> to vector<1x256xf32>
    %685 = vector.broadcast %683 : vector<4x1xf32> to vector<4x256xf32>
    %686 = vector.broadcast %684 : vector<1x256xf32> to vector<4x256xf32>
    %687 = arith.mulf %685, %686 : vector<4x256xf32>
    %688 = arith.addf %682, %687 : vector<4x256xf32>
    %c0_184 = arith.constant 0 : index
    %c19_185 = arith.constant 19 : index
    %689 = vector.load %arg4[%c0_184, %c19_185] : memref<4x36xf32, #tpu.memory_space<vmem>>, vector<4x1xf32>
    %690 = vector.extract_strided_slice %670 {offsets = [3, 0], sizes = [1, 256], strides = [1, 1]} : vector<4x256xf32> to vector<1x256xf32>
    %691 = vector.broadcast %689 : vector<4x1xf32> to vector<4x256xf32>
    %692 = vector.broadcast %690 : vector<1x256xf32> to vector<4x256xf32>
    %693 = arith.mulf %691, %692 : vector<4x256xf32>
    %694 = arith.addf %688, %693 : vector<4x256xf32>
    %c255_i32_186 = arith.constant 255 : i32
    %695 = tpu.dynamic_rotate %2 by %c255_i32_186 dim 1 : vector<4x256xf32>, i32 -> vector<4x256xf32>
    %696 = vector.extract_strided_slice %0 {offsets = [5, 0], sizes = [1, 256], strides = [1, 1]} : vector<9x256xf32> to vector<1x256xf32>
    %697 = vector.broadcast %696 : vector<1x256xf32> to vector<4x256xf32>
    %698 = arith.mulf %695, %697 : vector<4x256xf32>
    %c0_187 = arith.constant 0 : index
    %c20_188 = arith.constant 20 : index
    %699 = vector.load %arg4[%c0_187, %c20_188] : memref<4x36xf32, #tpu.memory_space<vmem>>, vector<4x1xf32>
    %700 = vector.extract_strided_slice %698 {offsets = [0, 0], sizes = [1, 256], strides = [1, 1]} : vector<4x256xf32> to vector<1x256xf32>
    %701 = vector.broadcast %699 : vector<4x1xf32> to vector<4x256xf32>
    %702 = vector.broadcast %700 : vector<1x256xf32> to vector<4x256xf32>
    %703 = arith.mulf %701, %702 : vector<4x256xf32>
    %704 = arith.addf %694, %703 : vector<4x256xf32>
    %c0_189 = arith.constant 0 : index
    %c21_190 = arith.constant 21 : index
    %705 = vector.load %arg4[%c0_189, %c21_190] : memref<4x36xf32, #tpu.memory_space<vmem>>, vector<4x1xf32>
    %706 = vector.extract_strided_slice %698 {offsets = [1, 0], sizes = [1, 256], strides = [1, 1]} : vector<4x256xf32> to vector<1x256xf32>
    %707 = vector.broadcast %705 : vector<4x1xf32> to vector<4x256xf32>
    %708 = vector.broadcast %706 : vector<1x256xf32> to vector<4x256xf32>
    %709 = arith.mulf %707, %708 : vector<4x256xf32>
    %710 = arith.addf %704, %709 : vector<4x256xf32>
    %c0_191 = arith.constant 0 : index
    %c22_192 = arith.constant 22 : index
    %711 = vector.load %arg4[%c0_191, %c22_192] : memref<4x36xf32, #tpu.memory_space<vmem>>, vector<4x1xf32>
    %712 = vector.extract_strided_slice %698 {offsets = [2, 0], sizes = [1, 256], strides = [1, 1]} : vector<4x256xf32> to vector<1x256xf32>
    %713 = vector.broadcast %711 : vector<4x1xf32> to vector<4x256xf32>
    %714 = vector.broadcast %712 : vector<1x256xf32> to vector<4x256xf32>
    %715 = arith.mulf %713, %714 : vector<4x256xf32>
    %716 = arith.addf %710, %715 : vector<4x256xf32>
    %c0_193 = arith.constant 0 : index
    %c23_194 = arith.constant 23 : index
    %717 = vector.load %arg4[%c0_193, %c23_194] : memref<4x36xf32, #tpu.memory_space<vmem>>, vector<4x1xf32>
    %718 = vector.extract_strided_slice %698 {offsets = [3, 0], sizes = [1, 256], strides = [1, 1]} : vector<4x256xf32> to vector<1x256xf32>
    %719 = vector.broadcast %717 : vector<4x1xf32> to vector<4x256xf32>
    %720 = vector.broadcast %718 : vector<1x256xf32> to vector<4x256xf32>
    %721 = arith.mulf %719, %720 : vector<4x256xf32>
    %722 = arith.addf %716, %721 : vector<4x256xf32>
    %c241_i32_195 = arith.constant 241 : i32
    %723 = tpu.dynamic_rotate %2 by %c241_i32_195 dim 1 : vector<4x256xf32>, i32 -> vector<4x256xf32>
    %724 = vector.extract_strided_slice %0 {offsets = [6, 0], sizes = [1, 256], strides = [1, 1]} : vector<9x256xf32> to vector<1x256xf32>
    %725 = vector.broadcast %724 : vector<1x256xf32> to vector<4x256xf32>
    %726 = arith.mulf %723, %725 : vector<4x256xf32>
    %c0_196 = arith.constant 0 : index
    %c24_197 = arith.constant 24 : index
    %727 = vector.load %arg4[%c0_196, %c24_197] : memref<4x36xf32, #tpu.memory_space<vmem>>, vector<4x1xf32>
    %728 = vector.extract_strided_slice %726 {offsets = [0, 0], sizes = [1, 256], strides = [1, 1]} : vector<4x256xf32> to vector<1x256xf32>
    %729 = vector.broadcast %727 : vector<4x1xf32> to vector<4x256xf32>
    %730 = vector.broadcast %728 : vector<1x256xf32> to vector<4x256xf32>
    %731 = arith.mulf %729, %730 : vector<4x256xf32>
    %732 = arith.addf %722, %731 : vector<4x256xf32>
    %c0_198 = arith.constant 0 : index
    %c25_199 = arith.constant 25 : index
    %733 = vector.load %arg4[%c0_198, %c25_199] : memref<4x36xf32, #tpu.memory_space<vmem>>, vector<4x1xf32>
    %734 = vector.extract_strided_slice %726 {offsets = [1, 0], sizes = [1, 256], strides = [1, 1]} : vector<4x256xf32> to vector<1x256xf32>
    %735 = vector.broadcast %733 : vector<4x1xf32> to vector<4x256xf32>
    %736 = vector.broadcast %734 : vector<1x256xf32> to vector<4x256xf32>
    %737 = arith.mulf %735, %736 : vector<4x256xf32>
    %738 = arith.addf %732, %737 : vector<4x256xf32>
    %c0_200 = arith.constant 0 : index
    %c26_201 = arith.constant 26 : index
    %739 = vector.load %arg4[%c0_200, %c26_201] : memref<4x36xf32, #tpu.memory_space<vmem>>, vector<4x1xf32>
    %740 = vector.extract_strided_slice %726 {offsets = [2, 0], sizes = [1, 256], strides = [1, 1]} : vector<4x256xf32> to vector<1x256xf32>
    %741 = vector.broadcast %739 : vector<4x1xf32> to vector<4x256xf32>
    %742 = vector.broadcast %740 : vector<1x256xf32> to vector<4x256xf32>
    %743 = arith.mulf %741, %742 : vector<4x256xf32>
    %744 = arith.addf %738, %743 : vector<4x256xf32>
    %c0_202 = arith.constant 0 : index
    %c27_203 = arith.constant 27 : index
    %745 = vector.load %arg4[%c0_202, %c27_203] : memref<4x36xf32, #tpu.memory_space<vmem>>, vector<4x1xf32>
    %746 = vector.extract_strided_slice %726 {offsets = [3, 0], sizes = [1, 256], strides = [1, 1]} : vector<4x256xf32> to vector<1x256xf32>
    %747 = vector.broadcast %745 : vector<4x1xf32> to vector<4x256xf32>
    %748 = vector.broadcast %746 : vector<1x256xf32> to vector<4x256xf32>
    %749 = arith.mulf %747, %748 : vector<4x256xf32>
    %750 = arith.addf %744, %749 : vector<4x256xf32>
    %c240_i32_204 = arith.constant 240 : i32
    %751 = tpu.dynamic_rotate %2 by %c240_i32_204 dim 1 : vector<4x256xf32>, i32 -> vector<4x256xf32>
    %752 = vector.extract_strided_slice %0 {offsets = [7, 0], sizes = [1, 256], strides = [1, 1]} : vector<9x256xf32> to vector<1x256xf32>
    %753 = vector.broadcast %752 : vector<1x256xf32> to vector<4x256xf32>
    %754 = arith.mulf %751, %753 : vector<4x256xf32>
    %c0_205 = arith.constant 0 : index
    %c28_206 = arith.constant 28 : index
    %755 = vector.load %arg4[%c0_205, %c28_206] : memref<4x36xf32, #tpu.memory_space<vmem>>, vector<4x1xf32>
    %756 = vector.extract_strided_slice %754 {offsets = [0, 0], sizes = [1, 256], strides = [1, 1]} : vector<4x256xf32> to vector<1x256xf32>
    %757 = vector.broadcast %755 : vector<4x1xf32> to vector<4x256xf32>
    %758 = vector.broadcast %756 : vector<1x256xf32> to vector<4x256xf32>
    %759 = arith.mulf %757, %758 : vector<4x256xf32>
    %760 = arith.addf %750, %759 : vector<4x256xf32>
    %c0_207 = arith.constant 0 : index
    %c29_208 = arith.constant 29 : index
    %761 = vector.load %arg4[%c0_207, %c29_208] : memref<4x36xf32, #tpu.memory_space<vmem>>, vector<4x1xf32>
    %762 = vector.extract_strided_slice %754 {offsets = [1, 0], sizes = [1, 256], strides = [1, 1]} : vector<4x256xf32> to vector<1x256xf32>
    %763 = vector.broadcast %761 : vector<4x1xf32> to vector<4x256xf32>
    %764 = vector.broadcast %762 : vector<1x256xf32> to vector<4x256xf32>
    %765 = arith.mulf %763, %764 : vector<4x256xf32>
    %766 = arith.addf %760, %765 : vector<4x256xf32>
    %c0_209 = arith.constant 0 : index
    %c30_210 = arith.constant 30 : index
    %767 = vector.load %arg4[%c0_209, %c30_210] : memref<4x36xf32, #tpu.memory_space<vmem>>, vector<4x1xf32>
    %768 = vector.extract_strided_slice %754 {offsets = [2, 0], sizes = [1, 256], strides = [1, 1]} : vector<4x256xf32> to vector<1x256xf32>
    %769 = vector.broadcast %767 : vector<4x1xf32> to vector<4x256xf32>
    %770 = vector.broadcast %768 : vector<1x256xf32> to vector<4x256xf32>
    %771 = arith.mulf %769, %770 : vector<4x256xf32>
    %772 = arith.addf %766, %771 : vector<4x256xf32>
    %c0_211 = arith.constant 0 : index
    %c31_212 = arith.constant 31 : index
    %773 = vector.load %arg4[%c0_211, %c31_212] : memref<4x36xf32, #tpu.memory_space<vmem>>, vector<4x1xf32>
    %774 = vector.extract_strided_slice %754 {offsets = [3, 0], sizes = [1, 256], strides = [1, 1]} : vector<4x256xf32> to vector<1x256xf32>
    %775 = vector.broadcast %773 : vector<4x1xf32> to vector<4x256xf32>
    %776 = vector.broadcast %774 : vector<1x256xf32> to vector<4x256xf32>
    %777 = arith.mulf %775, %776 : vector<4x256xf32>
    %778 = arith.addf %772, %777 : vector<4x256xf32>
    %c239_i32_213 = arith.constant 239 : i32
    %779 = tpu.dynamic_rotate %2 by %c239_i32_213 dim 1 : vector<4x256xf32>, i32 -> vector<4x256xf32>
    %780 = vector.extract_strided_slice %0 {offsets = [8, 0], sizes = [1, 256], strides = [1, 1]} : vector<9x256xf32> to vector<1x256xf32>
    %781 = vector.broadcast %780 : vector<1x256xf32> to vector<4x256xf32>
    %782 = arith.mulf %779, %781 : vector<4x256xf32>
    %c0_214 = arith.constant 0 : index
    %c32_215 = arith.constant 32 : index
    %783 = vector.load %arg4[%c0_214, %c32_215] : memref<4x36xf32, #tpu.memory_space<vmem>>, vector<4x1xf32>
    %784 = vector.extract_strided_slice %782 {offsets = [0, 0], sizes = [1, 256], strides = [1, 1]} : vector<4x256xf32> to vector<1x256xf32>
    %785 = vector.broadcast %783 : vector<4x1xf32> to vector<4x256xf32>
    %786 = vector.broadcast %784 : vector<1x256xf32> to vector<4x256xf32>
    %787 = arith.mulf %785, %786 : vector<4x256xf32>
    %788 = arith.addf %778, %787 : vector<4x256xf32>
    %c0_216 = arith.constant 0 : index
    %c33_217 = arith.constant 33 : index
    %789 = vector.load %arg4[%c0_216, %c33_217] : memref<4x36xf32, #tpu.memory_space<vmem>>, vector<4x1xf32>
    %790 = vector.extract_strided_slice %782 {offsets = [1, 0], sizes = [1, 256], strides = [1, 1]} : vector<4x256xf32> to vector<1x256xf32>
    %791 = vector.broadcast %789 : vector<4x1xf32> to vector<4x256xf32>
    %792 = vector.broadcast %790 : vector<1x256xf32> to vector<4x256xf32>
    %793 = arith.mulf %791, %792 : vector<4x256xf32>
    %794 = arith.addf %788, %793 : vector<4x256xf32>
    %c0_218 = arith.constant 0 : index
    %c34_219 = arith.constant 34 : index
    %795 = vector.load %arg4[%c0_218, %c34_219] : memref<4x36xf32, #tpu.memory_space<vmem>>, vector<4x1xf32>
    %796 = vector.extract_strided_slice %782 {offsets = [2, 0], sizes = [1, 256], strides = [1, 1]} : vector<4x256xf32> to vector<1x256xf32>
    %797 = vector.broadcast %795 : vector<4x1xf32> to vector<4x256xf32>
    %798 = vector.broadcast %796 : vector<1x256xf32> to vector<4x256xf32>
    %799 = arith.mulf %797, %798 : vector<4x256xf32>
    %800 = arith.addf %794, %799 : vector<4x256xf32>
    %c0_220 = arith.constant 0 : index
    %c35_221 = arith.constant 35 : index
    %801 = vector.load %arg4[%c0_220, %c35_221] : memref<4x36xf32, #tpu.memory_space<vmem>>, vector<4x1xf32>
    %802 = vector.extract_strided_slice %782 {offsets = [3, 0], sizes = [1, 256], strides = [1, 1]} : vector<4x256xf32> to vector<1x256xf32>
    %803 = vector.broadcast %801 : vector<4x1xf32> to vector<4x256xf32>
    %804 = vector.broadcast %802 : vector<1x256xf32> to vector<4x256xf32>
    %805 = arith.mulf %803, %804 : vector<4x256xf32>
    %806 = arith.addf %800, %805 : vector<4x256xf32>
    %c0_222 = arith.constant 0 : index
    %c0_223 = arith.constant 0 : index
    %807 = vector.load %arg5[%c0_222, %c0_223] : memref<4x1xf32, #tpu.memory_space<vmem>>, vector<4x1xf32>
    %808 = vector.broadcast %807 : vector<4x1xf32> to vector<4x256xf32>
    %809 = arith.addf %806, %808 : vector<4x256xf32>
    %cst_224 = arith.constant dense<0.000000e+00> : vector<4xf32>
    %810 = vector.multi_reduction <add>, %809, %cst_224 [1] : vector<4x256xf32> to vector<4xf32>
    %811 = vector.shape_cast %810 : vector<4xf32> to vector<4x1xf32>
    %cst_225 = arith.constant 2.560000e+02 : f32
    %812 = vector.broadcast %cst_225 : f32 to vector<4x1xf32>
    %813 = arith.divf %811, %812 : vector<4x1xf32>
    %814 = vector.broadcast %813 : vector<4x1xf32> to vector<4x256xf32>
    %815 = arith.subf %809, %814 : vector<4x256xf32>
    %816 = arith.mulf %815, %815 : vector<4x256xf32>
    %cst_226 = arith.constant dense<0.000000e+00> : vector<4xf32>
    %817 = vector.multi_reduction <add>, %816, %cst_226 [1] : vector<4x256xf32> to vector<4xf32>
    %818 = vector.shape_cast %817 : vector<4xf32> to vector<4x1xf32>
    %cst_227 = arith.constant 2.560000e+02 : f32
    %819 = vector.broadcast %cst_227 : f32 to vector<4x1xf32>
    %820 = arith.divf %818, %819 : vector<4x1xf32>
    %821 = vector.broadcast %813 : vector<4x1xf32> to vector<4x256xf32>
    %822 = arith.subf %809, %821 : vector<4x256xf32>
    %cst_228 = arith.constant 9.99999974E-6 : f32
    %823 = vector.broadcast %cst_228 : f32 to vector<4x1xf32>
    %824 = arith.addf %820, %823 : vector<4x1xf32>
    %825 = math.rsqrt %824 : vector<4x1xf32>
    %826 = vector.broadcast %825 : vector<4x1xf32> to vector<4x256xf32>
    %827 = arith.mulf %822, %826 : vector<4x256xf32>
    %cst_229 = arith.constant 0.000000e+00 : f32
    %828 = vector.broadcast %cst_229 : f32 to vector<4x256xf32>
    %829 = arith.maximumf %827, %828 : vector<4x256xf32>
    %cst_230 = arith.constant 0.000000e+00 : f32
    %830 = vector.broadcast %cst_230 : f32 to vector<4x256xf32>
    %c17_i32_231 = arith.constant 17 : i32
    %831 = tpu.dynamic_rotate %829 by %c17_i32_231 dim 1 : vector<4x256xf32>, i32 -> vector<4x256xf32>
    %832 = vector.extract_strided_slice %0 {offsets = [0, 0], sizes = [1, 256], strides = [1, 1]} : vector<9x256xf32> to vector<1x256xf32>
    %833 = vector.broadcast %832 : vector<1x256xf32> to vector<4x256xf32>
    %834 = arith.mulf %831, %833 : vector<4x256xf32>
    %c0_232 = arith.constant 0 : index
    %c0_233 = arith.constant 0 : index
    %835 = vector.load %arg6[%c0_232, %c0_233] : memref<4x36xf32, #tpu.memory_space<vmem>>, vector<4x1xf32>
    %836 = vector.extract_strided_slice %834 {offsets = [0, 0], sizes = [1, 256], strides = [1, 1]} : vector<4x256xf32> to vector<1x256xf32>
    %837 = vector.broadcast %835 : vector<4x1xf32> to vector<4x256xf32>
    %838 = vector.broadcast %836 : vector<1x256xf32> to vector<4x256xf32>
    %839 = arith.mulf %837, %838 : vector<4x256xf32>
    %840 = arith.addf %830, %839 : vector<4x256xf32>
    %c0_234 = arith.constant 0 : index
    %c1_235 = arith.constant 1 : index
    %841 = vector.load %arg6[%c0_234, %c1_235] : memref<4x36xf32, #tpu.memory_space<vmem>>, vector<4x1xf32>
    %842 = vector.extract_strided_slice %834 {offsets = [1, 0], sizes = [1, 256], strides = [1, 1]} : vector<4x256xf32> to vector<1x256xf32>
    %843 = vector.broadcast %841 : vector<4x1xf32> to vector<4x256xf32>
    %844 = vector.broadcast %842 : vector<1x256xf32> to vector<4x256xf32>
    %845 = arith.mulf %843, %844 : vector<4x256xf32>
    %846 = arith.addf %840, %845 : vector<4x256xf32>
    %c0_236 = arith.constant 0 : index
    %c2_237 = arith.constant 2 : index
    %847 = vector.load %arg6[%c0_236, %c2_237] : memref<4x36xf32, #tpu.memory_space<vmem>>, vector<4x1xf32>
    %848 = vector.extract_strided_slice %834 {offsets = [2, 0], sizes = [1, 256], strides = [1, 1]} : vector<4x256xf32> to vector<1x256xf32>
    %849 = vector.broadcast %847 : vector<4x1xf32> to vector<4x256xf32>
    %850 = vector.broadcast %848 : vector<1x256xf32> to vector<4x256xf32>
    %851 = arith.mulf %849, %850 : vector<4x256xf32>
    %852 = arith.addf %846, %851 : vector<4x256xf32>
    %c0_238 = arith.constant 0 : index
    %c3_239 = arith.constant 3 : index
    %853 = vector.load %arg6[%c0_238, %c3_239] : memref<4x36xf32, #tpu.memory_space<vmem>>, vector<4x1xf32>
    %854 = vector.extract_strided_slice %834 {offsets = [3, 0], sizes = [1, 256], strides = [1, 1]} : vector<4x256xf32> to vector<1x256xf32>
    %855 = vector.broadcast %853 : vector<4x1xf32> to vector<4x256xf32>
    %856 = vector.broadcast %854 : vector<1x256xf32> to vector<4x256xf32>
    %857 = arith.mulf %855, %856 : vector<4x256xf32>
    %858 = arith.addf %852, %857 : vector<4x256xf32>
    %c16_i32_240 = arith.constant 16 : i32
    %859 = tpu.dynamic_rotate %829 by %c16_i32_240 dim 1 : vector<4x256xf32>, i32 -> vector<4x256xf32>
    %860 = vector.extract_strided_slice %0 {offsets = [1, 0], sizes = [1, 256], strides = [1, 1]} : vector<9x256xf32> to vector<1x256xf32>
    %861 = vector.broadcast %860 : vector<1x256xf32> to vector<4x256xf32>
    %862 = arith.mulf %859, %861 : vector<4x256xf32>
    %c0_241 = arith.constant 0 : index
    %c4_242 = arith.constant 4 : index
    %863 = vector.load %arg6[%c0_241, %c4_242] : memref<4x36xf32, #tpu.memory_space<vmem>>, vector<4x1xf32>
    %864 = vector.extract_strided_slice %862 {offsets = [0, 0], sizes = [1, 256], strides = [1, 1]} : vector<4x256xf32> to vector<1x256xf32>
    %865 = vector.broadcast %863 : vector<4x1xf32> to vector<4x256xf32>
    %866 = vector.broadcast %864 : vector<1x256xf32> to vector<4x256xf32>
    %867 = arith.mulf %865, %866 : vector<4x256xf32>
    %868 = arith.addf %858, %867 : vector<4x256xf32>
    %c0_243 = arith.constant 0 : index
    %c5_244 = arith.constant 5 : index
    %869 = vector.load %arg6[%c0_243, %c5_244] : memref<4x36xf32, #tpu.memory_space<vmem>>, vector<4x1xf32>
    %870 = vector.extract_strided_slice %862 {offsets = [1, 0], sizes = [1, 256], strides = [1, 1]} : vector<4x256xf32> to vector<1x256xf32>
    %871 = vector.broadcast %869 : vector<4x1xf32> to vector<4x256xf32>
    %872 = vector.broadcast %870 : vector<1x256xf32> to vector<4x256xf32>
    %873 = arith.mulf %871, %872 : vector<4x256xf32>
    %874 = arith.addf %868, %873 : vector<4x256xf32>
    %c0_245 = arith.constant 0 : index
    %c6_246 = arith.constant 6 : index
    %875 = vector.load %arg6[%c0_245, %c6_246] : memref<4x36xf32, #tpu.memory_space<vmem>>, vector<4x1xf32>
    %876 = vector.extract_strided_slice %862 {offsets = [2, 0], sizes = [1, 256], strides = [1, 1]} : vector<4x256xf32> to vector<1x256xf32>
    %877 = vector.broadcast %875 : vector<4x1xf32> to vector<4x256xf32>
    %878 = vector.broadcast %876 : vector<1x256xf32> to vector<4x256xf32>
    %879 = arith.mulf %877, %878 : vector<4x256xf32>
    %880 = arith.addf %874, %879 : vector<4x256xf32>
    %c0_247 = arith.constant 0 : index
    %c7_248 = arith.constant 7 : index
    %881 = vector.load %arg6[%c0_247, %c7_248] : memref<4x36xf32, #tpu.memory_space<vmem>>, vector<4x1xf32>
    %882 = vector.extract_strided_slice %862 {offsets = [3, 0], sizes = [1, 256], strides = [1, 1]} : vector<4x256xf32> to vector<1x256xf32>
    %883 = vector.broadcast %881 : vector<4x1xf32> to vector<4x256xf32>
    %884 = vector.broadcast %882 : vector<1x256xf32> to vector<4x256xf32>
    %885 = arith.mulf %883, %884 : vector<4x256xf32>
    %886 = arith.addf %880, %885 : vector<4x256xf32>
    %c15_i32_249 = arith.constant 15 : i32
    %887 = tpu.dynamic_rotate %829 by %c15_i32_249 dim 1 : vector<4x256xf32>, i32 -> vector<4x256xf32>
    %888 = vector.extract_strided_slice %0 {offsets = [2, 0], sizes = [1, 256], strides = [1, 1]} : vector<9x256xf32> to vector<1x256xf32>
    %889 = vector.broadcast %888 : vector<1x256xf32> to vector<4x256xf32>
    %890 = arith.mulf %887, %889 : vector<4x256xf32>
    %c0_250 = arith.constant 0 : index
    %c8_251 = arith.constant 8 : index
    %891 = vector.load %arg6[%c0_250, %c8_251] : memref<4x36xf32, #tpu.memory_space<vmem>>, vector<4x1xf32>
    %892 = vector.extract_strided_slice %890 {offsets = [0, 0], sizes = [1, 256], strides = [1, 1]} : vector<4x256xf32> to vector<1x256xf32>
    %893 = vector.broadcast %891 : vector<4x1xf32> to vector<4x256xf32>
    %894 = vector.broadcast %892 : vector<1x256xf32> to vector<4x256xf32>
    %895 = arith.mulf %893, %894 : vector<4x256xf32>
    %896 = arith.addf %886, %895 : vector<4x256xf32>
    %c0_252 = arith.constant 0 : index
    %c9_253 = arith.constant 9 : index
    %897 = vector.load %arg6[%c0_252, %c9_253] : memref<4x36xf32, #tpu.memory_space<vmem>>, vector<4x1xf32>
    %898 = vector.extract_strided_slice %890 {offsets = [1, 0], sizes = [1, 256], strides = [1, 1]} : vector<4x256xf32> to vector<1x256xf32>
    %899 = vector.broadcast %897 : vector<4x1xf32> to vector<4x256xf32>
    %900 = vector.broadcast %898 : vector<1x256xf32> to vector<4x256xf32>
    %901 = arith.mulf %899, %900 : vector<4x256xf32>
    %902 = arith.addf %896, %901 : vector<4x256xf32>
    %c0_254 = arith.constant 0 : index
    %c10_255 = arith.constant 10 : index
    %903 = vector.load %arg6[%c0_254, %c10_255] : memref<4x36xf32, #tpu.memory_space<vmem>>, vector<4x1xf32>
    %904 = vector.extract_strided_slice %890 {offsets = [2, 0], sizes = [1, 256], strides = [1, 1]} : vector<4x256xf32> to vector<1x256xf32>
    %905 = vector.broadcast %903 : vector<4x1xf32> to vector<4x256xf32>
    %906 = vector.broadcast %904 : vector<1x256xf32> to vector<4x256xf32>
    %907 = arith.mulf %905, %906 : vector<4x256xf32>
    %908 = arith.addf %902, %907 : vector<4x256xf32>
    %c0_256 = arith.constant 0 : index
    %c11_257 = arith.constant 11 : index
    %909 = vector.load %arg6[%c0_256, %c11_257] : memref<4x36xf32, #tpu.memory_space<vmem>>, vector<4x1xf32>
    %910 = vector.extract_strided_slice %890 {offsets = [3, 0], sizes = [1, 256], strides = [1, 1]} : vector<4x256xf32> to vector<1x256xf32>
    %911 = vector.broadcast %909 : vector<4x1xf32> to vector<4x256xf32>
    %912 = vector.broadcast %910 : vector<1x256xf32> to vector<4x256xf32>
    %913 = arith.mulf %911, %912 : vector<4x256xf32>
    %914 = arith.addf %908, %913 : vector<4x256xf32>
    %c1_i32_258 = arith.constant 1 : i32
    %915 = tpu.dynamic_rotate %829 by %c1_i32_258 dim 1 : vector<4x256xf32>, i32 -> vector<4x256xf32>
    %916 = vector.extract_strided_slice %0 {offsets = [3, 0], sizes = [1, 256], strides = [1, 1]} : vector<9x256xf32> to vector<1x256xf32>
    %917 = vector.broadcast %916 : vector<1x256xf32> to vector<4x256xf32>
    %918 = arith.mulf %915, %917 : vector<4x256xf32>
    %c0_259 = arith.constant 0 : index
    %c12_260 = arith.constant 12 : index
    %919 = vector.load %arg6[%c0_259, %c12_260] : memref<4x36xf32, #tpu.memory_space<vmem>>, vector<4x1xf32>
    %920 = vector.extract_strided_slice %918 {offsets = [0, 0], sizes = [1, 256], strides = [1, 1]} : vector<4x256xf32> to vector<1x256xf32>
    %921 = vector.broadcast %919 : vector<4x1xf32> to vector<4x256xf32>
    %922 = vector.broadcast %920 : vector<1x256xf32> to vector<4x256xf32>
    %923 = arith.mulf %921, %922 : vector<4x256xf32>
    %924 = arith.addf %914, %923 : vector<4x256xf32>
    %c0_261 = arith.constant 0 : index
    %c13_262 = arith.constant 13 : index
    %925 = vector.load %arg6[%c0_261, %c13_262] : memref<4x36xf32, #tpu.memory_space<vmem>>, vector<4x1xf32>
    %926 = vector.extract_strided_slice %918 {offsets = [1, 0], sizes = [1, 256], strides = [1, 1]} : vector<4x256xf32> to vector<1x256xf32>
    %927 = vector.broadcast %925 : vector<4x1xf32> to vector<4x256xf32>
    %928 = vector.broadcast %926 : vector<1x256xf32> to vector<4x256xf32>
    %929 = arith.mulf %927, %928 : vector<4x256xf32>
    %930 = arith.addf %924, %929 : vector<4x256xf32>
    %c0_263 = arith.constant 0 : index
    %c14_264 = arith.constant 14 : index
    %931 = vector.load %arg6[%c0_263, %c14_264] : memref<4x36xf32, #tpu.memory_space<vmem>>, vector<4x1xf32>
    %932 = vector.extract_strided_slice %918 {offsets = [2, 0], sizes = [1, 256], strides = [1, 1]} : vector<4x256xf32> to vector<1x256xf32>
    %933 = vector.broadcast %931 : vector<4x1xf32> to vector<4x256xf32>
    %934 = vector.broadcast %932 : vector<1x256xf32> to vector<4x256xf32>
    %935 = arith.mulf %933, %934 : vector<4x256xf32>
    %936 = arith.addf %930, %935 : vector<4x256xf32>
    %c0_265 = arith.constant 0 : index
    %c15_266 = arith.constant 15 : index
    %937 = vector.load %arg6[%c0_265, %c15_266] : memref<4x36xf32, #tpu.memory_space<vmem>>, vector<4x1xf32>
    %938 = vector.extract_strided_slice %918 {offsets = [3, 0], sizes = [1, 256], strides = [1, 1]} : vector<4x256xf32> to vector<1x256xf32>
    %939 = vector.broadcast %937 : vector<4x1xf32> to vector<4x256xf32>
    %940 = vector.broadcast %938 : vector<1x256xf32> to vector<4x256xf32>
    %941 = arith.mulf %939, %940 : vector<4x256xf32>
    %942 = arith.addf %936, %941 : vector<4x256xf32>
    %943 = vector.extract_strided_slice %0 {offsets = [4, 0], sizes = [1, 256], strides = [1, 1]} : vector<9x256xf32> to vector<1x256xf32>
    %944 = vector.broadcast %943 : vector<1x256xf32> to vector<4x256xf32>
    %945 = arith.mulf %829, %944 : vector<4x256xf32>
    %c0_267 = arith.constant 0 : index
    %c16_268 = arith.constant 16 : index
    %946 = vector.load %arg6[%c0_267, %c16_268] : memref<4x36xf32, #tpu.memory_space<vmem>>, vector<4x1xf32>
    %947 = vector.extract_strided_slice %945 {offsets = [0, 0], sizes = [1, 256], strides = [1, 1]} : vector<4x256xf32> to vector<1x256xf32>
    %948 = vector.broadcast %946 : vector<4x1xf32> to vector<4x256xf32>
    %949 = vector.broadcast %947 : vector<1x256xf32> to vector<4x256xf32>
    %950 = arith.mulf %948, %949 : vector<4x256xf32>
    %951 = arith.addf %942, %950 : vector<4x256xf32>
    %c0_269 = arith.constant 0 : index
    %c17_270 = arith.constant 17 : index
    %952 = vector.load %arg6[%c0_269, %c17_270] : memref<4x36xf32, #tpu.memory_space<vmem>>, vector<4x1xf32>
    %953 = vector.extract_strided_slice %945 {offsets = [1, 0], sizes = [1, 256], strides = [1, 1]} : vector<4x256xf32> to vector<1x256xf32>
    %954 = vector.broadcast %952 : vector<4x1xf32> to vector<4x256xf32>
    %955 = vector.broadcast %953 : vector<1x256xf32> to vector<4x256xf32>
    %956 = arith.mulf %954, %955 : vector<4x256xf32>
    %957 = arith.addf %951, %956 : vector<4x256xf32>
    %c0_271 = arith.constant 0 : index
    %c18_272 = arith.constant 18 : index
    %958 = vector.load %arg6[%c0_271, %c18_272] : memref<4x36xf32, #tpu.memory_space<vmem>>, vector<4x1xf32>
    %959 = vector.extract_strided_slice %945 {offsets = [2, 0], sizes = [1, 256], strides = [1, 1]} : vector<4x256xf32> to vector<1x256xf32>
    %960 = vector.broadcast %958 : vector<4x1xf32> to vector<4x256xf32>
    %961 = vector.broadcast %959 : vector<1x256xf32> to vector<4x256xf32>
    %962 = arith.mulf %960, %961 : vector<4x256xf32>
    %963 = arith.addf %957, %962 : vector<4x256xf32>
    %c0_273 = arith.constant 0 : index
    %c19_274 = arith.constant 19 : index
    %964 = vector.load %arg6[%c0_273, %c19_274] : memref<4x36xf32, #tpu.memory_space<vmem>>, vector<4x1xf32>
    %965 = vector.extract_strided_slice %945 {offsets = [3, 0], sizes = [1, 256], strides = [1, 1]} : vector<4x256xf32> to vector<1x256xf32>
    %966 = vector.broadcast %964 : vector<4x1xf32> to vector<4x256xf32>
    %967 = vector.broadcast %965 : vector<1x256xf32> to vector<4x256xf32>
    %968 = arith.mulf %966, %967 : vector<4x256xf32>
    %969 = arith.addf %963, %968 : vector<4x256xf32>
    %c255_i32_275 = arith.constant 255 : i32
    %970 = tpu.dynamic_rotate %829 by %c255_i32_275 dim 1 : vector<4x256xf32>, i32 -> vector<4x256xf32>
    %971 = vector.extract_strided_slice %0 {offsets = [5, 0], sizes = [1, 256], strides = [1, 1]} : vector<9x256xf32> to vector<1x256xf32>
    %972 = vector.broadcast %971 : vector<1x256xf32> to vector<4x256xf32>
    %973 = arith.mulf %970, %972 : vector<4x256xf32>
    %c0_276 = arith.constant 0 : index
    %c20_277 = arith.constant 20 : index
    %974 = vector.load %arg6[%c0_276, %c20_277] : memref<4x36xf32, #tpu.memory_space<vmem>>, vector<4x1xf32>
    %975 = vector.extract_strided_slice %973 {offsets = [0, 0], sizes = [1, 256], strides = [1, 1]} : vector<4x256xf32> to vector<1x256xf32>
    %976 = vector.broadcast %974 : vector<4x1xf32> to vector<4x256xf32>
    %977 = vector.broadcast %975 : vector<1x256xf32> to vector<4x256xf32>
    %978 = arith.mulf %976, %977 : vector<4x256xf32>
    %979 = arith.addf %969, %978 : vector<4x256xf32>
    %c0_278 = arith.constant 0 : index
    %c21_279 = arith.constant 21 : index
    %980 = vector.load %arg6[%c0_278, %c21_279] : memref<4x36xf32, #tpu.memory_space<vmem>>, vector<4x1xf32>
    %981 = vector.extract_strided_slice %973 {offsets = [1, 0], sizes = [1, 256], strides = [1, 1]} : vector<4x256xf32> to vector<1x256xf32>
    %982 = vector.broadcast %980 : vector<4x1xf32> to vector<4x256xf32>
    %983 = vector.broadcast %981 : vector<1x256xf32> to vector<4x256xf32>
    %984 = arith.mulf %982, %983 : vector<4x256xf32>
    %985 = arith.addf %979, %984 : vector<4x256xf32>
    %c0_280 = arith.constant 0 : index
    %c22_281 = arith.constant 22 : index
    %986 = vector.load %arg6[%c0_280, %c22_281] : memref<4x36xf32, #tpu.memory_space<vmem>>, vector<4x1xf32>
    %987 = vector.extract_strided_slice %973 {offsets = [2, 0], sizes = [1, 256], strides = [1, 1]} : vector<4x256xf32> to vector<1x256xf32>
    %988 = vector.broadcast %986 : vector<4x1xf32> to vector<4x256xf32>
    %989 = vector.broadcast %987 : vector<1x256xf32> to vector<4x256xf32>
    %990 = arith.mulf %988, %989 : vector<4x256xf32>
    %991 = arith.addf %985, %990 : vector<4x256xf32>
    %c0_282 = arith.constant 0 : index
    %c23_283 = arith.constant 23 : index
    %992 = vector.load %arg6[%c0_282, %c23_283] : memref<4x36xf32, #tpu.memory_space<vmem>>, vector<4x1xf32>
    %993 = vector.extract_strided_slice %973 {offsets = [3, 0], sizes = [1, 256], strides = [1, 1]} : vector<4x256xf32> to vector<1x256xf32>
    %994 = vector.broadcast %992 : vector<4x1xf32> to vector<4x256xf32>
    %995 = vector.broadcast %993 : vector<1x256xf32> to vector<4x256xf32>
    %996 = arith.mulf %994, %995 : vector<4x256xf32>
    %997 = arith.addf %991, %996 : vector<4x256xf32>
    %c241_i32_284 = arith.constant 241 : i32
    %998 = tpu.dynamic_rotate %829 by %c241_i32_284 dim 1 : vector<4x256xf32>, i32 -> vector<4x256xf32>
    %999 = vector.extract_strided_slice %0 {offsets = [6, 0], sizes = [1, 256], strides = [1, 1]} : vector<9x256xf32> to vector<1x256xf32>
    %1000 = vector.broadcast %999 : vector<1x256xf32> to vector<4x256xf32>
    %1001 = arith.mulf %998, %1000 : vector<4x256xf32>
    %c0_285 = arith.constant 0 : index
    %c24_286 = arith.constant 24 : index
    %1002 = vector.load %arg6[%c0_285, %c24_286] : memref<4x36xf32, #tpu.memory_space<vmem>>, vector<4x1xf32>
    %1003 = vector.extract_strided_slice %1001 {offsets = [0, 0], sizes = [1, 256], strides = [1, 1]} : vector<4x256xf32> to vector<1x256xf32>
    %1004 = vector.broadcast %1002 : vector<4x1xf32> to vector<4x256xf32>
    %1005 = vector.broadcast %1003 : vector<1x256xf32> to vector<4x256xf32>
    %1006 = arith.mulf %1004, %1005 : vector<4x256xf32>
    %1007 = arith.addf %997, %1006 : vector<4x256xf32>
    %c0_287 = arith.constant 0 : index
    %c25_288 = arith.constant 25 : index
    %1008 = vector.load %arg6[%c0_287, %c25_288] : memref<4x36xf32, #tpu.memory_space<vmem>>, vector<4x1xf32>
    %1009 = vector.extract_strided_slice %1001 {offsets = [1, 0], sizes = [1, 256], strides = [1, 1]} : vector<4x256xf32> to vector<1x256xf32>
    %1010 = vector.broadcast %1008 : vector<4x1xf32> to vector<4x256xf32>
    %1011 = vector.broadcast %1009 : vector<1x256xf32> to vector<4x256xf32>
    %1012 = arith.mulf %1010, %1011 : vector<4x256xf32>
    %1013 = arith.addf %1007, %1012 : vector<4x256xf32>
    %c0_289 = arith.constant 0 : index
    %c26_290 = arith.constant 26 : index
    %1014 = vector.load %arg6[%c0_289, %c26_290] : memref<4x36xf32, #tpu.memory_space<vmem>>, vector<4x1xf32>
    %1015 = vector.extract_strided_slice %1001 {offsets = [2, 0], sizes = [1, 256], strides = [1, 1]} : vector<4x256xf32> to vector<1x256xf32>
    %1016 = vector.broadcast %1014 : vector<4x1xf32> to vector<4x256xf32>
    %1017 = vector.broadcast %1015 : vector<1x256xf32> to vector<4x256xf32>
    %1018 = arith.mulf %1016, %1017 : vector<4x256xf32>
    %1019 = arith.addf %1013, %1018 : vector<4x256xf32>
    %c0_291 = arith.constant 0 : index
    %c27_292 = arith.constant 27 : index
    %1020 = vector.load %arg6[%c0_291, %c27_292] : memref<4x36xf32, #tpu.memory_space<vmem>>, vector<4x1xf32>
    %1021 = vector.extract_strided_slice %1001 {offsets = [3, 0], sizes = [1, 256], strides = [1, 1]} : vector<4x256xf32> to vector<1x256xf32>
    %1022 = vector.broadcast %1020 : vector<4x1xf32> to vector<4x256xf32>
    %1023 = vector.broadcast %1021 : vector<1x256xf32> to vector<4x256xf32>
    %1024 = arith.mulf %1022, %1023 : vector<4x256xf32>
    %1025 = arith.addf %1019, %1024 : vector<4x256xf32>
    %c240_i32_293 = arith.constant 240 : i32
    %1026 = tpu.dynamic_rotate %829 by %c240_i32_293 dim 1 : vector<4x256xf32>, i32 -> vector<4x256xf32>
    %1027 = vector.extract_strided_slice %0 {offsets = [7, 0], sizes = [1, 256], strides = [1, 1]} : vector<9x256xf32> to vector<1x256xf32>
    %1028 = vector.broadcast %1027 : vector<1x256xf32> to vector<4x256xf32>
    %1029 = arith.mulf %1026, %1028 : vector<4x256xf32>
    %c0_294 = arith.constant 0 : index
    %c28_295 = arith.constant 28 : index
    %1030 = vector.load %arg6[%c0_294, %c28_295] : memref<4x36xf32, #tpu.memory_space<vmem>>, vector<4x1xf32>
    %1031 = vector.extract_strided_slice %1029 {offsets = [0, 0], sizes = [1, 256], strides = [1, 1]} : vector<4x256xf32> to vector<1x256xf32>
    %1032 = vector.broadcast %1030 : vector<4x1xf32> to vector<4x256xf32>
    %1033 = vector.broadcast %1031 : vector<1x256xf32> to vector<4x256xf32>
    %1034 = arith.mulf %1032, %1033 : vector<4x256xf32>
    %1035 = arith.addf %1025, %1034 : vector<4x256xf32>
    %c0_296 = arith.constant 0 : index
    %c29_297 = arith.constant 29 : index
    %1036 = vector.load %arg6[%c0_296, %c29_297] : memref<4x36xf32, #tpu.memory_space<vmem>>, vector<4x1xf32>
    %1037 = vector.extract_strided_slice %1029 {offsets = [1, 0], sizes = [1, 256], strides = [1, 1]} : vector<4x256xf32> to vector<1x256xf32>
    %1038 = vector.broadcast %1036 : vector<4x1xf32> to vector<4x256xf32>
    %1039 = vector.broadcast %1037 : vector<1x256xf32> to vector<4x256xf32>
    %1040 = arith.mulf %1038, %1039 : vector<4x256xf32>
    %1041 = arith.addf %1035, %1040 : vector<4x256xf32>
    %c0_298 = arith.constant 0 : index
    %c30_299 = arith.constant 30 : index
    %1042 = vector.load %arg6[%c0_298, %c30_299] : memref<4x36xf32, #tpu.memory_space<vmem>>, vector<4x1xf32>
    %1043 = vector.extract_strided_slice %1029 {offsets = [2, 0], sizes = [1, 256], strides = [1, 1]} : vector<4x256xf32> to vector<1x256xf32>
    %1044 = vector.broadcast %1042 : vector<4x1xf32> to vector<4x256xf32>
    %1045 = vector.broadcast %1043 : vector<1x256xf32> to vector<4x256xf32>
    %1046 = arith.mulf %1044, %1045 : vector<4x256xf32>
    %1047 = arith.addf %1041, %1046 : vector<4x256xf32>
    %c0_300 = arith.constant 0 : index
    %c31_301 = arith.constant 31 : index
    %1048 = vector.load %arg6[%c0_300, %c31_301] : memref<4x36xf32, #tpu.memory_space<vmem>>, vector<4x1xf32>
    %1049 = vector.extract_strided_slice %1029 {offsets = [3, 0], sizes = [1, 256], strides = [1, 1]} : vector<4x256xf32> to vector<1x256xf32>
    %1050 = vector.broadcast %1048 : vector<4x1xf32> to vector<4x256xf32>
    %1051 = vector.broadcast %1049 : vector<1x256xf32> to vector<4x256xf32>
    %1052 = arith.mulf %1050, %1051 : vector<4x256xf32>
    %1053 = arith.addf %1047, %1052 : vector<4x256xf32>
    %c239_i32_302 = arith.constant 239 : i32
    %1054 = tpu.dynamic_rotate %829 by %c239_i32_302 dim 1 : vector<4x256xf32>, i32 -> vector<4x256xf32>
    %1055 = vector.extract_strided_slice %0 {offsets = [8, 0], sizes = [1, 256], strides = [1, 1]} : vector<9x256xf32> to vector<1x256xf32>
    %1056 = vector.broadcast %1055 : vector<1x256xf32> to vector<4x256xf32>
    %1057 = arith.mulf %1054, %1056 : vector<4x256xf32>
    %c0_303 = arith.constant 0 : index
    %c32_304 = arith.constant 32 : index
    %1058 = vector.load %arg6[%c0_303, %c32_304] : memref<4x36xf32, #tpu.memory_space<vmem>>, vector<4x1xf32>
    %1059 = vector.extract_strided_slice %1057 {offsets = [0, 0], sizes = [1, 256], strides = [1, 1]} : vector<4x256xf32> to vector<1x256xf32>
    %1060 = vector.broadcast %1058 : vector<4x1xf32> to vector<4x256xf32>
    %1061 = vector.broadcast %1059 : vector<1x256xf32> to vector<4x256xf32>
    %1062 = arith.mulf %1060, %1061 : vector<4x256xf32>
    %1063 = arith.addf %1053, %1062 : vector<4x256xf32>
    %c0_305 = arith.constant 0 : index
    %c33_306 = arith.constant 33 : index
    %1064 = vector.load %arg6[%c0_305, %c33_306] : memref<4x36xf32, #tpu.memory_space<vmem>>, vector<4x1xf32>
    %1065 = vector.extract_strided_slice %1057 {offsets = [1, 0], sizes = [1, 256], strides = [1, 1]} : vector<4x256xf32> to vector<1x256xf32>
    %1066 = vector.broadcast %1064 : vector<4x1xf32> to vector<4x256xf32>
    %1067 = vector.broadcast %1065 : vector<1x256xf32> to vector<4x256xf32>
    %1068 = arith.mulf %1066, %1067 : vector<4x256xf32>
    %1069 = arith.addf %1063, %1068 : vector<4x256xf32>
    %c0_307 = arith.constant 0 : index
    %c34_308 = arith.constant 34 : index
    %1070 = vector.load %arg6[%c0_307, %c34_308] : memref<4x36xf32, #tpu.memory_space<vmem>>, vector<4x1xf32>
    %1071 = vector.extract_strided_slice %1057 {offsets = [2, 0], sizes = [1, 256], strides = [1, 1]} : vector<4x256xf32> to vector<1x256xf32>
    %1072 = vector.broadcast %1070 : vector<4x1xf32> to vector<4x256xf32>
    %1073 = vector.broadcast %1071 : vector<1x256xf32> to vector<4x256xf32>
    %1074 = arith.mulf %1072, %1073 : vector<4x256xf32>
    %1075 = arith.addf %1069, %1074 : vector<4x256xf32>
    %c0_309 = arith.constant 0 : index
    %c35_310 = arith.constant 35 : index
    %1076 = vector.load %arg6[%c0_309, %c35_310] : memref<4x36xf32, #tpu.memory_space<vmem>>, vector<4x1xf32>
    %1077 = vector.extract_strided_slice %1057 {offsets = [3, 0], sizes = [1, 256], strides = [1, 1]} : vector<4x256xf32> to vector<1x256xf32>
    %1078 = vector.broadcast %1076 : vector<4x1xf32> to vector<4x256xf32>
    %1079 = vector.broadcast %1077 : vector<1x256xf32> to vector<4x256xf32>
    %1080 = arith.mulf %1078, %1079 : vector<4x256xf32>
    %1081 = arith.addf %1075, %1080 : vector<4x256xf32>
    %c0_311 = arith.constant 0 : index
    %c0_312 = arith.constant 0 : index
    %1082 = vector.load %arg7[%c0_311, %c0_312] : memref<4x1xf32, #tpu.memory_space<vmem>>, vector<4x1xf32>
    %1083 = vector.broadcast %1082 : vector<4x1xf32> to vector<4x256xf32>
    %1084 = arith.addf %1081, %1083 : vector<4x256xf32>
    %cst_313 = arith.constant dense<0.000000e+00> : vector<4xf32>
    %1085 = vector.multi_reduction <add>, %1084, %cst_313 [1] : vector<4x256xf32> to vector<4xf32>
    %1086 = vector.shape_cast %1085 : vector<4xf32> to vector<4x1xf32>
    %cst_314 = arith.constant 2.560000e+02 : f32
    %1087 = vector.broadcast %cst_314 : f32 to vector<4x1xf32>
    %1088 = arith.divf %1086, %1087 : vector<4x1xf32>
    %1089 = vector.broadcast %1088 : vector<4x1xf32> to vector<4x256xf32>
    %1090 = arith.subf %1084, %1089 : vector<4x256xf32>
    %1091 = arith.mulf %1090, %1090 : vector<4x256xf32>
    %cst_315 = arith.constant dense<0.000000e+00> : vector<4xf32>
    %1092 = vector.multi_reduction <add>, %1091, %cst_315 [1] : vector<4x256xf32> to vector<4xf32>
    %1093 = vector.shape_cast %1092 : vector<4xf32> to vector<4x1xf32>
    %cst_316 = arith.constant 2.560000e+02 : f32
    %1094 = vector.broadcast %cst_316 : f32 to vector<4x1xf32>
    %1095 = arith.divf %1093, %1094 : vector<4x1xf32>
    %1096 = vector.broadcast %1088 : vector<4x1xf32> to vector<4x256xf32>
    %1097 = arith.subf %1084, %1096 : vector<4x256xf32>
    %cst_317 = arith.constant 9.99999974E-6 : f32
    %1098 = vector.broadcast %cst_317 : f32 to vector<4x1xf32>
    %1099 = arith.addf %1095, %1098 : vector<4x1xf32>
    %1100 = math.rsqrt %1099 : vector<4x1xf32>
    %1101 = vector.broadcast %1100 : vector<4x1xf32> to vector<4x256xf32>
    %1102 = arith.mulf %1097, %1101 : vector<4x256xf32>
    %cst_318 = arith.constant 0.000000e+00 : f32
    %1103 = vector.broadcast %cst_318 : f32 to vector<4x256xf32>
    %1104 = arith.maximumf %1102, %1103 : vector<4x256xf32>
    %cst_319 = arith.constant 0.000000e+00 : f32
    %1105 = vector.broadcast %cst_319 : f32 to vector<4x256xf32>
    %1106 = arith.subf %1105, %554 : vector<4x256xf32>
    %1107 = math.exp %1106 : vector<4x256xf32>
    %cst_320 = arith.constant 1.000000e+00 : f32
    %1108 = vector.broadcast %cst_320 : f32 to vector<4x256xf32>
    %1109 = arith.addf %1108, %1107 : vector<4x256xf32>
    %1110 = tpu.reciprocal %1109 {approx = true} : vector<4x256xf32> -> vector<4x256xf32>
    %1111 = arith.mulf %1104, %1110 : vector<4x256xf32>
    %1112 = arith.addf %1111, %2 : vector<4x256xf32>
    %c0_321 = arith.constant 0 : index
    %c0_322 = arith.constant 0 : index
    %c0_323 = arith.constant 0 : index
    %1113 = vector.load %arg12[%c0_321, %c0_322, %c0_323] : memref<1x4x256xf32, #tpu.memory_space<vmem>>, vector<1x4x256xf32>
    %1114 = vector.shape_cast %1113 : vector<1x4x256xf32> to vector<4x256xf32>
    %1115 = vector.shape_cast %1112 : vector<4x256xf32> to vector<1x4x256xf32>
    tpu.vector_store %arg12[%c0_321, %c0_322, %c0_323], %1115 {strides = array<i32>} : memref<1x4x256xf32, #tpu.memory_space<vmem>>, vector<1x4x256xf32>,
    %c0_324 = arith.constant 0 : index
    %c0_325 = arith.constant 0 : index
    %c0_326 = arith.constant 0 : index
    %1116 = vector.load %arg13[%c0_324, %c0_325, %c0_326] : memref<1x4x256xf32, #tpu.memory_space<vmem>>, vector<1x4x256xf32>
    %1117 = vector.shape_cast %1116 : vector<1x4x256xf32> to vector<4x256xf32>
    %1118 = vector.shape_cast %554 : vector<4x256xf32> to vector<1x4x256xf32>
    tpu.vector_store %arg13[%c0_324, %c0_325, %c0_326], %1118 {strides = array<i32>} : memref<1x4x256xf32, #tpu.memory_space<vmem>>, vector<1x4x256xf32>,
    %c0_327 = arith.constant 0 : index
    %c0_328 = arith.constant 0 : index
    %c0_329 = arith.constant 0 : index
    %1119 = vector.load %arg14[%c0_327, %c0_328, %c0_329] : memref<1x4x256xf32, #tpu.memory_space<vmem>>, vector<1x4x256xf32>
    %1120 = vector.shape_cast %1119 : vector<1x4x256xf32> to vector<4x256xf32>
    %1121 = vector.shape_cast %1111 : vector<4x256xf32> to vector<1x4x256xf32>
    tpu.vector_store %arg14[%c0_327, %c0_328, %c0_329], %1121 {strides = array<i32>} : memref<1x4x256xf32, #tpu.memory_space<vmem>>, vector<1x4x256xf32>,
    return
  }
  func.func @transform_0(%arg0: i32) -> (i32, i32) {
    %c0_i32 = arith.constant 0 : i32
    %c0_i32_0 = arith.constant 0 : i32
    %c0_i32_1 = arith.constant 0 : i32
    return %c0_i32, %c0_i32_0 : i32, i32
  }
  func.func @transform_1(%arg0: i32) -> (i32, i32, i32) {
    %c0_i32 = arith.constant 0 : i32
    %c0_i32_0 = arith.constant 0 : i32
    %c0_i32_1 = arith.constant 0 : i32
    return %arg0, %c0_i32, %c0_i32_0 : i32, i32, i32
  }
  func.func @transform_2(%arg0: i32) -> (i32, i32, i32) {
    %c0_i32 = arith.constant 0 : i32
    %c0_i32_0 = arith.constant 0 : i32
    %c0_i32_1 = arith.constant 0 : i32
    return %arg0, %c0_i32, %c0_i32_0 : i32, i32, i32
  }
  func.func @transform_3(%arg0: i32) -> (i32, i32) {
    %c0_i32 = arith.constant 0 : i32
    %c0_i32_0 = arith.constant 0 : i32
    %c0_i32_1 = arith.constant 0 : i32
    return %c0_i32, %c0_i32_0 : i32, i32
  }
  func.func @transform_4(%arg0: i32) -> (i32, i32) {
    %c0_i32 = arith.constant 0 : i32
    %c0_i32_0 = arith.constant 0 : i32
    %c0_i32_1 = arith.constant 0 : i32
    return %c0_i32, %c0_i32_0 : i32, i32
  }
  func.func @transform_5(%arg0: i32) -> (i32, i32) {
    %c0_i32 = arith.constant 0 : i32
    %c0_i32_0 = arith.constant 0 : i32
    %c0_i32_1 = arith.constant 0 : i32
    return %c0_i32, %c0_i32_0 : i32, i32
  }
  func.func @transform_6(%arg0: i32) -> (i32, i32) {
    %c0_i32 = arith.constant 0 : i32
    %c0_i32_0 = arith.constant 0 : i32
    %c0_i32_1 = arith.constant 0 : i32
    return %c0_i32, %c0_i32_0 : i32, i32
  }
  func.func @transform_7(%arg0: i32) -> (i32, i32) {
    %c0_i32 = arith.constant 0 : i32
    %c0_i32_0 = arith.constant 0 : i32
    %c0_i32_1 = arith.constant 0 : i32
    return %c0_i32, %c0_i32_0 : i32, i32
  }
  func.func @transform_8(%arg0: i32) -> (i32, i32) {
    %c0_i32 = arith.constant 0 : i32
    %c0_i32_0 = arith.constant 0 : i32
    %c0_i32_1 = arith.constant 0 : i32
    return %c0_i32, %c0_i32_0 : i32, i32
  }
  func.func @transform_9(%arg0: i32) -> (i32, i32) {
    %c0_i32 = arith.constant 0 : i32
    %c0_i32_0 = arith.constant 0 : i32
    %c0_i32_1 = arith.constant 0 : i32
    return %c0_i32, %c0_i32_0 : i32, i32
  }
  func.func @transform_10(%arg0: i32) -> (i32, i32) {
    %c0_i32 = arith.constant 0 : i32
    %c0_i32_0 = arith.constant 0 : i32
    %c0_i32_1 = arith.constant 0 : i32
    return %c0_i32, %c0_i32_0 : i32, i32
  }
  func.func @transform_11(%arg0: i32) -> (i32, i32, i32) {
    %c0_i32 = arith.constant 0 : i32
    %c0_i32_0 = arith.constant 0 : i32
    %c0_i32_1 = arith.constant 0 : i32
    return %arg0, %c0_i32, %c0_i32_0 : i32, i32, i32
  }
  func.func @transform_12(%arg0: i32) -> (i32, i32, i32) {
    %c0_i32 = arith.constant 0 : i32
    %c0_i32_0 = arith.constant 0 : i32
    %c0_i32_1 = arith.constant 0 : i32
    return %arg0, %c0_i32, %c0_i32_0 : i32, i32, i32
  }
  func.func @transform_13(%arg0: i32) -> (i32, i32, i32) {
    %c0_i32 = arith.constant 0 : i32
    %c0_i32_0 = arith.constant 0 : i32
    %c0_i32_1 = arith.constant 0 : i32
    return %arg0, %c0_i32, %c0_i32_0 : i32, i32, i32
  }
}

</mosaic_0001>

<llo_original>
// kernel: style_attention_block_forward.1
$region0: #{style_attention_block_forward.1}
  #allocation0 [shape = 'u32[]', space=smem, size = 0x4, offset = 0x4, fixed_abs, tag = 'smem constant byte address 0x4 - core index']
  #allocation1 [shape = 'u32[144,128]{1,0:T(1,128)}', space=vmem, size = 0x12000, scoped, tag = 'internal scratch']
  %s0 = inlined_call_operand.vmem [shape: f32[9,256], index: 0, kind: input, shape index: {}]
  %s1 = inlined_call_operand.vmem [shape: f32[2,4,256], index: 1, kind: input, shape index: {}]
  %s2 = inlined_call_operand.vmem [shape: f32[2,4,256], index: 2, kind: input, shape index: {}]
  %s3 = inlined_call_operand.vmem [shape: f32[4,36], index: 3, kind: input, shape index: {}]
  %s4 = inlined_call_operand.vmem [shape: f32[4,1], index: 4, kind: input, shape index: {}]
  %s5 = inlined_call_operand.vmem [shape: f32[4,36], index: 5, kind: input, shape index: {}]
  %s6 = inlined_call_operand.vmem [shape: f32[4,1], index: 6, kind: input, shape index: {}]
  %s7 = inlined_call_operand.vmem [shape: f32[4,36], index: 7, kind: input, shape index: {}]
  %s8 = inlined_call_operand.vmem [shape: f32[4,1], index: 8, kind: input, shape index: {}]
  %s9 = inlined_call_operand.vmem [shape: f32[4,36], index: 9, kind: input, shape index: {}]
  %s10 = inlined_call_operand.vmem [shape: f32[4,1], index: 10, kind: input, shape index: {}]
  %s11 = inlined_call_operand.vmem [shape: f32[2,4,256], index: 11, kind: output, shape index: {0}]
  %s12 = inlined_call_operand.vmem [shape: f32[2,4,256], index: 12, kind: output, shape index: {1}]
  %s13 = inlined_call_operand.vmem [shape: f32[2,4,256], index: 13, kind: output, shape index: {2}]
  %14 = xla_tuple %s11, %s12, %s13
  %s15 = sld [smem:[#allocation0]]
  $region93: #{style_attention_block_forward.1} parent=0
    _
  %s17 = ssub.s32 1, %s15
  %s18 = scalar_select 0, %s17, %s15
  loop: start=0, step=1, limit=4
  $region2: #{style_attention_block_forward.1} parent=0 // loop_pre_header
    _
  $region3: #{style_attention_block_forward.1} parent=0 // loop_header
    %s20 = sphi 0, %s24
    %p21 = scmp.ge.s32.totalorder %s20, 4
    %s28 = sphi 0, %s28
    %s30 = sphi 0, %s28
    %s31 = sphi 0, %s30
    %s45 = sphi 0, %s31
    %s51 = sphi 0, %s53
    %s54 = sphi 0, %s51
    %s55 = sphi 0, %s54
    %s71 = sphi 0, %s55
    %s77 = sphi 0, %s79
    %s80 = sphi 0, %s77
    %s81 = sphi 0, %s80
    %s97 = sphi 0, %s81
    %s101 = sphi 0, %s101
    %s103 = sphi 0, %s101
    %s104 = sphi 0, %s103
    %s118 = sphi 0, %s104
    %s122 = sphi 0, %s122
    %s124 = sphi 0, %s122
    %s125 = sphi 0, %s124
    %s139 = sphi 0, %s125
    %s143 = sphi 0, %s143
    %s145 = sphi 0, %s143
    %s146 = sphi 0, %s145
    %s160 = sphi 0, %s146
    %s164 = sphi 0, %s164
    %s166 = sphi 0, %s164
    %s167 = sphi 0, %s166
    %s181 = sphi 0, %s167
    %s185 = sphi 0, %s185
    %s187 = sphi 0, %s185
    %s188 = sphi 0, %s187
    %s202 = sphi 0, %s188
    %s206 = sphi 0, %s206
    %s208 = sphi 0, %s206
    %s209 = sphi 0, %s208
    %s223 = sphi 0, %s209
    %s227 = sphi 0, %s227
    %s229 = sphi 0, %s227
    %s230 = sphi 0, %s229
    %s244 = sphi 0, %s230
    %s248 = sphi 0, %s248
    %s250 = sphi 0, %s248
    %s251 = sphi 0, %s250
    %s265 = sphi 0, %s251
    %s271 = sphi 0, %s273
    %s274 = sphi 0, %s271
    %s275 = sphi 0, %s274
    %s291 = sphi 0, %s275
    %s297 = sphi 0, %s299
    %s300 = sphi 0, %s297
    %s301 = sphi 0, %s300
    %s317 = sphi 0, %s301
    %s323 = sphi 0, %s325
    %s326 = sphi 0, %s323
    %s327 = sphi 0, %s326
    %s343 = sphi 0, %s327
  $region4: #{style_attention_block_forward.1} parent=0 // loop_header_branch
    %23 = sbr.rel (%p21) target = $region8
  $region5: #{style_attention_block_forward.1} parent=0 // loop_body
    %s25 = ssub.s32 %s20, 1
    %s26 = ssub.s32 %s20, 2
    %s27 = sadd.s32 %s20, 1
    %s29 = sadd.s32 %s28, 1
    %p32 = scmp.eq.s32.totalorder %s20, 1
    %p33 = scmp.ne.s32.totalorder %s28, %s30
    %p34 = scmp.eq.s32.totalorder %s20, 0
    %p35 = por %p33, %p34
    %p36 = scmp.ne.s32.totalorder %s28, %s30
    %p37 = scmp.eq.s32.totalorder %s25, 1
    %p38 = por %p36, %p37
    %p39 = scmp.ne.s32.totalorder %s30, %s31
    %p40 = scmp.eq.s32.totalorder %s25, 0
    %p41 = por %p39, %p40
    %p42 = scmp.ne.s32.totalorder %s30, %s31
    %p43 = scmp.eq.s32.totalorder %s26, 1
    %p44 = por %p42, %p43
    %p46 = scmp.ne.s32.totalorder %s31, %s45
    %p47 = scmp.eq.s32.totalorder %s26, 0
    %p48 = por %p46, %p47
    %s49 = ssub.s32 %s20, %s27
    %p50 = scmp.eq.s32.totalorder %s49, 0
    %s52 = sadd.s32 %s51, 1
    %s53 = scalar_select %p50, %s51, %s52
    %p56 = pneg %p50
    %p57 = scmp.eq.s32.totalorder %s20, 1
    %p58 = por %p56, %p57
    %p59 = scmp.ne.s32.totalorder %s51, %s54
    %p60 = scmp.eq.s32.totalorder %s20, 0
    %p61 = por %p59, %p60
    %p62 = scmp.ne.s32.totalorder %s51, %s54
    %p63 = scmp.eq.s32.totalorder %s25, 1
    %p64 = por %p62, %p63
    %p65 = scmp.ne.s32.totalorder %s54, %s55
    %p66 = scmp.eq.s32.totalorder %s25, 0
    %p67 = por %p65, %p66
    %p68 = scmp.ne.s32.totalorder %s54, %s55
    %p69 = scmp.eq.s32.totalorder %s26, 1
    %p70 = por %p68, %p69
    %p72 = scmp.ne.s32.totalorder %s55, %s71
    %p73 = scmp.eq.s32.totalorder %s26, 0
    %p74 = por %p72, %p73
    %s75 = ssub.s32 %s20, %s27
    %p76 = scmp.eq.s32.totalorder %s75, 0
    %s78 = sadd.s32 %s77, 1
    %s79 = scalar_select %p76, %s77, %s78
    %p82 = pneg %p76
    %p83 = scmp.eq.s32.totalorder %s20, 1
    %p84 = por %p82, %p83
    %p85 = scmp.ne.s32.totalorder %s77, %s80
    %p86 = scmp.eq.s32.totalorder %s20, 0
    %p87 = por %p85, %p86
    %p88 = scmp.ne.s32.totalorder %s77, %s80
    %p89 = scmp.eq.s32.totalorder %s25, 1
    %p90 = por %p88, %p89
    %p91 = scmp.ne.s32.totalorder %s80, %s81
    %p92 = scmp.eq.s32.totalorder %s25, 0
    %p93 = por %p91, %p92
    %p94 = scmp.ne.s32.totalorder %s80, %s81
    %p95 = scmp.eq.s32.totalorder %s26, 1
    %p96 = por %p94, %p95
    %p98 = scmp.ne.s32.totalorder %s81, %s97
    %p99 = scmp.eq.s32.totalorder %s26, 0
    %p100 = por %p98, %p99
    %s102 = sadd.s32 %s101, 1
    %p105 = scmp.eq.s32.totalorder %s20, 1
    %p106 = scmp.ne.s32.totalorder %s101, %s103
    %p107 = scmp.eq.s32.totalorder %s20, 0
    %p108 = por %p106, %p107
    %p109 = scmp.ne.s32.totalorder %s101, %s103
    %p110 = scmp.eq.s32.totalorder %s25, 1
    %p111 = por %p109, %p110
    %p112 = scmp.ne.s32.totalorder %s103, %s104
    %p113 = scmp.eq.s32.totalorder %s25, 0
    %p114 = por %p112, %p113
    %p115 = scmp.ne.s32.totalorder %s103, %s104
    %p116 = scmp.eq.s32.totalorder %s26, 1
    %p117 = por %p115, %p116
    %p119 = scmp.ne.s32.totalorder %s104, %s118
    %p120 = scmp.eq.s32.totalorder %s26, 0
    %p121 = por %p119, %p120
    %s123 = sadd.s32 %s122, 1
    %p126 = scmp.eq.s32.totalorder %s20, 1
    %p127 = scmp.ne.s32.totalorder %s122, %s124
    %p128 = scmp.eq.s32.totalorder %s20, 0
    %p129 = por %p127, %p128
    %p130 = scmp.ne.s32.totalorder %s122, %s124
    %p131 = scmp.eq.s32.totalorder %s25, 1
    %p132 = por %p130, %p131
    %p133 = scmp.ne.s32.totalorder %s124, %s125
    %p134 = scmp.eq.s32.totalorder %s25, 0
    %p135 = por %p133, %p134
    %p136 = scmp.ne.s32.totalorder %s124, %s125
    %p137 = scmp.eq.s32.totalorder %s26, 1
    %p138 = por %p136, %p137
    %p140 = scmp.ne.s32.totalorder %s125, %s139
    %p141 = scmp.eq.s32.totalorder %s26, 0
    %p142 = por %p140, %p141
    %s144 = sadd.s32 %s143, 1
    %p147 = scmp.eq.s32.totalorder %s20, 1
    %p148 = scmp.ne.s32.totalorder %s143, %s145
    %p149 = scmp.eq.s32.totalorder %s20, 0
    %p150 = por %p148, %p149
    %p151 = scmp.ne.s32.totalorder %s143, %s145
    %p152 = scmp.eq.s32.totalorder %s25, 1
    %p153 = por %p151, %p152
    %p154 = scmp.ne.s32.totalorder %s145, %s146
    %p155 = scmp.eq.s32.totalorder %s25, 0
    %p156 = por %p154, %p155
    %p157 = scmp.ne.s32.totalorder %s145, %s146
    %p158 = scmp.eq.s32.totalorder %s26, 1
    %p159 = por %p157, %p158
    %p161 = scmp.ne.s32.totalorder %s146, %s160
    %p162 = scmp.eq.s32.totalorder %s26, 0
    %p163 = por %p161, %p162
    %s165 = sadd.s32 %s164, 1
    %p168 = scmp.eq.s32.totalorder %s20, 1
    %p169 = scmp.ne.s32.totalorder %s164, %s166
    %p170 = scmp.eq.s32.totalorder %s20, 0
    %p171 = por %p169, %p170
    %p172 = scmp.ne.s32.totalorder %s164, %s166
    %p173 = scmp.eq.s32.totalorder %s25, 1
    %p174 = por %p172, %p173
    %p175 = scmp.ne.s32.totalorder %s166, %s167
    %p176 = scmp.eq.s32.totalorder %s25, 0
    %p177 = por %p175, %p176
    %p178 = scmp.ne.s32.totalorder %s166, %s167
    %p179 = scmp.eq.s32.totalorder %s26, 1
    %p180 = por %p178, %p179
    %p182 = scmp.ne.s32.totalorder %s167, %s181
    %p183 = scmp.eq.s32.totalorder %s26, 0
    %p184 = por %p182, %p183
    %s186 = sadd.s32 %s185, 1
    %p189 = scmp.eq.s32.totalorder %s20, 1
    %p190 = scmp.ne.s32.totalorder %s185, %s187
    %p191 = scmp.eq.s32.totalorder %s20, 0
    %p192 = por %p190, %p191
    %p193 = scmp.ne.s32.totalorder %s185, %s187
    %p194 = scmp.eq.s32.totalorder %s25, 1
    %p195 = por %p193, %p194
    %p196 = scmp.ne.s32.totalorder %s187, %s188
    %p197 = scmp.eq.s32.totalorder %s25, 0
    %p198 = por %p196, %p197
    %p199 = scmp.ne.s32.totalorder %s187, %s188
    %p200 = scmp.eq.s32.totalorder %s26, 1
    %p201 = por %p199, %p200
    %p203 = scmp.ne.s32.totalorder %s188, %s202
    %p204 = scmp.eq.s32.totalorder %s26, 0
    %p205 = por %p203, %p204
    %s207 = sadd.s32 %s206, 1
    %p210 = scmp.eq.s32.totalorder %s20, 1
    %p211 = scmp.ne.s32.totalorder %s206, %s208
    %p212 = scmp.eq.s32.totalorder %s20, 0
    %p213 = por %p211, %p212
    %p214 = scmp.ne.s32.totalorder %s206, %s208
    %p215 = scmp.eq.s32.totalorder %s25, 1
    %p216 = por %p214, %p215
    %p217 = scmp.ne.s32.totalorder %s208, %s209
    %p218 = scmp.eq.s32.totalorder %s25, 0
    %p219 = por %p217, %p218
    %p220 = scmp.ne.s32.totalorder %s208, %s209
    %p221 = scmp.eq.s32.totalorder %s26, 1
    %p222 = por %p220, %p221
    %p224 = scmp.ne.s32.totalorder %s209, %s223
    %p225 = scmp.eq.s32.totalorder %s26, 0
    %p226 = por %p224, %p225
    %s228 = sadd.s32 %s227, 1
    %p231 = scmp.eq.s32.totalorder %s20, 1
    %p232 = scmp.ne.s32.totalorder %s227, %s229
    %p233 = scmp.eq.s32.totalorder %s20, 0
    %p234 = por %p232, %p233
    %p235 = scmp.ne.s32.totalorder %s227, %s229
    %p236 = scmp.eq.s32.totalorder %s25, 1
    %p237 = por %p235, %p236
    %p238 = scmp.ne.s32.totalorder %s229, %s230
    %p239 = scmp.eq.s32.totalorder %s25, 0
    %p240 = por %p238, %p239
    %p241 = scmp.ne.s32.totalorder %s229, %s230
    %p242 = scmp.eq.s32.totalorder %s26, 1
    %p243 = por %p241, %p242
    %p245 = scmp.ne.s32.totalorder %s230, %s244
    %p246 = scmp.eq.s32.totalorder %s26, 0
    %p247 = por %p245, %p246
    %s249 = sadd.s32 %s248, 1
    %p252 = scmp.eq.s32.totalorder %s20, 1
    %p253 = scmp.ne.s32.totalorder %s248, %s250
    %p254 = scmp.eq.s32.totalorder %s20, 0
    %p255 = por %p253, %p254
    %p256 = scmp.ne.s32.totalorder %s248, %s250
    %p257 = scmp.eq.s32.totalorder %s25, 1
    %p258 = por %p256, %p257
    %p259 = scmp.ne.s32.totalorder %s250, %s251
    %p260 = scmp.eq.s32.totalorder %s25, 0
    %p261 = por %p259, %p260
    %p262 = scmp.ne.s32.totalorder %s250, %s251
    %p263 = scmp.eq.s32.totalorder %s26, 1
    %p264 = por %p262, %p263
    %p266 = scmp.ne.s32.totalorder %s251, %s265
    %p267 = scmp.eq.s32.totalorder %s26, 0
    %p268 = por %p266, %p267
    %s269 = ssub.s32 %s20, %s27
    %p270 = scmp.eq.s32.totalorder %s269, 0
    %s272 = sadd.s32 %s271, 1
    %s273 = scalar_select %p270, %s271, %s272
    %p276 = pneg %p270
    %p277 = scmp.eq.s32.totalorder %s20, 1
    %p278 = por %p276, %p277
    %p279 = scmp.ne.s32.totalorder %s271, %s274
    %p280 = scmp.eq.s32.totalorder %s20, 0
    %p281 = por %p279, %p280
    %p282 = scmp.ne.s32.totalorder %s271, %s274
    %p283 = scmp.eq.s32.totalorder %s25, 1
    %p284 = por %p282, %p283
    %p285 = scmp.ne.s32.totalorder %s274, %s275
    %p286 = scmp.eq.s32.totalorder %s25, 0
    %p287 = por %p285, %p286
    %p288 = scmp.ne.s32.totalorder %s274, %s275
    %p289 = scmp.eq.s32.totalorder %s26, 1
    %p290 = por %p288, %p289
    %p292 = scmp.ne.s32.totalorder %s275, %s291
    %p293 = scmp.eq.s32.totalorder %s26, 0
    %p294 = por %p292, %p293
    %s295 = ssub.s32 %s20, %s27
    %p296 = scmp.eq.s32.totalorder %s295, 0
    %s298 = sadd.s32 %s297, 1
    %s299 = scalar_select %p296, %s297, %s298
    %p302 = pneg %p296
    %p303 = scmp.eq.s32.totalorder %s20, 1
    %p304 = por %p302, %p303
    %p305 = scmp.ne.s32.totalorder %s297, %s300
    %p306 = scmp.eq.s32.totalorder %s20, 0
    %p307 = por %p305, %p306
    %p308 = scmp.ne.s32.totalorder %s297, %s300
    %p309 = scmp.eq.s32.totalorder %s25, 1
    %p310 = por %p308, %p309
    %p311 = scmp.ne.s32.totalorder %s300, %s301
    %p312 = scmp.eq.s32.totalorder %s25, 0
    %p313 = por %p311, %p312
    %p314 = scmp.ne.s32.totalorder %s300, %s301
    %p315 = scmp.eq.s32.totalorder %s26, 1
    %p316 = por %p314, %p315
    %p318 = scmp.ne.s32.totalorder %s301, %s317
    %p319 = scmp.eq.s32.totalorder %s26, 0
    %p320 = por %p318, %p319
    %s321 = ssub.s32 %s20, %s27
    %p322 = scmp.eq.s32.totalorder %s321, 0
    %s324 = sadd.s32 %s323, 1
    %s325 = scalar_select %p322, %s323, %s324
    %p328 = pneg %p322
    %p329 = scmp.eq.s32.totalorder %s20, 1
    %p330 = por %p328, %p329
    %p331 = scmp.ne.s32.totalorder %s323, %s326
    %p332 = scmp.eq.s32.totalorder %s20, 0
    %p333 = por %p331, %p332
    %p334 = scmp.ne.s32.totalorder %s323, %s326
    %p335 = scmp.eq.s32.totalorder %s25, 1
    %p336 = por %p334, %p335
    %p337 = scmp.ne.s32.totalorder %s326, %s327
    %p338 = scmp.eq.s32.totalorder %s25, 0
    %p339 = por %p337, %p338
    %p340 = scmp.ne.s32.totalorder %s326, %s327
    %p341 = scmp.eq.s32.totalorder %s26, 1
    %p342 = por %p340, %p341
    %p344 = scmp.ne.s32.totalorder %s327, %s343
    %p345 = scmp.eq.s32.totalorder %s26, 0
    %p346 = por %p344, %p345
    %p347 = scmp.le.s32.totalorder 1, %s20
    %p348 = scmp.lt.s32.totalorder %s20, 3
    %p349 = pnand %p347, %p348
    %p350 = pneg %p349
    // Predicated region
    $region9: #{style_attention_block_forward.1} parent=5 // pred_check
      _
    $region10: #{style_attention_block_forward.1} parent=5 // pred_check_branch
      %352 = sbr.rel (%p349) target = $region12
    $region11: #{style_attention_block_forward.1} parent=5 // pred_region
      %s353 = ssub.s32 %s20, 1
      // Predicated region
      $region13: #{style_attention_block_forward.1} parent=11 // pred_check
        %p354 = pneg %p41
      $region14: #{style_attention_block_forward.1} parent=11 // pred_check_branch
        %356 = sbr.rel (%p354) target = $region16
      $region15: #{style_attention_block_forward.1} parent=11 // pred_region
        _
      $region16: #{style_attention_block_forward.1} parent=11 // pred_fallthru
        _
      // Predicated region
      $region17: #{style_attention_block_forward.1} parent=11 // pred_check
        %p357 = pneg %p114
      $region18: #{style_attention_block_forward.1} parent=11 // pred_check_branch
        %359 = sbr.rel (%p357) target = $region20
      $region19: #{style_attention_block_forward.1} parent=11 // pred_region
        _
      $region20: #{style_attention_block_forward.1} parent=11 // pred_fallthru
        _
      // Predicated region
      $region21: #{style_attention_block_forward.1} parent=11 // pred_check
        %p360 = pneg %p135
      $region22: #{style_attention_block_forward.1} parent=11 // pred_check_branch
        %362 = sbr.rel (%p360) target = $region24
      $region23: #{style_attention_block_forward.1} parent=11 // pred_region
        _
      $region24: #{style_attention_block_forward.1} parent=11 // pred_fallthru
        _
      // Predicated region
      $region25: #{style_attention_block_forward.1} parent=11 // pred_check
        %p363 = pneg %p156
      $region26: #{style_attention_block_forward.1} parent=11 // pred_check_branch
        %365 = sbr.rel (%p363) target = $region28
      $region27: #{style_attention_block_forward.1} parent=11 // pred_region
        _
      $region28: #{style_attention_block_forward.1} parent=11 // pred_fallthru
        _
      // Predicated region
      $region29: #{style_attention_block_forward.1} parent=11 // pred_check
        %p366 = pneg %p177
      $region30: #{style_attention_block_forward.1} parent=11 // pred_check_branch
        %368 = sbr.rel (%p366) target = $region32
      $region31: #{style_attention_block_forward.1} parent=11 // pred_region
        _
      $region32: #{style_attention_block_forward.1} parent=11 // pred_fallthru
        _
      // Predicated region
      $region33: #{style_attention_block_forward.1} parent=11 // pred_check
        %p369 = pneg %p198
      $region34: #{style_attention_block_forward.1} parent=11 // pred_check_branch
        %371 = sbr.rel (%p369) target = $region36
      $region35: #{style_attention_block_forward.1} parent=11 // pred_region
        _
      $region36: #{style_attention_block_forward.1} parent=11 // pred_fallthru
        _
      // Predicated region
      $region37: #{style_attention_block_forward.1} parent=11 // pred_check
        %p372 = pneg %p219
      $region38: #{style_attention_block_forward.1} parent=11 // pred_check_branch
        %374 = sbr.rel (%p372) target = $region40
      $region39: #{style_attention_block_forward.1} parent=11 // pred_region
        _
      $region40: #{style_attention_block_forward.1} parent=11 // pred_fallthru
        _
      // Predicated region
      $region41: #{style_attention_block_forward.1} parent=11 // pred_check
        %p375 = pneg %p240
      $region42: #{style_attention_block_forward.1} parent=11 // pred_check_branch
        %377 = sbr.rel (%p375) target = $region44
      $region43: #{style_attention_block_forward.1} parent=11 // pred_region
        _
      $region44: #{style_attention_block_forward.1} parent=11 // pred_fallthru
        _
      // Predicated region
      $region45: #{style_attention_block_forward.1} parent=11 // pred_check
        %p378 = pneg %p261
      $region46: #{style_attention_block_forward.1} parent=11 // pred_check_branch
        %380 = sbr.rel (%p378) target = $region48
      $region47: #{style_attention_block_forward.1} parent=11 // pred_region
        _
      $region48: #{style_attention_block_forward.1} parent=11 // pred_fallthru
        _
    $region12: #{style_attention_block_forward.1} parent=5 // pred_fallthru
      _
    %p381 = scmp.lt.s32.totalorder %s20, 2
    // Predicated region
    $region49: #{style_attention_block_forward.1} parent=5 // pred_check
      %p382 = pneg %p381
    $region50: #{style_attention_block_forward.1} parent=5 // pred_check_branch
      %384 = sbr.rel (%p382) target = $region52
    $region51: #{style_attention_block_forward.1} parent=5 // pred_region
      // Predicated region
      $region53: #{style_attention_block_forward.1} parent=51 // pred_check
        %p385 = pneg %p61
      $region54: #{style_attention_block_forward.1} parent=51 // pred_check_branch
        %387 = sbr.rel (%p385) target = $region56
      $region55: #{style_attention_block_forward.1} parent=51 // pred_region
        %p388 = scmp.lt.s32.totalorder %s20, 1
        %s389 = scalar_select %p388, %s20, 1
        %s390 = smul.addr %s389, 2
        %s391 = smul.addr %s390, 4
        %s392 = scalar_lea.vmem %s1, %s391
      $region56: #{style_attention_block_forward.1} parent=51 // pred_fallthru
        _
      // Predicated region
      $region57: #{style_attention_block_forward.1} parent=51 // pred_check
        %p393 = pneg %p87
      $region58: #{style_attention_block_forward.1} parent=51 // pred_check_branch
        %395 = sbr.rel (%p393) target = $region60
      $region59: #{style_attention_block_forward.1} parent=51 // pred_region
        %p396 = scmp.lt.s32.totalorder %s20, 1
        %s397 = scalar_select %p396, %s20, 1
        %s398 = smul.addr %s397, 2
        %s399 = smul.addr %s398, 4
        %s400 = scalar_lea.vmem %s2, %s399
      $region60: #{style_attention_block_forward.1} parent=51 // pred_fallthru
        _
    $region52: #{style_attention_block_forward.1} parent=5 // pred_fallthru
      _
    %p401 = scmp.le.s32.totalorder 1, %s20
    %p402 = scmp.lt.s32.totalorder %s20, 3
    %p403 = pnand %p401, %p402
    %p404 = pneg %p403
    // Predicated region
    $region61: #{style_attention_block_forward.1} parent=5 // pred_check
      _
    $region62: #{style_attention_block_forward.1} parent=5 // pred_check_branch
      %406 = sbr.rel (%p403) target = $region64
    $region63: #{style_attention_block_forward.1} parent=5 // pred_region
      %s407 = ssub.s32 %s20, 1
      %p408 = pneg %p41
      %p409 = pneg %p38
      %p410 = scmp.lt.s32.totalorder %s25, 1
      %s411 = scalar_select %p410, %s25, 1
      %s412 = smul.addr %s411, 2
      %s413 = smul.addr %s412, 4
      %s414 = scalar_lea.vmem %s1, %s413
      %p415 = pneg %p67
      %p416 = pneg %p64
      %p417 = scmp.lt.s32.totalorder %s25, 1
      %s418 = scalar_select %p417, %s25, 1
      %s419 = smul.addr %s418, 2
      %s420 = smul.addr %s419, 4
      %s421 = scalar_lea.vmem %s2, %s420
      %p422 = pneg %p93
      %p423 = pneg %p90
      %p424 = pneg %p114
      %p425 = pneg %p111
      %p426 = pneg %p135
      %p427 = pneg %p132
      %p428 = pneg %p156
      %p429 = pneg %p153
      %p430 = pneg %p177
      %p431 = pneg %p174
      %p432 = pneg %p198
      %p433 = pneg %p195
      %p434 = pneg %p219
      %p435 = pneg %p216
      %p436 = pneg %p240
      %p437 = pneg %p237
      %p438 = pneg %p261
      %p439 = pneg %p258
      %p440 = pneg %p287
      %p441 = pneg %p284
      %p442 = scmp.lt.s32.totalorder %s25, 1
      %s443 = scalar_select %p442, %s25, 1
      %s444 = smul.addr %s443, 2
      %s445 = smul.addr %s444, 4
      %s446 = scalar_lea.vmem %s11, %s445
      %p447 = pneg %p313
      %p448 = pneg %p310
      %p449 = scmp.lt.s32.totalorder %s25, 1
      %s450 = scalar_select %p449, %s25, 1
      %s451 = smul.addr %s450, 2
      %s452 = smul.addr %s451, 4
      %s453 = scalar_lea.vmem %s12, %s452
      %p454 = pneg %p339
      %p455 = pneg %p336
      %p456 = scmp.lt.s32.totalorder %s25, 1
      %s457 = scalar_select %p456, %s25, 1
      %s458 = smul.addr %s457, 2
      %s459 = smul.addr %s458, 4
      %s460 = scalar_lea.vmem %s13, %s459
      %p461 = scmp.lt.s32.totalorder %s25, 1
      %s462 = scalar_select %p461, %s25, 1
      %s463 = smul.addr %s462, 2
      %s464 = smul.addr %s463, 4
      %s465 = scalar_lea.vmem %s1, %s464
      %p466 = scmp.lt.s32.totalorder %s25, 1
      %s467 = scalar_select %p466, %s25, 1
      %s468 = smul.addr %s467, 2
      %s469 = smul.addr %s468, 4
      %s470 = scalar_lea.vmem %s2, %s469
      %p471 = scmp.lt.s32.totalorder %s25, 1
      %s472 = scalar_select %p471, %s25, 1
      %s473 = smul.addr %s472, 2
      %s474 = smul.addr %s473, 4
      %s475 = scalar_lea.vmem %s11, %s474
      %p476 = scmp.lt.s32.totalorder %s25, 1
      %s477 = scalar_select %p476, %s25, 1
      %s478 = smul.addr %s477, 2
      %s479 = smul.addr %s478, 4
      %s480 = scalar_lea.vmem %s12, %s479
      %p481 = scmp.lt.s32.totalorder %s25, 1
      %s482 = scalar_select %p481, %s25, 1
      %s483 = smul.addr %s482, 2
      %s484 = smul.addr %s483, 4
      %s485 = scalar_lea.vmem %s13, %s484
      %v486 = vld [vmem:[%s0] sm:$0xff]
      %v487 = vld [vmem:[%s0 + $0x8] sm:$0xff]
      %v488 = vld [vmem:[%s0 + $0x10] sm:$0x1]
      %v489 = vld [vmem:[%s0 + $0x18] sm:$0x1]
      %v490 = vld [vmem:[%s465] sm:$0xff]
      %v491 = vld [vmem:[%s470] sm:$0xff]
      %v493 = vcombine.high %v491, %v491
      %495 = vrot.lane.b32.xlu0 %v491, 17
      %v496 = vpop.permute.xlu0 %495
      %497 = vrot.lane.b32.xlu0 %v493, 17
      %v498 = vpop.permute.xlu0 %497
      %v499 = vlaneseq
      %v500 = vand.u32 %v499, 127
      %vm501 = vcmp.lt.s32.totalorder %v500, 17
      %v502 = vsel %vm501, %v496, %v498
      %v503 = vsel %vm501, %v498, %v496
      %v504 = vlaneseq
      %v505 = vshrl.u32 %v504, 7
      %v506 = vsub.s32 0, %v505
      %v507 = vrot.slane %v486, %v506
      %v508 = vlaneseq
      %v509 = vshrl.u32 %v508, 7
      %v510 = vsub.s32 0, %v509
      %v511 = vrot.slane %v487, %v510
      %v512 = vmul.f32 %v503, %v507
      %v513 = vmul.f32 %v502, %v511
      %v514 = vld [vmem:[%s7] sm:$0xf]
      %516 = vset.pattern.permute.xlu0 0
      %517 = vperm.xlu0 %516, %v514
      %v518 = vpop.permute.xlu0 %517
      %v520 = vlaneseq
      %v521 = vshrl.u32 %v520, 7
      %v522 = vsub.s32 0, %v521
      %v523 = vrot.slane %v512, %v522
      %v524 = vlaneseq
      %v525 = vshrl.u32 %v524, 7
      %v526 = vsub.s32 0, %v525
      %v527 = vrot.slane %v513, %v526
      %v528 = vmul.f32 %v518, %v523
      %v529 = vmul.f32 %v518, %v527
      %v530 = vadd.f32 %v528, 0.0
      %v531 = vadd.f32 %v529, 0.0
      %532 = vset.pattern.permute.xlu0 1
      %533 = vperm.xlu0 %532, %v514
      %v534 = vpop.permute.xlu0 %533
      %v536 = vlaneseq
      %v537 = vshrl.u32 %v536, 7
      %v538 = vsub.s32 1, %v537
      %v539 = vrot.slane %v512, %v538
      %v540 = vlaneseq
      %v541 = vshrl.u32 %v540, 7
      %v542 = vsub.s32 1, %v541
      %v543 = vrot.slane %v513, %v542
      %v544 = vmul.f32 %v534, %v539
      %v545 = vmul.f32 %v534, %v543
      %v546 = vadd.f32 %v530, %v544
      %v547 = vadd.f32 %v531, %v545
      %548 = vset.pattern.permute.xlu0 2
      %549 = vperm.xlu0 %548, %v514
      %v550 = vpop.permute.xlu0 %549
      %v552 = vlaneseq
      %v553 = vshrl.u32 %v552, 7
      %v554 = vsub.s32 2, %v553
      %v555 = vrot.slane %v512, %v554
      %v556 = vlaneseq
      %v557 = vshrl.u32 %v556, 7
      %v558 = vsub.s32 2, %v557
      %v559 = vrot.slane %v513, %v558
      %v560 = vmul.f32 %v550, %v555
      %v561 = vmul.f32 %v550, %v559
      %v562 = vadd.f32 %v546, %v560
      %v563 = vadd.f32 %v547, %v561
      %564 = vset.pattern.permute.xlu0 3
      %565 = vperm.xlu0 %564, %v514
      %v566 = vpop.permute.xlu0 %565
      %v568 = vlaneseq
      %v569 = vshrl.u32 %v568, 7
      %v570 = vsub.s32 3, %v569
      %v571 = vrot.slane %v512, %v570
      %v572 = vlaneseq
      %v573 = vshrl.u32 %v572, 7
      %v574 = vsub.s32 3, %v573
      %v575 = vrot.slane %v513, %v574
      %v576 = vmul.f32 %v566, %v571
      %v577 = vmul.f32 %v566, %v575
      %v578 = vadd.f32 %v562, %v576
      %v579 = vadd.f32 %v563, %v577
      %580 = vrot.lane.b32.xlu0 %v491, 16
      %v581 = vpop.permute.xlu0 %580
      %582 = vrot.lane.b32.xlu0 %v493, 16
      %v583 = vpop.permute.xlu0 %582
      %vm584 = vcmp.lt.s32.totalorder %v500, 16
      %v585 = vsel %vm584, %v581, %v583
      %v586 = vsel %vm584, %v583, %v581
      %v587 = vlaneseq
      %v588 = vshrl.u32 %v587, 7
      %v589 = vsub.s32 1, %v588
      %v590 = vrot.slane %v486, %v589
      %v591 = vlaneseq
      %v592 = vshrl.u32 %v591, 7
      %v593 = vsub.s32 1, %v592
      %v594 = vrot.slane %v487, %v593
      %v595 = vmul.f32 %v586, %v590
      %v596 = vmul.f32 %v585, %v594
      %v597 = vld [vmem:[%s7] sm:$0xf]
      %599 = vset.pattern.permute.xlu0 4
      %600 = vperm.xlu0 %599, %v597
      %v601 = vpop.permute.xlu0 %600
      %v603 = vlaneseq
      %v604 = vshrl.u32 %v603, 7
      %v605 = vsub.s32 0, %v604
      %v606 = vrot.slane %v595, %v605
      %v607 = vlaneseq
      %v608 = vshrl.u32 %v607, 7
      %v609 = vsub.s32 0, %v608
      %v610 = vrot.slane %v596, %v609
      %v611 = vmul.f32 %v601, %v606
      %v612 = vmul.f32 %v601, %v610
      %v613 = vadd.f32 %v578, %v611
      %v614 = vadd.f32 %v579, %v612
      %615 = vset.pattern.permute.xlu0 5
      %616 = vperm.xlu0 %615, %v597
      %v617 = vpop.permute.xlu0 %616
      %v619 = vlaneseq
      %v620 = vshrl.u32 %v619, 7
      %v621 = vsub.s32 1, %v620
      %v622 = vrot.slane %v595, %v621
      %v623 = vlaneseq
      %v624 = vshrl.u32 %v623, 7
      %v625 = vsub.s32 1, %v624
      %v626 = vrot.slane %v596, %v625
      %v627 = vmul.f32 %v617, %v622
      %v628 = vmul.f32 %v617, %v626
      %v629 = vadd.f32 %v613, %v627
      %v630 = vadd.f32 %v614, %v628
      %631 = vset.pattern.permute.xlu0 6
      %632 = vperm.xlu0 %631, %v597
      %v633 = vpop.permute.xlu0 %632
      %v635 = vlaneseq
      %v636 = vshrl.u32 %v635, 7
      %v637 = vsub.s32 2, %v636
      %v638 = vrot.slane %v595, %v637
      %v639 = vlaneseq
      %v640 = vshrl.u32 %v639, 7
      %v641 = vsub.s32 2, %v640
      %v642 = vrot.slane %v596, %v641
      %v643 = vmul.f32 %v633, %v638
      %v644 = vmul.f32 %v633, %v642
      %v645 = vadd.f32 %v629, %v643
      %v646 = vadd.f32 %v630, %v644
      %647 = vset.pattern.permute.xlu0 7
      %648 = vperm.xlu0 %647, %v597
      %v649 = vpop.permute.xlu0 %648
      %v651 = vlaneseq
      %v652 = vshrl.u32 %v651, 7
      %v653 = vsub.s32 3, %v652
      %v654 = vrot.slane %v595, %v653
      %v655 = vlaneseq
      %v656 = vshrl.u32 %v655, 7
      %v657 = vsub.s32 3, %v656
      %v658 = vrot.slane %v596, %v657
      %v659 = vmul.f32 %v649, %v654
      %v660 = vmul.f32 %v649, %v658
      %v661 = vadd.f32 %v645, %v659
      %v662 = vadd.f32 %v646, %v660
      %663 = vrot.lane.b32.xlu0 %v491, 15
      %v664 = vpop.permute.xlu0 %663
      %665 = vrot.lane.b32.xlu0 %v493, 15
      %v666 = vpop.permute.xlu0 %665
      %vm667 = vcmp.lt.s32.totalorder %v500, 15
      %v668 = vsel %vm667, %v664, %v666
      %v669 = vsel %vm667, %v666, %v664
      %v670 = vlaneseq
      %v671 = vshrl.u32 %v670, 7
      %v672 = vsub.s32 2, %v671
      %v673 = vrot.slane %v486, %v672
      %v674 = vlaneseq
      %v675 = vshrl.u32 %v674, 7
      %v676 = vsub.s32 2, %v675
      %v677 = vrot.slane %v487, %v676
      %v678 = vmul.f32 %v669, %v673
      %v679 = vmul.f32 %v668, %v677
      %v680 = vld [vmem:[%s7] sm:$0xf]
      %682 = vset.pattern.permute.xlu0 8
      %683 = vperm.xlu0 %682, %v680
      %v684 = vpop.permute.xlu0 %683
      %v686 = vlaneseq
      %v687 = vshrl.u32 %v686, 7
      %v688 = vsub.s32 0, %v687
      %v689 = vrot.slane %v678, %v688
      %v690 = vlaneseq
      %v691 = vshrl.u32 %v690, 7
      %v692 = vsub.s32 0, %v691
      %v693 = vrot.slane %v679, %v692
      %v694 = vmul.f32 %v684, %v689
      %v695 = vmul.f32 %v684, %v693
      %v696 = vadd.f32 %v661, %v694
      %v697 = vadd.f32 %v662, %v695
      %698 = vset.pattern.permute.xlu0 9
      %699 = vperm.xlu0 %698, %v680
      %v700 = vpop.permute.xlu0 %699
      %v702 = vlaneseq
      %v703 = vshrl.u32 %v702, 7
      %v704 = vsub.s32 1, %v703
      %v705 = vrot.slane %v678, %v704
      %v706 = vlaneseq
      %v707 = vshrl.u32 %v706, 7
      %v708 = vsub.s32 1, %v707
      %v709 = vrot.slane %v679, %v708
      %v710 = vmul.f32 %v700, %v705
      %v711 = vmul.f32 %v700, %v709
      %v712 = vadd.f32 %v696, %v710
      %v713 = vadd.f32 %v697, %v711
      %714 = vset.pattern.permute.xlu0 10
      %715 = vperm.xlu0 %714, %v680
      %v716 = vpop.permute.xlu0 %715
      %v718 = vlaneseq
      %v719 = vshrl.u32 %v718, 7
      %v720 = vsub.s32 2, %v719
      %v721 = vrot.slane %v678, %v720
      %v722 = vlaneseq
      %v723 = vshrl.u32 %v722, 7
      %v724 = vsub.s32 2, %v723
      %v725 = vrot.slane %v679, %v724
      %v726 = vmul.f32 %v716, %v721
      %v727 = vmul.f32 %v716, %v725
      %v728 = vadd.f32 %v712, %v726
      %v729 = vadd.f32 %v713, %v727
      %730 = vset.pattern.permute.xlu0 11
      %731 = vperm.xlu0 %730, %v680
      %v732 = vpop.permute.xlu0 %731
      %v734 = vlaneseq
      %v735 = vshrl.u32 %v734, 7
      %v736 = vsub.s32 3, %v735
      %v737 = vrot.slane %v678, %v736
      %v738 = vlaneseq
      %v739 = vshrl.u32 %v738, 7
      %v740 = vsub.s32 3, %v739
      %v741 = vrot.slane %v679, %v740
      %v742 = vmul.f32 %v732, %v737
      %v743 = vmul.f32 %v732, %v741
      %v744 = vadd.f32 %v728, %v742
      %v745 = vadd.f32 %v729, %v743
      %746 = vrot.lane.b32.xlu0 %v491, 1
      %v747 = vpop.permute.xlu0 %746
      %748 = vrot.lane.b32.xlu0 %v493, 1
      %v749 = vpop.permute.xlu0 %748
      %vm750 = vcmp.lt.s32.totalorder %v500, 1
      %v751 = vsel %vm750, %v747, %v749
      %v752 = vsel %vm750, %v749, %v747
      %v753 = vlaneseq
      %v754 = vshrl.u32 %v753, 7
      %v755 = vsub.s32 3, %v754
      %v756 = vrot.slane %v486, %v755
      %v757 = vlaneseq
      %v758 = vshrl.u32 %v757, 7
      %v759 = vsub.s32 3, %v758
      %v760 = vrot.slane %v487, %v759
      %v761 = vmul.f32 %v752, %v756
      %v762 = vmul.f32 %v751, %v760
      %v763 = vld [vmem:[%s7] sm:$0xf]
      %765 = vset.pattern.permute.xlu0 12
      %766 = vperm.xlu0 %765, %v763
      %v767 = vpop.permute.xlu0 %766
      %v769 = vlaneseq
      %v770 = vshrl.u32 %v769, 7
      %v771 = vsub.s32 0, %v770
      %v772 = vrot.slane %v761, %v771
      %v773 = vlaneseq
      %v774 = vshrl.u32 %v773, 7
      %v775 = vsub.s32 0, %v774
      %v776 = vrot.slane %v762, %v775
      %v777 = vmul.f32 %v767, %v772
      %v778 = vmul.f32 %v767, %v776
      %v779 = vadd.f32 %v744, %v777
      %v780 = vadd.f32 %v745, %v778
      %781 = vset.pattern.permute.xlu0 13
      %782 = vperm.xlu0 %781, %v763
      %v783 = vpop.permute.xlu0 %782
      %v785 = vlaneseq
      %v786 = vshrl.u32 %v785, 7
      %v787 = vsub.s32 1, %v786
      %v788 = vrot.slane %v761, %v787
      %v789 = vlaneseq
      %v790 = vshrl.u32 %v789, 7
      %v791 = vsub.s32 1, %v790
      %v792 = vrot.slane %v762, %v791
      %v793 = vmul.f32 %v783, %v788
      %v794 = vmul.f32 %v783, %v792
      %v795 = vadd.f32 %v779, %v793
      %v796 = vadd.f32 %v780, %v794
      %797 = vset.pattern.permute.xlu0 14
      %798 = vperm.xlu0 %797, %v763
      %v799 = vpop.permute.xlu0 %798
      %v801 = vlaneseq
      %v802 = vshrl.u32 %v801, 7
      %v803 = vsub.s32 2, %v802
      %v804 = vrot.slane %v761, %v803
      %v805 = vlaneseq
      %v806 = vshrl.u32 %v805, 7
      %v807 = vsub.s32 2, %v806
      %v808 = vrot.slane %v762, %v807
      %v809 = vmul.f32 %v799, %v804
      %v810 = vmul.f32 %v799, %v808
      %v811 = vadd.f32 %v795, %v809
      %v812 = vadd.f32 %v796, %v810
      %813 = vset.pattern.permute.xlu0 15
      %814 = vperm.xlu0 %813, %v763
      %v815 = vpop.permute.xlu0 %814
      %v817 = vlaneseq
      %v818 = vshrl.u32 %v817, 7
      %v819 = vsub.s32 3, %v818
      %v820 = vrot.slane %v761, %v819
      %v821 = vlaneseq
      %v822 = vshrl.u32 %v821, 7
      %v823 = vsub.s32 3, %v822
      %v824 = vrot.slane %v762, %v823
      %v825 = vmul.f32 %v815, %v820
      %v826 = vmul.f32 %v815, %v824
      %v827 = vadd.f32 %v811, %v825
      %v828 = vadd.f32 %v812, %v826
      %v829 = vlaneseq
      %v830 = vshrl.u32 %v829, 7
      %v831 = vsub.s32 4, %v830
      %v832 = vrot.slane %v486, %v831
      %v833 = vlaneseq
      %v834 = vshrl.u32 %v833, 7
      %v835 = vsub.s32 4, %v834
      %v836 = vrot.slane %v487, %v835
      %v839 = vcombine.low %v832, %v836
      %v841 = vmul.f32 %v491, %v839
      %v842 = vld [vmem:[%s7] sm:$0xf]
      %844 = vset.pattern.permute.xlu0 16
      %845 = vperm.xlu0 %844, %v842
      %v846 = vpop.permute.xlu0 %845
      %v849 = vlaneseq
      %v850 = vshrl.u32 %v849, 7
      %v851 = vsub.s32 0, %v850
      %v852 = vrot.slane %v841, %v851
      %v853 = vlaneseq
      %v854 = vshrl.u32 %v853, 7
      %v855 = vsub.s32 4, %v854
      %v856 = vrot.slane %v841, %v855
      %v859 = vlaneseq
      %v860 = vshrl.u32 %v859, 7
      %v861 = vsub.s32 0, %v860
      %v862 = vrot.slane %v852, %v861
      %v863 = vlaneseq
      %v864 = vshrl.u32 %v863, 7
      %v865 = vsub.s32 0, %v864
      %v866 = vrot.slane %v856, %v865
      %v867 = vmul.f32 %v846, %v862
      %v868 = vmul.f32 %v846, %v866
      %v869 = vadd.f32 %v827, %v867
      %v870 = vadd.f32 %v828, %v868
      %871 = vset.pattern.permute.xlu0 17
      %872 = vperm.xlu0 %871, %v842
      %v873 = vpop.permute.xlu0 %872
      %v875 = vlaneseq
      %v876 = vshrl.u32 %v875, 7
      %v877 = vsub.s32 1, %v876
      %v878 = vrot.slane %v841, %v877
      %v879 = vlaneseq
      %v880 = vshrl.u32 %v879, 7
      %v881 = vsub.s32 5, %v880
      %v882 = vrot.slane %v841, %v881
      %v885 = vlaneseq
      %v886 = vshrl.u32 %v885, 7
      %v887 = vsub.s32 1, %v886
      %v888 = vrot.slane %v878, %v887
      %v889 = vlaneseq
      %v890 = vshrl.u32 %v889, 7
      %v891 = vsub.s32 1, %v890
      %v892 = vrot.slane %v882, %v891
      %v893 = vmul.f32 %v873, %v888
      %v894 = vmul.f32 %v873, %v892
      %v895 = vadd.f32 %v869, %v893
      %v896 = vadd.f32 %v870, %v894
      %897 = vset.pattern.permute.xlu0 18
      %898 = vperm.xlu0 %897, %v842
      %v899 = vpop.permute.xlu0 %898
      %v901 = vlaneseq
      %v902 = vshrl.u32 %v901, 7
      %v903 = vsub.s32 2, %v902
      %v904 = vrot.slane %v841, %v903
      %v905 = vlaneseq
      %v906 = vshrl.u32 %v905, 7
      %v907 = vsub.s32 6, %v906
      %v908 = vrot.slane %v841, %v907
      %v911 = vlaneseq
      %v912 = vshrl.u32 %v911, 7
      %v913 = vsub.s32 2, %v912
      %v914 = vrot.slane %v904, %v913
      %v915 = vlaneseq
      %v916 = vshrl.u32 %v915, 7
      %v917 = vsub.s32 2, %v916
      %v918 = vrot.slane %v908, %v917
      %v919 = vmul.f32 %v899, %v914
      %v920 = vmul.f32 %v899, %v918
      %v921 = vadd.f32 %v895, %v919
      %v922 = vadd.f32 %v896, %v920
      %923 = vset.pattern.permute.xlu0 19
      %924 = vperm.xlu0 %923, %v842
      %v925 = vpop.permute.xlu0 %924
      %v927 = vlaneseq
      %v928 = vshrl.u32 %v927, 7
      %v929 = vsub.s32 3, %v928
      %v930 = vrot.slane %v841, %v929
      %v931 = vlaneseq
      %v932 = vshrl.u32 %v931, 7
      %v933 = vsub.s32 7, %v932
      %v934 = vrot.slane %v841, %v933
      %v937 = vlaneseq
      %v938 = vshrl.u32 %v937, 7
      %v939 = vsub.s32 3, %v938
      %v940 = vrot.slane %v930, %v939
      %v941 = vlaneseq
      %v942 = vshrl.u32 %v941, 7
      %v943 = vsub.s32 3, %v942
      %v944 = vrot.slane %v934, %v943
      %v945 = vmul.f32 %v925, %v940
      %v946 = vmul.f32 %v925, %v944
      %v947 = vadd.f32 %v921, %v945
      %v948 = vadd.f32 %v922, %v946
      %949 = vrot.lane.b32.xlu0 %v491, 127
      %v950 = vpop.permute.xlu0 %949
      %951 = vrot.lane.b32.xlu0 %v493, 127
      %v952 = vpop.permute.xlu0 %951
      %vm953 = vcmp.lt.s32.totalorder %v500, 127
      %v954 = vsel %vm953, %v950, %v952
      %v955 = vsel %vm953, %v952, %v950
      %v956 = vlaneseq
      %v957 = vshrl.u32 %v956, 7
      %v958 = vsub.s32 5, %v957
      %v959 = vrot.slane %v486, %v958
      %v960 = vlaneseq
      %v961 = vshrl.u32 %v960, 7
      %v962 = vsub.s32 5, %v961
      %v963 = vrot.slane %v487, %v962
      %v964 = vmul.f32 %v954, %v959
      %v965 = vmul.f32 %v955, %v963
      %v966 = vld [vmem:[%s7] sm:$0xf]
      %968 = vset.pattern.permute.xlu0 20
      %969 = vperm.xlu0 %968, %v966
      %v970 = vpop.permute.xlu0 %969
      %v972 = vlaneseq
      %v973 = vshrl.u32 %v972, 7
      %v974 = vsub.s32 0, %v973
      %v975 = vrot.slane %v964, %v974
      %v976 = vlaneseq
      %v977 = vshrl.u32 %v976, 7
      %v978 = vsub.s32 0, %v977
      %v979 = vrot.slane %v965, %v978
      %v980 = vmul.f32 %v970, %v975
      %v981 = vmul.f32 %v970, %v979
      %v982 = vadd.f32 %v947, %v980
      %v983 = vadd.f32 %v948, %v981
      %984 = vset.pattern.permute.xlu0 21
      %985 = vperm.xlu0 %984, %v966
      %v986 = vpop.permute.xlu0 %985
      %v988 = vlaneseq
      %v989 = vshrl.u32 %v988, 7
      %v990 = vsub.s32 1, %v989
      %v991 = vrot.slane %v964, %v990
      %v992 = vlaneseq
      %v993 = vshrl.u32 %v992, 7
      %v994 = vsub.s32 1, %v993
      %v995 = vrot.slane %v965, %v994
      %v996 = vmul.f32 %v986, %v991
      %v997 = vmul.f32 %v986, %v995
      %v998 = vadd.f32 %v982, %v996
      %v999 = vadd.f32 %v983, %v997
      %1000 = vset.pattern.permute.xlu0 22
      %1001 = vperm.xlu0 %1000, %v966
      %v1002 = vpop.permute.xlu0 %1001
      %v1004 = vlaneseq
      %v1005 = vshrl.u32 %v1004, 7
      %v1006 = vsub.s32 2, %v1005
      %v1007 = vrot.slane %v964, %v1006
      %v1008 = vlaneseq
      %v1009 = vshrl.u32 %v1008, 7
      %v1010 = vsub.s32 2, %v1009
      %v1011 = vrot.slane %v965, %v1010
      %v1012 = vmul.f32 %v1002, %v1007
      %v1013 = vmul.f32 %v1002, %v1011
      %v1014 = vadd.f32 %v998, %v1012
      %v1015 = vadd.f32 %v999, %v1013
      %1016 = vset.pattern.permute.xlu0 23
      %1017 = vperm.xlu0 %1016, %v966
      %v1018 = vpop.permute.xlu0 %1017
      %v1020 = vlaneseq
      %v1021 = vshrl.u32 %v1020, 7
      %v1022 = vsub.s32 3, %v1021
      %v1023 = vrot.slane %v964, %v1022
      %v1024 = vlaneseq
      %v1025 = vshrl.u32 %v1024, 7
      %v1026 = vsub.s32 3, %v1025
      %v1027 = vrot.slane %v965, %v1026
      %v1028 = vmul.f32 %v1018, %v1023
      %v1029 = vmul.f32 %v1018, %v1027
      %v1030 = vadd.f32 %v1014, %v1028
      %v1031 = vadd.f32 %v1015, %v1029
      %1032 = vrot.lane.b32.xlu0 %v491, 113
      %v1033 = vpop.permute.xlu0 %1032
      %1034 = vrot.lane.b32.xlu0 %v493, 113
      %v1035 = vpop.permute.xlu0 %1034
      %vm1036 = vcmp.lt.s32.totalorder %v500, 113
      %v1037 = vsel %vm1036, %v1033, %v1035
      %v1038 = vsel %vm1036, %v1035, %v1033
      %v1039 = vlaneseq
      %v1040 = vshrl.u32 %v1039, 7
      %v1041 = vsub.s32 6, %v1040
      %v1042 = vrot.slane %v486, %v1041
      %v1043 = vlaneseq
      %v1044 = vshrl.u32 %v1043, 7
      %v1045 = vsub.s32 6, %v1044
      %v1046 = vrot.slane %v487, %v1045
      %v1047 = vmul.f32 %v1037, %v1042
      %v1048 = vmul.f32 %v1038, %v1046
      %v1049 = vld [vmem:[%s7] sm:$0xf]
      %1051 = vset.pattern.permute.xlu0 24
      %1052 = vperm.xlu0 %1051, %v1049
      %v1053 = vpop.permute.xlu0 %1052
      %v1055 = vlaneseq
      %v1056 = vshrl.u32 %v1055, 7
      %v1057 = vsub.s32 0, %v1056
      %v1058 = vrot.slane %v1047, %v1057
      %v1059 = vlaneseq
      %v1060 = vshrl.u32 %v1059, 7
      %v1061 = vsub.s32 0, %v1060
      %v1062 = vrot.slane %v1048, %v1061
      %v1063 = vmul.f32 %v1053, %v1058
      %v1064 = vmul.f32 %v1053, %v1062
      %v1065 = vadd.f32 %v1030, %v1063
      %v1066 = vadd.f32 %v1031, %v1064
      %1067 = vset.pattern.permute.xlu0 25
      %1068 = vperm.xlu0 %1067, %v1049
      %v1069 = vpop.permute.xlu0 %1068
      %v1071 = vlaneseq
      %v1072 = vshrl.u32 %v1071, 7
      %v1073 = vsub.s32 1, %v1072
      %v1074 = vrot.slane %v1047, %v1073
      %v1075 = vlaneseq
      %v1076 = vshrl.u32 %v1075, 7
      %v1077 = vsub.s32 1, %v1076
      %v1078 = vrot.slane %v1048, %v1077
      %v1079 = vmul.f32 %v1069, %v1074
      %v1080 = vmul.f32 %v1069, %v1078
      %v1081 = vadd.f32 %v1065, %v1079
      %v1082 = vadd.f32 %v1066, %v1080
      %1083 = vset.pattern.permute.xlu0 26
      %1084 = vperm.xlu0 %1083, %v1049
      %v1085 = vpop.permute.xlu0 %1084
      %v1087 = vlaneseq
      %v1088 = vshrl.u32 %v1087, 7
      %v1089 = vsub.s32 2, %v1088
      %v1090 = vrot.slane %v1047, %v1089
      %v1091 = vlaneseq
      %v1092 = vshrl.u32 %v1091, 7
      %v1093 = vsub.s32 2, %v1092
      %v1094 = vrot.slane %v1048, %v1093
      %v1095 = vmul.f32 %v1085, %v1090
      %v1096 = vmul.f32 %v1085, %v1094
      %v1097 = vadd.f32 %v1081, %v1095
      %v1098 = vadd.f32 %v1082, %v1096
      %1099 = vset.pattern.permute.xlu0 27
      %1100 = vperm.xlu0 %1099, %v1049
      %v1101 = vpop.permute.xlu0 %1100
      %v1103 = vlaneseq
      %v1104 = vshrl.u32 %v1103, 7
      %v1105 = vsub.s32 3, %v1104
      %v1106 = vrot.slane %v1047, %v1105
      %v1107 = vlaneseq
      %v1108 = vshrl.u32 %v1107, 7
      %v1109 = vsub.s32 3, %v1108
      %v1110 = vrot.slane %v1048, %v1109
      %v1111 = vmul.f32 %v1101, %v1106
      %v1112 = vmul.f32 %v1101, %v1110
      %v1113 = vadd.f32 %v1097, %v1111
      %v1114 = vadd.f32 %v1098, %v1112
      %1115 = vrot.lane.b32.xlu0 %v491, 112
      %v1116 = vpop.permute.xlu0 %1115
      %1117 = vrot.lane.b32.xlu0 %v493, 112
      %v1118 = vpop.permute.xlu0 %1117
      %vm1119 = vcmp.lt.s32.totalorder %v500, 112
      %v1120 = vsel %vm1119, %v1116, %v1118
      %v1121 = vsel %vm1119, %v1118, %v1116
      %v1122 = vlaneseq
      %v1123 = vshrl.u32 %v1122, 7
      %v1124 = vsub.s32 7, %v1123
      %v1125 = vrot.slane %v486, %v1124
      %v1126 = vlaneseq
      %v1127 = vshrl.u32 %v1126, 7
      %v1128 = vsub.s32 7, %v1127
      %v1129 = vrot.slane %v487, %v1128
      %v1130 = vmul.f32 %v1120, %v1125
      %v1131 = vmul.f32 %v1121, %v1129
      %v1132 = vld [vmem:[%s7] sm:$0xf]
      %1134 = vset.pattern.permute.xlu0 28
      %1135 = vperm.xlu0 %1134, %v1132
      %v1136 = vpop.permute.xlu0 %1135
      %v1138 = vlaneseq
      %v1139 = vshrl.u32 %v1138, 7
      %v1140 = vsub.s32 0, %v1139
      %v1141 = vrot.slane %v1130, %v1140
      %v1142 = vlaneseq
      %v1143 = vshrl.u32 %v1142, 7
      %v1144 = vsub.s32 0, %v1143
      %v1145 = vrot.slane %v1131, %v1144
      %v1146 = vmul.f32 %v1136, %v1141
      %v1147 = vmul.f32 %v1136, %v1145
      %v1148 = vadd.f32 %v1113, %v1146
      %v1149 = vadd.f32 %v1114, %v1147
      %1150 = vset.pattern.permute.xlu0 29
      %1151 = vperm.xlu0 %1150, %v1132
      %v1152 = vpop.permute.xlu0 %1151
      %v1154 = vlaneseq
      %v1155 = vshrl.u32 %v1154, 7
      %v1156 = vsub.s32 1, %v1155
      %v1157 = vrot.slane %v1130, %v1156
      %v1158 = vlaneseq
      %v1159 = vshrl.u32 %v1158, 7
      %v1160 = vsub.s32 1, %v1159
      %v1161 = vrot.slane %v1131, %v1160
      %v1162 = vmul.f32 %v1152, %v1157
      %v1163 = vmul.f32 %v1152, %v1161
      %v1164 = vadd.f32 %v1148, %v1162
      %v1165 = vadd.f32 %v1149, %v1163
      %1166 = vset.pattern.permute.xlu0 30
      %1167 = vperm.xlu0 %1166, %v1132
      %v1168 = vpop.permute.xlu0 %1167
      %v1170 = vlaneseq
      %v1171 = vshrl.u32 %v1170, 7
      %v1172 = vsub.s32 2, %v1171
      %v1173 = vrot.slane %v1130, %v1172
      %v1174 = vlaneseq
      %v1175 = vshrl.u32 %v1174, 7
      %v1176 = vsub.s32 2, %v1175
      %v1177 = vrot.slane %v1131, %v1176
      %v1178 = vmul.f32 %v1168, %v1173
      %v1179 = vmul.f32 %v1168, %v1177
      %v1180 = vadd.f32 %v1164, %v1178
      %v1181 = vadd.f32 %v1165, %v1179
      %1182 = vset.pattern.permute.xlu0 31
      %1183 = vperm.xlu0 %1182, %v1132
      %v1184 = vpop.permute.xlu0 %1183
      %v1186 = vlaneseq
      %v1187 = vshrl.u32 %v1186, 7
      %v1188 = vsub.s32 3, %v1187
      %v1189 = vrot.slane %v1130, %v1188
      %v1190 = vlaneseq
      %v1191 = vshrl.u32 %v1190, 7
      %v1192 = vsub.s32 3, %v1191
      %v1193 = vrot.slane %v1131, %v1192
      %v1194 = vmul.f32 %v1184, %v1189
      %v1195 = vmul.f32 %v1184, %v1193
      %v1196 = vadd.f32 %v1180, %v1194
      %v1197 = vadd.f32 %v1181, %v1195
      %1198 = vrot.lane.b32.xlu0 %v491, 111
      %v1199 = vpop.permute.xlu0 %1198
      %1200 = vrot.lane.b32.xlu0 %v493, 111
      %v1201 = vpop.permute.xlu0 %1200
      %vm1202 = vcmp.lt.s32.totalorder %v500, 111
      %v1203 = vsel %vm1202, %v1199, %v1201
      %v1204 = vsel %vm1202, %v1201, %v1199
      %v1205 = vlaneseq
      %v1206 = vshrl.u32 %v1205, 7
      %v1207 = vsub.s32 0, %v1206
      %v1208 = vrot.slane %v488, %v1207
      %v1209 = vlaneseq
      %v1210 = vshrl.u32 %v1209, 7
      %v1211 = vsub.s32 0, %v1210
      %v1212 = vrot.slane %v489, %v1211
      %v1213 = vmul.f32 %v1203, %v1208
      %v1214 = vmul.f32 %v1204, %v1212
      %v1215 = vld [vmem:[%s7] sm:$0xf]
      %1217 = vset.pattern.permute.xlu0 32
      %1218 = vperm.xlu0 %1217, %v1215
      %v1219 = vpop.permute.xlu0 %1218
      %v1221 = vlaneseq
      %v1222 = vshrl.u32 %v1221, 7
      %v1223 = vsub.s32 0, %v1222
      %v1224 = vrot.slane %v1213, %v1223
      %v1225 = vlaneseq
      %v1226 = vshrl.u32 %v1225, 7
      %v1227 = vsub.s32 0, %v1226
      %v1228 = vrot.slane %v1214, %v1227
      %v1229 = vmul.f32 %v1219, %v1224
      %v1230 = vmul.f32 %v1219, %v1228
      %v1231 = vadd.f32 %v1196, %v1229
      %v1232 = vadd.f32 %v1197, %v1230
      %1233 = vset.pattern.permute.xlu0 33
      %1234 = vperm.xlu0 %1233, %v1215
      %v1235 = vpop.permute.xlu0 %1234
      %v1237 = vlaneseq
      %v1238 = vshrl.u32 %v1237, 7
      %v1239 = vsub.s32 1, %v1238
      %v1240 = vrot.slane %v1213, %v1239
      %v1241 = vlaneseq
      %v1242 = vshrl.u32 %v1241, 7
      %v1243 = vsub.s32 1, %v1242
      %v1244 = vrot.slane %v1214, %v1243
      %v1245 = vmul.f32 %v1235, %v1240
      %v1246 = vmul.f32 %v1235, %v1244
      %v1247 = vadd.f32 %v1231, %v1245
      %v1248 = vadd.f32 %v1232, %v1246
      %1249 = vset.pattern.permute.xlu0 34
      %1250 = vperm.xlu0 %1249, %v1215
      %v1251 = vpop.permute.xlu0 %1250
      %v1253 = vlaneseq
      %v1254 = vshrl.u32 %v1253, 7
      %v1255 = vsub.s32 2, %v1254
      %v1256 = vrot.slane %v1213, %v1255
      %v1257 = vlaneseq
      %v1258 = vshrl.u32 %v1257, 7
      %v1259 = vsub.s32 2, %v1258
      %v1260 = vrot.slane %v1214, %v1259
      %v1261 = vmul.f32 %v1251, %v1256
      %v1262 = vmul.f32 %v1251, %v1260
      %v1263 = vadd.f32 %v1247, %v1261
      %v1264 = vadd.f32 %v1248, %v1262
      %1265 = vset.pattern.permute.xlu0 35
      %1266 = vperm.xlu0 %1265, %v1215
      %v1267 = vpop.permute.xlu0 %1266
      %v1269 = vlaneseq
      %v1270 = vshrl.u32 %v1269, 7
      %v1271 = vsub.s32 3, %v1270
      %v1272 = vrot.slane %v1213, %v1271
      %v1273 = vlaneseq
      %v1274 = vshrl.u32 %v1273, 7
      %v1275 = vsub.s32 3, %v1274
      %v1276 = vrot.slane %v1214, %v1275
      %v1277 = vmul.f32 %v1267, %v1272
      %v1278 = vmul.f32 %v1267, %v1276
      %v1279 = vadd.f32 %v1263, %v1277
      %v1280 = vadd.f32 %v1264, %v1278
      %v1281 = vld [vmem:[%s8] sm:$0xf]
      %1283 = vset.pattern.permute.xlu0 0
      %1284 = vperm.xlu0 %1283, %v1281
      %v1285 = vpop.permute.xlu0 %1284
      %v1287 = vadd.f32 %v1279, %v1285
      %v1288 = vadd.f32 %v1280, %v1285
      %vm1289 = vcmask 1043456
      %v1290 = vsel %vm1289, %v1287, 0.0
      %v1291 = vsel %vm1289, %v1288, 0.0
      %v1292 = vadd.f32 %v1290, %v1291
      %1293 = vadd.xlane.f32.xlu0 %v1292
      %v1294 = vpop.xlane.xlu0 %1293
      %v1295 = vrcp.pop 256.0
      %v1296 = vmul.f32 %v1294, %v1295
      %v1297 = vsub.f32 %v1287, %v1296
      %v1298 = vsub.f32 %v1288, %v1296
      %v1299 = vmul.f32 %v1297, %v1297
      %v1300 = vmul.f32 %v1298, %v1298
      %v1301 = vsel %vm1289, %v1299, 0.0
      %v1302 = vsel %vm1289, %v1300, 0.0
      %v1303 = vadd.f32 %v1301, %v1302
      %1304 = vadd.xlane.f32.xlu0 %v1303
      %v1305 = vpop.xlane.xlu0 %1304
      %v1306 = vmul.f32 %v1305, %v1295
      %v1307 = vadd.f32 %v1306, 1e-05
      %v1308 = vrsqrt.pop %v1307
      %v1309 = vmul.f32 %v1297, %v1308
      %v1310 = vmul.f32 %v1298, %v1308
      %v1311 = vmax.f32 %v1309, 0.0
      %v1312 = vmax.f32 %v1310, 0.0
      %1313 = vrot.lane.b32.xlu0 %v1311, 17
      %v1314 = vpop.permute.xlu0 %1313
      %1315 = vrot.lane.b32.xlu0 %v1312, 17
      %v1316 = vpop.permute.xlu0 %1315
      %v1317 = vsel %vm501, %v1314, %v1316
      %v1318 = vsel %vm501, %v1316, %v1314
      %v1319 = vmul.f32 %v1318, %v507
      %v1320 = vmul.f32 %v1317, %v511
      %v1321 = vld [vmem:[%s9] sm:$0xf]
      %1323 = vset.pattern.permute.xlu0 0
      %1324 = vperm.xlu0 %1323, %v1321
      %v1325 = vpop.permute.xlu0 %1324
      %v1327 = vlaneseq
      %v1328 = vshrl.u32 %v1327, 7
      %v1329 = vsub.s32 0, %v1328
      %v1330 = vrot.slane %v1319, %v1329
      %v1331 = vlaneseq
      %v1332 = vshrl.u32 %v1331, 7
      %v1333 = vsub.s32 0, %v1332
      %v1334 = vrot.slane %v1320, %v1333
      %v1335 = vmul.f32 %v1325, %v1330
      %v1336 = vmul.f32 %v1325, %v1334
      %v1337 = vadd.f32 %v1335, 0.0
      %v1338 = vadd.f32 %v1336, 0.0
      %1339 = vset.pattern.permute.xlu0 1
      %1340 = vperm.xlu0 %1339, %v1321
      %v1341 = vpop.permute.xlu0 %1340
      %v1343 = vlaneseq
      %v1344 = vshrl.u32 %v1343, 7
      %v1345 = vsub.s32 1, %v1344
      %v1346 = vrot.slane %v1319, %v1345
      %v1347 = vlaneseq
      %v1348 = vshrl.u32 %v1347, 7
      %v1349 = vsub.s32 1, %v1348
      %v1350 = vrot.slane %v1320, %v1349
      %v1351 = vmul.f32 %v1341, %v1346
      %v1352 = vmul.f32 %v1341, %v1350
      %v1353 = vadd.f32 %v1337, %v1351
      %v1354 = vadd.f32 %v1338, %v1352
      %1355 = vset.pattern.permute.xlu0 2
      %1356 = vperm.xlu0 %1355, %v1321
      %v1357 = vpop.permute.xlu0 %1356
      %v1359 = vlaneseq
      %v1360 = vshrl.u32 %v1359, 7
      %v1361 = vsub.s32 2, %v1360
      %v1362 = vrot.slane %v1319, %v1361
      %v1363 = vlaneseq
      %v1364 = vshrl.u32 %v1363, 7
      %v1365 = vsub.s32 2, %v1364
      %v1366 = vrot.slane %v1320, %v1365
      %v1367 = vmul.f32 %v1357, %v1362
      %v1368 = vmul.f32 %v1357, %v1366
      %v1369 = vadd.f32 %v1353, %v1367
      %v1370 = vadd.f32 %v1354, %v1368
      %1371 = vset.pattern.permute.xlu0 3
      %1372 = vperm.xlu0 %1371, %v1321
      %v1373 = vpop.permute.xlu0 %1372
      %v1375 = vlaneseq
      %v1376 = vshrl.u32 %v1375, 7
      %v1377 = vsub.s32 3, %v1376
      %v1378 = vrot.slane %v1319, %v1377
      %v1379 = vlaneseq
      %v1380 = vshrl.u32 %v1379, 7
      %v1381 = vsub.s32 3, %v1380
      %v1382 = vrot.slane %v1320, %v1381
      %v1383 = vmul.f32 %v1373, %v1378
      %v1384 = vmul.f32 %v1373, %v1382
      %v1385 = vadd.f32 %v1369, %v1383
      %v1386 = vadd.f32 %v1370, %v1384
      %1387 = vrot.lane.b32.xlu0 %v1311, 16
      %v1388 = vpop.permute.xlu0 %1387
      %1389 = vrot.lane.b32.xlu0 %v1312, 16
      %v1390 = vpop.permute.xlu0 %1389
      %v1391 = vsel %vm584, %v1388, %v1390
      %v1392 = vsel %vm584, %v1390, %v1388
      %v1393 = vmul.f32 %v1392, %v590
      %v1394 = vmul.f32 %v1391, %v594
      %1395 = vset.pattern.permute.xlu0 4
      %1396 = vperm.xlu0 %1395, %v1321
      %v1397 = vpop.permute.xlu0 %1396
      %v1399 = vlaneseq
      %v1400 = vshrl.u32 %v1399, 7
      %v1401 = vsub.s32 0, %v1400
      %v1402 = vrot.slane %v1393, %v1401
      %v1403 = vlaneseq
      %v1404 = vshrl.u32 %v1403, 7
      %v1405 = vsub.s32 0, %v1404
      %v1406 = vrot.slane %v1394, %v1405
      %v1407 = vmul.f32 %v1397, %v1402
      %v1408 = vmul.f32 %v1397, %v1406
      %v1409 = vadd.f32 %v1385, %v1407
      %v1410 = vadd.f32 %v1386, %v1408
      %1411 = vset.pattern.permute.xlu0 5
      %1412 = vperm.xlu0 %1411, %v1321
      %v1413 = vpop.permute.xlu0 %1412
      %v1415 = vlaneseq
      %v1416 = vshrl.u32 %v1415, 7
      %v1417 = vsub.s32 1, %v1416
      %v1418 = vrot.slane %v1393, %v1417
      %v1419 = vlaneseq
      %v1420 = vshrl.u32 %v1419, 7
      %v1421 = vsub.s32 1, %v1420
      %v1422 = vrot.slane %v1394, %v1421
      %v1423 = vmul.f32 %v1413, %v1418
      %v1424 = vmul.f32 %v1413, %v1422
      %v1425 = vadd.f32 %v1409, %v1423
      %v1426 = vadd.f32 %v1410, %v1424
      %1427 = vset.pattern.permute.xlu0 6
      %1428 = vperm.xlu0 %1427, %v1321
      %v1429 = vpop.permute.xlu0 %1428
      %v1431 = vlaneseq
      %v1432 = vshrl.u32 %v1431, 7
      %v1433 = vsub.s32 2, %v1432
      %v1434 = vrot.slane %v1393, %v1433
      %v1435 = vlaneseq
      %v1436 = vshrl.u32 %v1435, 7
      %v1437 = vsub.s32 2, %v1436
      %v1438 = vrot.slane %v1394, %v1437
      %v1439 = vmul.f32 %v1429, %v1434
      %v1440 = vmul.f32 %v1429, %v1438
      %v1441 = vadd.f32 %v1425, %v1439
      %v1442 = vadd.f32 %v1426, %v1440
      %1443 = vset.pattern.permute.xlu0 7
      %1444 = vperm.xlu0 %1443, %v1321
      %v1445 = vpop.permute.xlu0 %1444
      %v1447 = vlaneseq
      %v1448 = vshrl.u32 %v1447, 7
      %v1449 = vsub.s32 3, %v1448
      %v1450 = vrot.slane %v1393, %v1449
      %v1451 = vlaneseq
      %v1452 = vshrl.u32 %v1451, 7
      %v1453 = vsub.s32 3, %v1452
      %v1454 = vrot.slane %v1394, %v1453
      %v1455 = vmul.f32 %v1445, %v1450
      %v1456 = vmul.f32 %v1445, %v1454
      %v1457 = vadd.f32 %v1441, %v1455
      %v1458 = vadd.f32 %v1442, %v1456
      %1459 = vrot.lane.b32.xlu0 %v1311, 15
      %v1460 = vpop.permute.xlu0 %1459
      %1461 = vrot.lane.b32.xlu0 %v1312, 15
      %v1462 = vpop.permute.xlu0 %1461
      %v1463 = vsel %vm667, %v1460, %v1462
      %v1464 = vsel %vm667, %v1462, %v1460
      %v1465 = vmul.f32 %v1464, %v673
      %v1466 = vmul.f32 %v1463, %v677
      %1467 = vset.pattern.permute.xlu0 8
      %1468 = vperm.xlu0 %1467, %v1321
      %v1469 = vpop.permute.xlu0 %1468
      %v1471 = vlaneseq
      %v1472 = vshrl.u32 %v1471, 7
      %v1473 = vsub.s32 0, %v1472
      %v1474 = vrot.slane %v1465, %v1473
      %v1475 = vlaneseq
      %v1476 = vshrl.u32 %v1475, 7
      %v1477 = vsub.s32 0, %v1476
      %v1478 = vrot.slane %v1466, %v1477
      %v1479 = vmul.f32 %v1469, %v1474
      %v1480 = vmul.f32 %v1469, %v1478
      %v1481 = vadd.f32 %v1457, %v1479
      %v1482 = vadd.f32 %v1458, %v1480
      %1483 = vset.pattern.permute.xlu0 9
      %1484 = vperm.xlu0 %1483, %v1321
      %v1485 = vpop.permute.xlu0 %1484
      %v1487 = vlaneseq
      %v1488 = vshrl.u32 %v1487, 7
      %v1489 = vsub.s32 1, %v1488
      %v1490 = vrot.slane %v1465, %v1489
      %v1491 = vlaneseq
      %v1492 = vshrl.u32 %v1491, 7
      %v1493 = vsub.s32 1, %v1492
      %v1494 = vrot.slane %v1466, %v1493
      %v1495 = vmul.f32 %v1485, %v1490
      %v1496 = vmul.f32 %v1485, %v1494
      %v1497 = vadd.f32 %v1481, %v1495
      %v1498 = vadd.f32 %v1482, %v1496
      %1499 = vset.pattern.permute.xlu0 10
      %1500 = vperm.xlu0 %1499, %v1321
      %v1501 = vpop.permute.xlu0 %1500
      %v1503 = vlaneseq
      %v1504 = vshrl.u32 %v1503, 7
      %v1505 = vsub.s32 2, %v1504
      %v1506 = vrot.slane %v1465, %v1505
      %v1507 = vlaneseq
      %v1508 = vshrl.u32 %v1507, 7
      %v1509 = vsub.s32 2, %v1508
      %v1510 = vrot.slane %v1466, %v1509
      %v1511 = vmul.f32 %v1501, %v1506
      %v1512 = vmul.f32 %v1501, %v1510
      %v1513 = vadd.f32 %v1497, %v1511
      %v1514 = vadd.f32 %v1498, %v1512
      %1515 = vset.pattern.permute.xlu0 11
      %1516 = vperm.xlu0 %1515, %v1321
      %v1517 = vpop.permute.xlu0 %1516
      %v1519 = vlaneseq
      %v1520 = vshrl.u32 %v1519, 7
      %v1521 = vsub.s32 3, %v1520
      %v1522 = vrot.slane %v1465, %v1521
      %v1523 = vlaneseq
      %v1524 = vshrl.u32 %v1523, 7
      %v1525 = vsub.s32 3, %v1524
      %v1526 = vrot.slane %v1466, %v1525
      %v1527 = vmul.f32 %v1517, %v1522
      %v1528 = vmul.f32 %v1517, %v1526
      %v1529 = vadd.f32 %v1513, %v1527
      %v1530 = vadd.f32 %v1514, %v1528
      %1531 = vrot.lane.b32.xlu0 %v1311, 1
      %v1532 = vpop.permute.xlu0 %1531
      %1533 = vrot.lane.b32.xlu0 %v1312, 1
      %v1534 = vpop.permute.xlu0 %1533
      %v1535 = vsel %vm750, %v1532, %v1534
      %v1536 = vsel %vm750, %v1534, %v1532
      %v1537 = vmul.f32 %v1536, %v756
      %v1538 = vmul.f32 %v1535, %v760
      %1539 = vset.pattern.permute.xlu0 12
      %1540 = vperm.xlu0 %1539, %v1321
      %v1541 = vpop.permute.xlu0 %1540
      %v1543 = vlaneseq
      %v1544 = vshrl.u32 %v1543, 7
      %v1545 = vsub.s32 0, %v1544
      %v1546 = vrot.slane %v1537, %v1545
      %v1547 = vlaneseq
      %v1548 = vshrl.u32 %v1547, 7
      %v1549 = vsub.s32 0, %v1548
      %v1550 = vrot.slane %v1538, %v1549
      %v1551 = vmul.f32 %v1541, %v1546
      %v1552 = vmul.f32 %v1541, %v1550
      %v1553 = vadd.f32 %v1529, %v1551
      %v1554 = vadd.f32 %v1530, %v1552
      %1555 = vset.pattern.permute.xlu0 13
      %1556 = vperm.xlu0 %1555, %v1321
      %v1557 = vpop.permute.xlu0 %1556
      %v1559 = vlaneseq
      %v1560 = vshrl.u32 %v1559, 7
      %v1561 = vsub.s32 1, %v1560
      %v1562 = vrot.slane %v1537, %v1561
      %v1563 = vlaneseq
      %v1564 = vshrl.u32 %v1563, 7
      %v1565 = vsub.s32 1, %v1564
      %v1566 = vrot.slane %v1538, %v1565
      %v1567 = vmul.f32 %v1557, %v1562
      %v1568 = vmul.f32 %v1557, %v1566
      %v1569 = vadd.f32 %v1553, %v1567
      %v1570 = vadd.f32 %v1554, %v1568
      %1571 = vset.pattern.permute.xlu0 14
      %1572 = vperm.xlu0 %1571, %v1321
      %v1573 = vpop.permute.xlu0 %1572
      %v1575 = vlaneseq
      %v1576 = vshrl.u32 %v1575, 7
      %v1577 = vsub.s32 2, %v1576
      %v1578 = vrot.slane %v1537, %v1577
      %v1579 = vlaneseq
      %v1580 = vshrl.u32 %v1579, 7
      %v1581 = vsub.s32 2, %v1580
      %v1582 = vrot.slane %v1538, %v1581
      %v1583 = vmul.f32 %v1573, %v1578
      %v1584 = vmul.f32 %v1573, %v1582
      %v1585 = vadd.f32 %v1569, %v1583
      %v1586 = vadd.f32 %v1570, %v1584
      %1587 = vset.pattern.permute.xlu0 15
      %1588 = vperm.xlu0 %1587, %v1321
      %v1589 = vpop.permute.xlu0 %1588
      %v1591 = vlaneseq
      %v1592 = vshrl.u32 %v1591, 7
      %v1593 = vsub.s32 3, %v1592
      %v1594 = vrot.slane %v1537, %v1593
      %v1595 = vlaneseq
      %v1596 = vshrl.u32 %v1595, 7
      %v1597 = vsub.s32 3, %v1596
      %v1598 = vrot.slane %v1538, %v1597
      %v1599 = vmul.f32 %v1589, %v1594
      %v1600 = vmul.f32 %v1589, %v1598
      %v1601 = vadd.f32 %v1585, %v1599
      %v1602 = vadd.f32 %v1586, %v1600
      %v1603 = vmul.f32 %v1311, %v832
      %v1604 = vmul.f32 %v1312, %v836
      %1605 = vset.pattern.permute.xlu0 16
      %1606 = vperm.xlu0 %1605, %v1321
      %v1607 = vpop.permute.xlu0 %1606
      %v1609 = vlaneseq
      %v1610 = vshrl.u32 %v1609, 7
      %v1611 = vsub.s32 0, %v1610
      %v1612 = vrot.slane %v1603, %v1611
      %v1613 = vlaneseq
      %v1614 = vshrl.u32 %v1613, 7
      %v1615 = vsub.s32 0, %v1614
      %v1616 = vrot.slane %v1604, %v1615
      %v1617 = vmul.f32 %v1607, %v1612
      %v1618 = vmul.f32 %v1607, %v1616
      %v1619 = vadd.f32 %v1601, %v1617
      %v1620 = vadd.f32 %v1602, %v1618
      %1621 = vset.pattern.permute.xlu0 17
      %1622 = vperm.xlu0 %1621, %v1321
      %v1623 = vpop.permute.xlu0 %1622
      %v1625 = vlaneseq
      %v1626 = vshrl.u32 %v1625, 7
      %v1627 = vsub.s32 1, %v1626
      %v1628 = vrot.slane %v1603, %v1627
      %v1629 = vlaneseq
      %v1630 = vshrl.u32 %v1629, 7
      %v1631 = vsub.s32 1, %v1630
      %v1632 = vrot.slane %v1604, %v1631
      %v1633 = vmul.f32 %v1623, %v1628
      %v1634 = vmul.f32 %v1623, %v1632
      %v1635 = vadd.f32 %v1619, %v1633
      %v1636 = vadd.f32 %v1620, %v1634
      %1637 = vset.pattern.permute.xlu0 18
      %1638 = vperm.xlu0 %1637, %v1321
      %v1639 = vpop.permute.xlu0 %1638
      %v1641 = vlaneseq
      %v1642 = vshrl.u32 %v1641, 7
      %v1643 = vsub.s32 2, %v1642
      %v1644 = vrot.slane %v1603, %v1643
      %v1645 = vlaneseq
      %v1646 = vshrl.u32 %v1645, 7
      %v1647 = vsub.s32 2, %v1646
      %v1648 = vrot.slane %v1604, %v1647
      %v1649 = vmul.f32 %v1639, %v1644
      %v1650 = vmul.f32 %v1639, %v1648
      %v1651 = vadd.f32 %v1635, %v1649
      %v1652 = vadd.f32 %v1636, %v1650
      %1653 = vset.pattern.permute.xlu0 19
      %1654 = vperm.xlu0 %1653, %v1321
      %v1655 = vpop.permute.xlu0 %1654
      %v1657 = vlaneseq
      %v1658 = vshrl.u32 %v1657, 7
      %v1659 = vsub.s32 3, %v1658
      %v1660 = vrot.slane %v1603, %v1659
      %v1661 = vlaneseq
      %v1662 = vshrl.u32 %v1661, 7
      %v1663 = vsub.s32 3, %v1662
      %v1664 = vrot.slane %v1604, %v1663
      %v1665 = vmul.f32 %v1655, %v1660
      %v1666 = vmul.f32 %v1655, %v1664
      %v1667 = vadd.f32 %v1651, %v1665
      %v1668 = vadd.f32 %v1652, %v1666
      %1669 = vrot.lane.b32.xlu0 %v1311, 127
      %v1670 = vpop.permute.xlu0 %1669
      %1671 = vrot.lane.b32.xlu0 %v1312, 127
      %v1672 = vpop.permute.xlu0 %1671
      %v1673 = vsel %vm953, %v1670, %v1672
      %v1674 = vsel %vm953, %v1672, %v1670
      %v1675 = vmul.f32 %v1673, %v959
      %v1676 = vmul.f32 %v1674, %v963
      %1677 = vset.pattern.permute.xlu0 20
      %1678 = vperm.xlu0 %1677, %v1321
      %v1679 = vpop.permute.xlu0 %1678
      %v1681 = vlaneseq
      %v1682 = vshrl.u32 %v1681, 7
      %v1683 = vsub.s32 0, %v1682
      %v1684 = vrot.slane %v1675, %v1683
      %v1685 = vlaneseq
      %v1686 = vshrl.u32 %v1685, 7
      %v1687 = vsub.s32 0, %v1686
      %v1688 = vrot.slane %v1676, %v1687
      %v1689 = vmul.f32 %v1679, %v1684
      %v1690 = vmul.f32 %v1679, %v1688
      %v1691 = vadd.f32 %v1667, %v1689
      %v1692 = vadd.f32 %v1668, %v1690
      %1693 = vset.pattern.permute.xlu0 21
      %1694 = vperm.xlu0 %1693, %v1321
      %v1695 = vpop.permute.xlu0 %1694
      %v1697 = vlaneseq
      %v1698 = vshrl.u32 %v1697, 7
      %v1699 = vsub.s32 1, %v1698
      %v1700 = vrot.slane %v1675, %v1699
      %v1701 = vlaneseq
      %v1702 = vshrl.u32 %v1701, 7
      %v1703 = vsub.s32 1, %v1702
      %v1704 = vrot.slane %v1676, %v1703
      %v1705 = vmul.f32 %v1695, %v1700
      %v1706 = vmul.f32 %v1695, %v1704
      %v1707 = vadd.f32 %v1691, %v1705
      %v1708 = vadd.f32 %v1692, %v1706
      %1709 = vset.pattern.permute.xlu0 22
      %1710 = vperm.xlu0 %1709, %v1321
      %v1711 = vpop.permute.xlu0 %1710
      %v1713 = vlaneseq
      %v1714 = vshrl.u32 %v1713, 7
      %v1715 = vsub.s32 2, %v1714
      %v1716 = vrot.slane %v1675, %v1715
      %v1717 = vlaneseq
      %v1718 = vshrl.u32 %v1717, 7
      %v1719 = vsub.s32 2, %v1718
      %v1720 = vrot.slane %v1676, %v1719
      %v1721 = vmul.f32 %v1711, %v1716
      %v1722 = vmul.f32 %v1711, %v1720
      %v1723 = vadd.f32 %v1707, %v1721
      %v1724 = vadd.f32 %v1708, %v1722
      %1725 = vset.pattern.permute.xlu0 23
      %1726 = vperm.xlu0 %1725, %v1321
      %v1727 = vpop.permute.xlu0 %1726
      %v1729 = vlaneseq
      %v1730 = vshrl.u32 %v1729, 7
      %v1731 = vsub.s32 3, %v1730
      %v1732 = vrot.slane %v1675, %v1731
      %v1733 = vlaneseq
      %v1734 = vshrl.u32 %v1733, 7
      %v1735 = vsub.s32 3, %v1734
      %v1736 = vrot.slane %v1676, %v1735
      %v1737 = vmul.f32 %v1727, %v1732
      %v1738 = vmul.f32 %v1727, %v1736
      %v1739 = vadd.f32 %v1723, %v1737
      %v1740 = vadd.f32 %v1724, %v1738
      %1741 = vrot.lane.b32.xlu0 %v1311, 113
      %v1742 = vpop.permute.xlu0 %1741
      %1743 = vrot.lane.b32.xlu0 %v1312, 113
      %v1744 = vpop.permute.xlu0 %1743
      %v1745 = vsel %vm1036, %v1742, %v1744
      %v1746 = vsel %vm1036, %v1744, %v1742
      %v1747 = vmul.f32 %v1745, %v1042
      %v1748 = vmul.f32 %v1746, %v1046
      %1749 = vset.pattern.permute.xlu0 24
      %1750 = vperm.xlu0 %1749, %v1321
      %v1751 = vpop.permute.xlu0 %1750
      %v1753 = vlaneseq
      %v1754 = vshrl.u32 %v1753, 7
      %v1755 = vsub.s32 0, %v1754
      %v1756 = vrot.slane %v1747, %v1755
      %v1757 = vlaneseq
      %v1758 = vshrl.u32 %v1757, 7
      %v1759 = vsub.s32 0, %v1758
      %v1760 = vrot.slane %v1748, %v1759
      %v1761 = vmul.f32 %v1751, %v1756
      %v1762 = vmul.f32 %v1751, %v1760
      %v1763 = vadd.f32 %v1739, %v1761
      %v1764 = vadd.f32 %v1740, %v1762
      %1765 = vset.pattern.permute.xlu0 25
      %1766 = vperm.xlu0 %1765, %v1321
      %v1767 = vpop.permute.xlu0 %1766
      %v1769 = vlaneseq
      %v1770 = vshrl.u32 %v1769, 7
      %v1771 = vsub.s32 1, %v1770
      %v1772 = vrot.slane %v1747, %v1771
      %v1773 = vlaneseq
      %v1774 = vshrl.u32 %v1773, 7
      %v1775 = vsub.s32 1, %v1774
      %v1776 = vrot.slane %v1748, %v1775
      %v1777 = vmul.f32 %v1767, %v1772
      %v1778 = vmul.f32 %v1767, %v1776
      %v1779 = vadd.f32 %v1763, %v1777
      %v1780 = vadd.f32 %v1764, %v1778
      %1781 = vset.pattern.permute.xlu0 26
      %1782 = vperm.xlu0 %1781, %v1321
      %v1783 = vpop.permute.xlu0 %1782
      %v1785 = vlaneseq
      %v1786 = vshrl.u32 %v1785, 7
      %v1787 = vsub.s32 2, %v1786
      %v1788 = vrot.slane %v1747, %v1787
      %v1789 = vlaneseq
      %v1790 = vshrl.u32 %v1789, 7
      %v1791 = vsub.s32 2, %v1790
      %v1792 = vrot.slane %v1748, %v1791
      %v1793 = vmul.f32 %v1783, %v1788
      %v1794 = vmul.f32 %v1783, %v1792
      %v1795 = vadd.f32 %v1779, %v1793
      %v1796 = vadd.f32 %v1780, %v1794
      %1797 = vset.pattern.permute.xlu0 27
      %1798 = vperm.xlu0 %1797, %v1321
      %v1799 = vpop.permute.xlu0 %1798
      %v1801 = vlaneseq
      %v1802 = vshrl.u32 %v1801, 7
      %v1803 = vsub.s32 3, %v1802
      %v1804 = vrot.slane %v1747, %v1803
      %v1805 = vlaneseq
      %v1806 = vshrl.u32 %v1805, 7
      %v1807 = vsub.s32 3, %v1806
      %v1808 = vrot.slane %v1748, %v1807
      %v1809 = vmul.f32 %v1799, %v1804
      %v1810 = vmul.f32 %v1799, %v1808
      %v1811 = vadd.f32 %v1795, %v1809
      %v1812 = vadd.f32 %v1796, %v1810
      %1813 = vrot.lane.b32.xlu0 %v1311, 112
      %v1814 = vpop.permute.xlu0 %1813
      %1815 = vrot.lane.b32.xlu0 %v1312, 112
      %v1816 = vpop.permute.xlu0 %1815
      %v1817 = vsel %vm1119, %v1814, %v1816
      %v1818 = vsel %vm1119, %v1816, %v1814
      %v1819 = vmul.f32 %v1817, %v1125
      %v1820 = vmul.f32 %v1818, %v1129
      %1821 = vset.pattern.permute.xlu0 28
      %1822 = vperm.xlu0 %1821, %v1321
      %v1823 = vpop.permute.xlu0 %1822
      %v1825 = vlaneseq
      %v1826 = vshrl.u32 %v1825, 7
      %v1827 = vsub.s32 0, %v1826
      %v1828 = vrot.slane %v1819, %v1827
      %v1829 = vlaneseq
      %v1830 = vshrl.u32 %v1829, 7
      %v1831 = vsub.s32 0, %v1830
      %v1832 = vrot.slane %v1820, %v1831
      %v1833 = vmul.f32 %v1823, %v1828
      %v1834 = vmul.f32 %v1823, %v1832
      %v1835 = vadd.f32 %v1811, %v1833
      %v1836 = vadd.f32 %v1812, %v1834
      %1837 = vset.pattern.permute.xlu0 29
      %1838 = vperm.xlu0 %1837, %v1321
      %v1839 = vpop.permute.xlu0 %1838
      %v1841 = vlaneseq
      %v1842 = vshrl.u32 %v1841, 7
      %v1843 = vsub.s32 1, %v1842
      %v1844 = vrot.slane %v1819, %v1843
      %v1845 = vlaneseq
      %v1846 = vshrl.u32 %v1845, 7
      %v1847 = vsub.s32 1, %v1846
      %v1848 = vrot.slane %v1820, %v1847
      %v1849 = vmul.f32 %v1839, %v1844
      %v1850 = vmul.f32 %v1839, %v1848
      %v1851 = vadd.f32 %v1835, %v1849
      %v1852 = vadd.f32 %v1836, %v1850
      %1853 = vset.pattern.permute.xlu0 30
      %1854 = vperm.xlu0 %1853, %v1321
      %v1855 = vpop.permute.xlu0 %1854
      %v1857 = vlaneseq
      %v1858 = vshrl.u32 %v1857, 7
      %v1859 = vsub.s32 2, %v1858
      %v1860 = vrot.slane %v1819, %v1859
      %v1861 = vlaneseq
      %v1862 = vshrl.u32 %v1861, 7
      %v1863 = vsub.s32 2, %v1862
      %v1864 = vrot.slane %v1820, %v1863
      %v1865 = vmul.f32 %v1855, %v1860
      %v1866 = vmul.f32 %v1855, %v1864
      %v1867 = vadd.f32 %v1851, %v1865
      %v1868 = vadd.f32 %v1852, %v1866
      %1869 = vset.pattern.permute.xlu0 31
      %1870 = vperm.xlu0 %1869, %v1321
      %v1871 = vpop.permute.xlu0 %1870
      %v1873 = vlaneseq
      %v1874 = vshrl.u32 %v1873, 7
      %v1875 = vsub.s32 3, %v1874
      %v1876 = vrot.slane %v1819, %v1875
      %v1877 = vlaneseq
      %v1878 = vshrl.u32 %v1877, 7
      %v1879 = vsub.s32 3, %v1878
      %v1880 = vrot.slane %v1820, %v1879
      %v1881 = vmul.f32 %v1871, %v1876
      %v1882 = vmul.f32 %v1871, %v1880
      %v1883 = vadd.f32 %v1867, %v1881
      %v1884 = vadd.f32 %v1868, %v1882
      %1885 = vrot.lane.b32.xlu0 %v1311, 111
      %v1886 = vpop.permute.xlu0 %1885
      %1887 = vrot.lane.b32.xlu0 %v1312, 111
      %v1888 = vpop.permute.xlu0 %1887
      %v1889 = vsel %vm1202, %v1886, %v1888
      %v1890 = vsel %vm1202, %v1888, %v1886
      %v1891 = vmul.f32 %v1889, %v1208
      %v1892 = vmul.f32 %v1890, %v1212
      %1893 = vset.pattern.permute.xlu0 32
      %1894 = vperm.xlu0 %1893, %v1321
      %v1895 = vpop.permute.xlu0 %1894
      %v1897 = vlaneseq
      %v1898 = vshrl.u32 %v1897, 7
      %v1899 = vsub.s32 0, %v1898
      %v1900 = vrot.slane %v1891, %v1899
      %v1901 = vlaneseq
      %v1902 = vshrl.u32 %v1901, 7
      %v1903 = vsub.s32 0, %v1902
      %v1904 = vrot.slane %v1892, %v1903
      %v1905 = vmul.f32 %v1895, %v1900
      %v1906 = vmul.f32 %v1895, %v1904
      %v1907 = vadd.f32 %v1883, %v1905
      %v1908 = vadd.f32 %v1884, %v1906
      %1909 = vset.pattern.permute.xlu0 33
      %1910 = vperm.xlu0 %1909, %v1321
      %v1911 = vpop.permute.xlu0 %1910
      %v1913 = vlaneseq
      %v1914 = vshrl.u32 %v1913, 7
      %v1915 = vsub.s32 1, %v1914
      %v1916 = vrot.slane %v1891, %v1915
      %v1917 = vlaneseq
      %v1918 = vshrl.u32 %v1917, 7
      %v1919 = vsub.s32 1, %v1918
      %v1920 = vrot.slane %v1892, %v1919
      %v1921 = vmul.f32 %v1911, %v1916
      %v1922 = vmul.f32 %v1911, %v1920
      %v1923 = vadd.f32 %v1907, %v1921
      %v1924 = vadd.f32 %v1908, %v1922
      %1925 = vset.pattern.permute.xlu0 34
      %1926 = vperm.xlu0 %1925, %v1321
      %v1927 = vpop.permute.xlu0 %1926
      %v1929 = vlaneseq
      %v1930 = vshrl.u32 %v1929, 7
      %v1931 = vsub.s32 2, %v1930
      %v1932 = vrot.slane %v1891, %v1931
      %v1933 = vlaneseq
      %v1934 = vshrl.u32 %v1933, 7
      %v1935 = vsub.s32 2, %v1934
      %v1936 = vrot.slane %v1892, %v1935
      %v1937 = vmul.f32 %v1927, %v1932
      %v1938 = vmul.f32 %v1927, %v1936
      %v1939 = vadd.f32 %v1923, %v1937
      %v1940 = vadd.f32 %v1924, %v1938
      %1941 = vset.pattern.permute.xlu0 35
      %1942 = vperm.xlu0 %1941, %v1321
      %v1943 = vpop.permute.xlu0 %1942
      %v1945 = vlaneseq
      %v1946 = vshrl.u32 %v1945, 7
      %v1947 = vsub.s32 3, %v1946
      %v1948 = vrot.slane %v1891, %v1947
      %v1949 = vlaneseq
      %v1950 = vshrl.u32 %v1949, 7
      %v1951 = vsub.s32 3, %v1950
      %v1952 = vrot.slane %v1892, %v1951
      %v1953 = vmul.f32 %v1943, %v1948
      %v1954 = vmul.f32 %v1943, %v1952
      %v1955 = vadd.f32 %v1939, %v1953
      %v1956 = vadd.f32 %v1940, %v1954
      %v1957 = vld [vmem:[%s10] sm:$0xf]
      %1959 = vset.pattern.permute.xlu0 0
      %1960 = vperm.xlu0 %1959, %v1957
      %v1961 = vpop.permute.xlu0 %1960
      %v1963 = vadd.f32 %v1955, %v1961
      %v1964 = vadd.f32 %v1956, %v1961
      %v1965 = vsel %vm1289, %v1963, 0.0
      %v1966 = vsel %vm1289, %v1964, 0.0
      %v1967 = vadd.f32 %v1965, %v1966
      %1968 = vadd.xlane.f32.xlu0 %v1967
      %v1969 = vpop.xlane.xlu0 %1968
      %v1970 = vmul.f32 %v1969, %v1295
      %v1971 = vsub.f32 %v1963, %v1970
      %v1972 = vsub.f32 %v1964, %v1970
      %v1973 = vmul.f32 %v1971, %v1971
      %v1974 = vmul.f32 %v1972, %v1972
      %v1975 = vsel %vm1289, %v1973, 0.0
      %v1976 = vsel %vm1289, %v1974, 0.0
      %v1977 = vadd.f32 %v1975, %v1976
      %1978 = vadd.xlane.f32.xlu0 %v1977
      %v1979 = vpop.xlane.xlu0 %1978
      %v1980 = vmul.f32 %v1979, %v1295
      %v1981 = vadd.f32 %v1980, 1e-05
      %v1982 = vrsqrt.pop %v1981
      %v1983 = vmul.f32 %v1971, %v1982
      %v1984 = vmul.f32 %v1972, %v1982
      %v1985 = vmax.f32 %v1983, 0.0
      %v1986 = vmax.f32 %v1984, 0.0
      %v1988 = vcombine.high %v490, %v490
      %1990 = vrot.lane.b32.xlu0 %v490, 17
      %v1991 = vpop.permute.xlu0 %1990
      %1992 = vrot.lane.b32.xlu0 %v1988, 17
      %v1993 = vpop.permute.xlu0 %1992
      %v1994 = vsel %vm501, %v1991, %v1993
      %v1995 = vsel %vm501, %v1993, %v1991
      %v1996 = vmul.f32 %v1995, %v507
      %v1997 = vmul.f32 %v1994, %v511
      %v1998 = vld [vmem:[%s3] sm:$0xf]
      %2000 = vset.pattern.permute.xlu0 0
      %2001 = vperm.xlu0 %2000, %v1998
      %v2002 = vpop.permute.xlu0 %2001
      %v2004 = vlaneseq
      %v2005 = vshrl.u32 %v2004, 7
      %v2006 = vsub.s32 0, %v2005
      %v2007 = vrot.slane %v1996, %v2006
      %v2008 = vlaneseq
      %v2009 = vshrl.u32 %v2008, 7
      %v2010 = vsub.s32 0, %v2009
      %v2011 = vrot.slane %v1997, %v2010
      %v2012 = vmul.f32 %v2002, %v2007
      %v2013 = vmul.f32 %v2002, %v2011
      %v2014 = vadd.f32 %v2012, 0.0
      %v2015 = vadd.f32 %v2013, 0.0
      %2016 = vset.pattern.permute.xlu0 1
      %2017 = vperm.xlu0 %2016, %v1998
      %v2018 = vpop.permute.xlu0 %2017
      %v2020 = vlaneseq
      %v2021 = vshrl.u32 %v2020, 7
      %v2022 = vsub.s32 1, %v2021
      %v2023 = vrot.slane %v1996, %v2022
      %v2024 = vlaneseq
      %v2025 = vshrl.u32 %v2024, 7
      %v2026 = vsub.s32 1, %v2025
      %v2027 = vrot.slane %v1997, %v2026
      %v2028 = vmul.f32 %v2018, %v2023
      %v2029 = vmul.f32 %v2018, %v2027
      %v2030 = vadd.f32 %v2014, %v2028
      %v2031 = vadd.f32 %v2015, %v2029
      %2032 = vset.pattern.permute.xlu0 2
      %2033 = vperm.xlu0 %2032, %v1998
      %v2034 = vpop.permute.xlu0 %2033
      %v2036 = vlaneseq
      %v2037 = vshrl.u32 %v2036, 7
      %v2038 = vsub.s32 2, %v2037
      %v2039 = vrot.slane %v1996, %v2038
      %v2040 = vlaneseq
      %v2041 = vshrl.u32 %v2040, 7
      %v2042 = vsub.s32 2, %v2041
      %v2043 = vrot.slane %v1997, %v2042
      %v2044 = vmul.f32 %v2034, %v2039
      %v2045 = vmul.f32 %v2034, %v2043
      %v2046 = vadd.f32 %v2030, %v2044
      %v2047 = vadd.f32 %v2031, %v2045
      %2048 = vset.pattern.permute.xlu0 3
      %2049 = vperm.xlu0 %2048, %v1998
      %v2050 = vpop.permute.xlu0 %2049
      %v2052 = vlaneseq
      %v2053 = vshrl.u32 %v2052, 7
      %v2054 = vsub.s32 3, %v2053
      %v2055 = vrot.slane %v1996, %v2054
      %v2056 = vlaneseq
      %v2057 = vshrl.u32 %v2056, 7
      %v2058 = vsub.s32 3, %v2057
      %v2059 = vrot.slane %v1997, %v2058
      %v2060 = vmul.f32 %v2050, %v2055
      %v2061 = vmul.f32 %v2050, %v2059
      %v2062 = vadd.f32 %v2046, %v2060
      %v2063 = vadd.f32 %v2047, %v2061
      %2064 = vrot.lane.b32.xlu0 %v490, 16
      %v2065 = vpop.permute.xlu0 %2064
      %2066 = vrot.lane.b32.xlu0 %v1988, 16
      %v2067 = vpop.permute.xlu0 %2066
      %v2068 = vsel %vm584, %v2065, %v2067
      %v2069 = vsel %vm584, %v2067, %v2065
      %v2070 = vmul.f32 %v2069, %v590
      %v2071 = vmul.f32 %v2068, %v594
      %v2072 = vld [vmem:[%s3] sm:$0xf]
      %2074 = vset.pattern.permute.xlu0 4
      %2075 = vperm.xlu0 %2074, %v2072
      %v2076 = vpop.permute.xlu0 %2075
      %v2078 = vlaneseq
      %v2079 = vshrl.u32 %v2078, 7
      %v2080 = vsub.s32 0, %v2079
      %v2081 = vrot.slane %v2070, %v2080
      %v2082 = vlaneseq
      %v2083 = vshrl.u32 %v2082, 7
      %v2084 = vsub.s32 0, %v2083
      %v2085 = vrot.slane %v2071, %v2084
      %v2086 = vmul.f32 %v2076, %v2081
      %v2087 = vmul.f32 %v2076, %v2085
      %v2088 = vadd.f32 %v2062, %v2086
      %v2089 = vadd.f32 %v2063, %v2087
      %2090 = vset.pattern.permute.xlu0 5
      %2091 = vperm.xlu0 %2090, %v2072
      %v2092 = vpop.permute.xlu0 %2091
      %v2094 = vlaneseq
      %v2095 = vshrl.u32 %v2094, 7
      %v2096 = vsub.s32 1, %v2095
      %v2097 = vrot.slane %v2070, %v2096
      %v2098 = vlaneseq
      %v2099 = vshrl.u32 %v2098, 7
      %v2100 = vsub.s32 1, %v2099
      %v2101 = vrot.slane %v2071, %v2100
      %v2102 = vmul.f32 %v2092, %v2097
      %v2103 = vmul.f32 %v2092, %v2101
      %v2104 = vadd.f32 %v2088, %v2102
      %v2105 = vadd.f32 %v2089, %v2103
      %2106 = vset.pattern.permute.xlu0 6
      %2107 = vperm.xlu0 %2106, %v2072
      %v2108 = vpop.permute.xlu0 %2107
      %v2110 = vlaneseq
      %v2111 = vshrl.u32 %v2110, 7
      %v2112 = vsub.s32 2, %v2111
      %v2113 = vrot.slane %v2070, %v2112
      %v2114 = vlaneseq
      %v2115 = vshrl.u32 %v2114, 7
      %v2116 = vsub.s32 2, %v2115
      %v2117 = vrot.slane %v2071, %v2116
      %v2118 = vmul.f32 %v2108, %v2113
      %v2119 = vmul.f32 %v2108, %v2117
      %v2120 = vadd.f32 %v2104, %v2118
      %v2121 = vadd.f32 %v2105, %v2119
      %2122 = vset.pattern.permute.xlu0 7
      %2123 = vperm.xlu0 %2122, %v2072
      %v2124 = vpop.permute.xlu0 %2123
      %v2126 = vlaneseq
      %v2127 = vshrl.u32 %v2126, 7
      %v2128 = vsub.s32 3, %v2127
      %v2129 = vrot.slane %v2070, %v2128
      %v2130 = vlaneseq
      %v2131 = vshrl.u32 %v2130, 7
      %v2132 = vsub.s32 3, %v2131
      %v2133 = vrot.slane %v2071, %v2132
      %v2134 = vmul.f32 %v2124, %v2129
      %v2135 = vmul.f32 %v2124, %v2133
      %v2136 = vadd.f32 %v2120, %v2134
      %v2137 = vadd.f32 %v2121, %v2135
      %2138 = vrot.lane.b32.xlu0 %v490, 15
      %v2139 = vpop.permute.xlu0 %2138
      %2140 = vrot.lane.b32.xlu0 %v1988, 15
      %v2141 = vpop.permute.xlu0 %2140
      %v2142 = vsel %vm667, %v2139, %v2141
      %v2143 = vsel %vm667, %v2141, %v2139
      %v2144 = vmul.f32 %v2143, %v673
      %v2145 = vmul.f32 %v2142, %v677
      %v2146 = vld [vmem:[%s3] sm:$0xf]
      %2148 = vset.pattern.permute.xlu0 8
      %2149 = vperm.xlu0 %2148, %v2146
      %v2150 = vpop.permute.xlu0 %2149
      %v2152 = vlaneseq
      %v2153 = vshrl.u32 %v2152, 7
      %v2154 = vsub.s32 0, %v2153
      %v2155 = vrot.slane %v2144, %v2154
      %v2156 = vlaneseq
      %v2157 = vshrl.u32 %v2156, 7
      %v2158 = vsub.s32 0, %v2157
      %v2159 = vrot.slane %v2145, %v2158
      %v2160 = vmul.f32 %v2150, %v2155
      %v2161 = vmul.f32 %v2150, %v2159
      %v2162 = vadd.f32 %v2136, %v2160
      %v2163 = vadd.f32 %v2137, %v2161
      %2164 = vset.pattern.permute.xlu0 9
      %2165 = vperm.xlu0 %2164, %v2146
      %v2166 = vpop.permute.xlu0 %2165
      %v2168 = vlaneseq
      %v2169 = vshrl.u32 %v2168, 7
      %v2170 = vsub.s32 1, %v2169
      %v2171 = vrot.slane %v2144, %v2170
      %v2172 = vlaneseq
      %v2173 = vshrl.u32 %v2172, 7
      %v2174 = vsub.s32 1, %v2173
      %v2175 = vrot.slane %v2145, %v2174
      %v2176 = vmul.f32 %v2166, %v2171
      %v2177 = vmul.f32 %v2166, %v2175
      %v2178 = vadd.f32 %v2162, %v2176
      %v2179 = vadd.f32 %v2163, %v2177
      %2180 = vset.pattern.permute.xlu0 10
      %2181 = vperm.xlu0 %2180, %v2146
      %v2182 = vpop.permute.xlu0 %2181
      %v2184 = vlaneseq
      %v2185 = vshrl.u32 %v2184, 7
      %v2186 = vsub.s32 2, %v2185
      %v2187 = vrot.slane %v2144, %v2186
      %v2188 = vlaneseq
      %v2189 = vshrl.u32 %v2188, 7
      %v2190 = vsub.s32 2, %v2189
      %v2191 = vrot.slane %v2145, %v2190
      %v2192 = vmul.f32 %v2182, %v2187
      %v2193 = vmul.f32 %v2182, %v2191
      %v2194 = vadd.f32 %v2178, %v2192
      %v2195 = vadd.f32 %v2179, %v2193
      %2196 = vset.pattern.permute.xlu0 11
      %2197 = vperm.xlu0 %2196, %v2146
      %v2198 = vpop.permute.xlu0 %2197
      %v2200 = vlaneseq
      %v2201 = vshrl.u32 %v2200, 7
      %v2202 = vsub.s32 3, %v2201
      %v2203 = vrot.slane %v2144, %v2202
      %v2204 = vlaneseq
      %v2205 = vshrl.u32 %v2204, 7
      %v2206 = vsub.s32 3, %v2205
      %v2207 = vrot.slane %v2145, %v2206
      %v2208 = vmul.f32 %v2198, %v2203
      %v2209 = vmul.f32 %v2198, %v2207
      %v2210 = vadd.f32 %v2194, %v2208
      %v2211 = vadd.f32 %v2195, %v2209
      %2212 = vrot.lane.b32.xlu0 %v490, 1
      %v2213 = vpop.permute.xlu0 %2212
      %2214 = vrot.lane.b32.xlu0 %v1988, 1
      %v2215 = vpop.permute.xlu0 %2214
      %v2216 = vsel %vm750, %v2213, %v2215
      %v2217 = vsel %vm750, %v2215, %v2213
      %v2218 = vmul.f32 %v2217, %v756
      %v2219 = vmul.f32 %v2216, %v760
      %v2220 = vld [vmem:[%s3] sm:$0xf]
      %2222 = vset.pattern.permute.xlu0 12
      %2223 = vperm.xlu0 %2222, %v2220
      %v2224 = vpop.permute.xlu0 %2223
      %v2226 = vlaneseq
      %v2227 = vshrl.u32 %v2226, 7
      %v2228 = vsub.s32 0, %v2227
      %v2229 = vrot.slane %v2218, %v2228
      %v2230 = vlaneseq
      %v2231 = vshrl.u32 %v2230, 7
      %v2232 = vsub.s32 0, %v2231
      %v2233 = vrot.slane %v2219, %v2232
      %v2234 = vmul.f32 %v2224, %v2229
      %v2235 = vmul.f32 %v2224, %v2233
      %v2236 = vadd.f32 %v2210, %v2234
      %v2237 = vadd.f32 %v2211, %v2235
      %2238 = vset.pattern.permute.xlu0 13
      %2239 = vperm.xlu0 %2238, %v2220
      %v2240 = vpop.permute.xlu0 %2239
      %v2242 = vlaneseq
      %v2243 = vshrl.u32 %v2242, 7
      %v2244 = vsub.s32 1, %v2243
      %v2245 = vrot.slane %v2218, %v2244
      %v2246 = vlaneseq
      %v2247 = vshrl.u32 %v2246, 7
      %v2248 = vsub.s32 1, %v2247
      %v2249 = vrot.slane %v2219, %v2248
      %v2250 = vmul.f32 %v2240, %v2245
      %v2251 = vmul.f32 %v2240, %v2249
      %v2252 = vadd.f32 %v2236, %v2250
      %v2253 = vadd.f32 %v2237, %v2251
      %2254 = vset.pattern.permute.xlu0 14
      %2255 = vperm.xlu0 %2254, %v2220
      %v2256 = vpop.permute.xlu0 %2255
      %v2258 = vlaneseq
      %v2259 = vshrl.u32 %v2258, 7
      %v2260 = vsub.s32 2, %v2259
      %v2261 = vrot.slane %v2218, %v2260
      %v2262 = vlaneseq
      %v2263 = vshrl.u32 %v2262, 7
      %v2264 = vsub.s32 2, %v2263
      %v2265 = vrot.slane %v2219, %v2264
      %v2266 = vmul.f32 %v2256, %v2261
      %v2267 = vmul.f32 %v2256, %v2265
      %v2268 = vadd.f32 %v2252, %v2266
      %v2269 = vadd.f32 %v2253, %v2267
      %2270 = vset.pattern.permute.xlu0 15
      %2271 = vperm.xlu0 %2270, %v2220
      %v2272 = vpop.permute.xlu0 %2271
      %v2274 = vlaneseq
      %v2275 = vshrl.u32 %v2274, 7
      %v2276 = vsub.s32 3, %v2275
      %v2277 = vrot.slane %v2218, %v2276
      %v2278 = vlaneseq
      %v2279 = vshrl.u32 %v2278, 7
      %v2280 = vsub.s32 3, %v2279
      %v2281 = vrot.slane %v2219, %v2280
      %v2282 = vmul.f32 %v2272, %v2277
      %v2283 = vmul.f32 %v2272, %v2281
      %v2284 = vadd.f32 %v2268, %v2282
      %v2285 = vadd.f32 %v2269, %v2283
      %v2286 = vmul.f32 %v490, %v839
      %v2287 = vld [vmem:[%s3] sm:$0xf]
      %2289 = vset.pattern.permute.xlu0 16
      %2290 = vperm.xlu0 %2289, %v2287
      %v2291 = vpop.permute.xlu0 %2290
      %v2294 = vlaneseq
      %v2295 = vshrl.u32 %v2294, 7
      %v2296 = vsub.s32 0, %v2295
      %v2297 = vrot.slane %v2286, %v2296
      %v2298 = vlaneseq
      %v2299 = vshrl.u32 %v2298, 7
      %v2300 = vsub.s32 4, %v2299
      %v2301 = vrot.slane %v2286, %v2300
      %v2304 = vlaneseq
      %v2305 = vshrl.u32 %v2304, 7
      %v2306 = vsub.s32 0, %v2305
      %v2307 = vrot.slane %v2297, %v2306
      %v2308 = vlaneseq
      %v2309 = vshrl.u32 %v2308, 7
      %v2310 = vsub.s32 0, %v2309
      %v2311 = vrot.slane %v2301, %v2310
      %v2312 = vmul.f32 %v2291, %v2307
      %v2313 = vmul.f32 %v2291, %v2311
      %v2314 = vadd.f32 %v2284, %v2312
      %v2315 = vadd.f32 %v2285, %v2313
      %2316 = vset.pattern.permute.xlu0 17
      %2317 = vperm.xlu0 %2316, %v2287
      %v2318 = vpop.permute.xlu0 %2317
      %v2320 = vlaneseq
      %v2321 = vshrl.u32 %v2320, 7
      %v2322 = vsub.s32 1, %v2321
      %v2323 = vrot.slane %v2286, %v2322
      %v2324 = vlaneseq
      %v2325 = vshrl.u32 %v2324, 7
      %v2326 = vsub.s32 5, %v2325
      %v2327 = vrot.slane %v2286, %v2326
      %v2330 = vlaneseq
      %v2331 = vshrl.u32 %v2330, 7
      %v2332 = vsub.s32 1, %v2331
      %v2333 = vrot.slane %v2323, %v2332
      %v2334 = vlaneseq
      %v2335 = vshrl.u32 %v2334, 7
      %v2336 = vsub.s32 1, %v2335
      %v2337 = vrot.slane %v2327, %v2336
      %v2338 = vmul.f32 %v2318, %v2333
      %v2339 = vmul.f32 %v2318, %v2337
      %v2340 = vadd.f32 %v2314, %v2338
      %v2341 = vadd.f32 %v2315, %v2339
      %2342 = vset.pattern.permute.xlu0 18
      %2343 = vperm.xlu0 %2342, %v2287
      %v2344 = vpop.permute.xlu0 %2343
      %v2346 = vlaneseq
      %v2347 = vshrl.u32 %v2346, 7
      %v2348 = vsub.s32 2, %v2347
      %v2349 = vrot.slane %v2286, %v2348
      %v2350 = vlaneseq
      %v2351 = vshrl.u32 %v2350, 7
      %v2352 = vsub.s32 6, %v2351
      %v2353 = vrot.slane %v2286, %v2352
      %v2356 = vlaneseq
      %v2357 = vshrl.u32 %v2356, 7
      %v2358 = vsub.s32 2, %v2357
      %v2359 = vrot.slane %v2349, %v2358
      %v2360 = vlaneseq
      %v2361 = vshrl.u32 %v2360, 7
      %v2362 = vsub.s32 2, %v2361
      %v2363 = vrot.slane %v2353, %v2362
      %v2364 = vmul.f32 %v2344, %v2359
      %v2365 = vmul.f32 %v2344, %v2363
      %v2366 = vadd.f32 %v2340, %v2364
      %v2367 = vadd.f32 %v2341, %v2365
      %2368 = vset.pattern.permute.xlu0 19
      %2369 = vperm.xlu0 %2368, %v2287
      %v2370 = vpop.permute.xlu0 %2369
      %v2372 = vlaneseq
      %v2373 = vshrl.u32 %v2372, 7
      %v2374 = vsub.s32 3, %v2373
      %v2375 = vrot.slane %v2286, %v2374
      %v2376 = vlaneseq
      %v2377 = vshrl.u32 %v2376, 7
      %v2378 = vsub.s32 7, %v2377
      %v2379 = vrot.slane %v2286, %v2378
      %v2382 = vlaneseq
      %v2383 = vshrl.u32 %v2382, 7
      %v2384 = vsub.s32 3, %v2383
      %v2385 = vrot.slane %v2375, %v2384
      %v2386 = vlaneseq
      %v2387 = vshrl.u32 %v2386, 7
      %v2388 = vsub.s32 3, %v2387
      %v2389 = vrot.slane %v2379, %v2388
      %v2390 = vmul.f32 %v2370, %v2385
      %v2391 = vmul.f32 %v2370, %v2389
      %v2392 = vadd.f32 %v2366, %v2390
      %v2393 = vadd.f32 %v2367, %v2391
      %2394 = vrot.lane.b32.xlu0 %v490, 127
      %v2395 = vpop.permute.xlu0 %2394
      %2396 = vrot.lane.b32.xlu0 %v1988, 127
      %v2397 = vpop.permute.xlu0 %2396
      %v2398 = vsel %vm953, %v2395, %v2397
      %v2399 = vsel %vm953, %v2397, %v2395
      %v2400 = vmul.f32 %v2398, %v959
      %v2401 = vmul.f32 %v2399, %v963
      %v2402 = vld [vmem:[%s3] sm:$0xf]
      %2404 = vset.pattern.permute.xlu0 20
      %2405 = vperm.xlu0 %2404, %v2402
      %v2406 = vpop.permute.xlu0 %2405
      %v2408 = vlaneseq
      %v2409 = vshrl.u32 %v2408, 7
      %v2410 = vsub.s32 0, %v2409
      %v2411 = vrot.slane %v2400, %v2410
      %v2412 = vlaneseq
      %v2413 = vshrl.u32 %v2412, 7
      %v2414 = vsub.s32 0, %v2413
      %v2415 = vrot.slane %v2401, %v2414
      %v2416 = vmul.f32 %v2406, %v2411
      %v2417 = vmul.f32 %v2406, %v2415
      %v2418 = vadd.f32 %v2392, %v2416
      %v2419 = vadd.f32 %v2393, %v2417
      %2420 = vset.pattern.permute.xlu0 21
      %2421 = vperm.xlu0 %2420, %v2402
      %v2422 = vpop.permute.xlu0 %2421
      %v2424 = vlaneseq
      %v2425 = vshrl.u32 %v2424, 7
      %v2426 = vsub.s32 1, %v2425
      %v2427 = vrot.slane %v2400, %v2426
      %v2428 = vlaneseq
      %v2429 = vshrl.u32 %v2428, 7
      %v2430 = vsub.s32 1, %v2429
      %v2431 = vrot.slane %v2401, %v2430
      %v2432 = vmul.f32 %v2422, %v2427
      %v2433 = vmul.f32 %v2422, %v2431
      %v2434 = vadd.f32 %v2418, %v2432
      %v2435 = vadd.f32 %v2419, %v2433
      %2436 = vset.pattern.permute.xlu0 22
      %2437 = vperm.xlu0 %2436, %v2402
      %v2438 = vpop.permute.xlu0 %2437
      %v2440 = vlaneseq
      %v2441 = vshrl.u32 %v2440, 7
      %v2442 = vsub.s32 2, %v2441
      %v2443 = vrot.slane %v2400, %v2442
      %v2444 = vlaneseq
      %v2445 = vshrl.u32 %v2444, 7
      %v2446 = vsub.s32 2, %v2445
      %v2447 = vrot.slane %v2401, %v2446
      %v2448 = vmul.f32 %v2438, %v2443
      %v2449 = vmul.f32 %v2438, %v2447
      %v2450 = vadd.f32 %v2434, %v2448
      %v2451 = vadd.f32 %v2435, %v2449
      %2452 = vset.pattern.permute.xlu0 23
      %2453 = vperm.xlu0 %2452, %v2402
      %v2454 = vpop.permute.xlu0 %2453
      %v2456 = vlaneseq
      %v2457 = vshrl.u32 %v2456, 7
      %v2458 = vsub.s32 3, %v2457
      %v2459 = vrot.slane %v2400, %v2458
      %v2460 = vlaneseq
      %v2461 = vshrl.u32 %v2460, 7
      %v2462 = vsub.s32 3, %v2461
      %v2463 = vrot.slane %v2401, %v2462
      %v2464 = vmul.f32 %v2454, %v2459
      %v2465 = vmul.f32 %v2454, %v2463
      %v2466 = vadd.f32 %v2450, %v2464
      %v2467 = vadd.f32 %v2451, %v2465
      %2468 = vrot.lane.b32.xlu0 %v490, 113
      %v2469 = vpop.permute.xlu0 %2468
      %2470 = vrot.lane.b32.xlu0 %v1988, 113
      %v2471 = vpop.permute.xlu0 %2470
      %v2472 = vsel %vm1036, %v2469, %v2471
      %v2473 = vsel %vm1036, %v2471, %v2469
      %v2474 = vmul.f32 %v2472, %v1042
      %v2475 = vmul.f32 %v2473, %v1046
      %v2476 = vld [vmem:[%s3] sm:$0xf]
      %2478 = vset.pattern.permute.xlu0 24
      %2479 = vperm.xlu0 %2478, %v2476
      %v2480 = vpop.permute.xlu0 %2479
      %v2482 = vlaneseq
      %v2483 = vshrl.u32 %v2482, 7
      %v2484 = vsub.s32 0, %v2483
      %v2485 = vrot.slane %v2474, %v2484
      %v2486 = vlaneseq
      %v2487 = vshrl.u32 %v2486, 7
      %v2488 = vsub.s32 0, %v2487
      %v2489 = vrot.slane %v2475, %v2488
      %v2490 = vmul.f32 %v2480, %v2485
      %v2491 = vmul.f32 %v2480, %v2489
      %v2492 = vadd.f32 %v2466, %v2490
      %v2493 = vadd.f32 %v2467, %v2491
      %2494 = vset.pattern.permute.xlu0 25
      %2495 = vperm.xlu0 %2494, %v2476
      %v2496 = vpop.permute.xlu0 %2495
      %v2498 = vlaneseq
      %v2499 = vshrl.u32 %v2498, 7
      %v2500 = vsub.s32 1, %v2499
      %v2501 = vrot.slane %v2474, %v2500
      %v2502 = vlaneseq
      %v2503 = vshrl.u32 %v2502, 7
      %v2504 = vsub.s32 1, %v2503
      %v2505 = vrot.slane %v2475, %v2504
      %v2506 = vmul.f32 %v2496, %v2501
      %v2507 = vmul.f32 %v2496, %v2505
      %v2508 = vadd.f32 %v2492, %v2506
      %v2509 = vadd.f32 %v2493, %v2507
      %2510 = vset.pattern.permute.xlu0 26
      %2511 = vperm.xlu0 %2510, %v2476
      %v2512 = vpop.permute.xlu0 %2511
      %v2514 = vlaneseq
      %v2515 = vshrl.u32 %v2514, 7
      %v2516 = vsub.s32 2, %v2515
      %v2517 = vrot.slane %v2474, %v2516
      %v2518 = vlaneseq
      %v2519 = vshrl.u32 %v2518, 7
      %v2520 = vsub.s32 2, %v2519
      %v2521 = vrot.slane %v2475, %v2520
      %v2522 = vmul.f32 %v2512, %v2517
      %v2523 = vmul.f32 %v2512, %v2521
      %v2524 = vadd.f32 %v2508, %v2522
      %v2525 = vadd.f32 %v2509, %v2523
      %2526 = vset.pattern.permute.xlu0 27
      %2527 = vperm.xlu0 %2526, %v2476
      %v2528 = vpop.permute.xlu0 %2527
      %v2530 = vlaneseq
      %v2531 = vshrl.u32 %v2530, 7
      %v2532 = vsub.s32 3, %v2531
      %v2533 = vrot.slane %v2474, %v2532
      %v2534 = vlaneseq
      %v2535 = vshrl.u32 %v2534, 7
      %v2536 = vsub.s32 3, %v2535
      %v2537 = vrot.slane %v2475, %v2536
      %v2538 = vmul.f32 %v2528, %v2533
      %v2539 = vmul.f32 %v2528, %v2537
      %v2540 = vadd.f32 %v2524, %v2538
      %v2541 = vadd.f32 %v2525, %v2539
      %2542 = vrot.lane.b32.xlu0 %v490, 112
      %v2543 = vpop.permute.xlu0 %2542
      %2544 = vrot.lane.b32.xlu0 %v1988, 112
      %v2545 = vpop.permute.xlu0 %2544
      %v2546 = vsel %vm1119, %v2543, %v2545
      %v2547 = vsel %vm1119, %v2545, %v2543
      %v2548 = vmul.f32 %v2546, %v1125
      %v2549 = vmul.f32 %v2547, %v1129
      %v2550 = vld [vmem:[%s3] sm:$0xf]
      %2552 = vset.pattern.permute.xlu0 28
      %2553 = vperm.xlu0 %2552, %v2550
      %v2554 = vpop.permute.xlu0 %2553
      %v2556 = vlaneseq
      %v2557 = vshrl.u32 %v2556, 7
      %v2558 = vsub.s32 0, %v2557
      %v2559 = vrot.slane %v2548, %v2558
      %v2560 = vlaneseq
      %v2561 = vshrl.u32 %v2560, 7
      %v2562 = vsub.s32 0, %v2561
      %v2563 = vrot.slane %v2549, %v2562
      %v2564 = vmul.f32 %v2554, %v2559
      %v2565 = vmul.f32 %v2554, %v2563
      %v2566 = vadd.f32 %v2540, %v2564
      %v2567 = vadd.f32 %v2541, %v2565
      %2568 = vset.pattern.permute.xlu0 29
      %2569 = vperm.xlu0 %2568, %v2550
      %v2570 = vpop.permute.xlu0 %2569
      %v2572 = vlaneseq
      %v2573 = vshrl.u32 %v2572, 7
      %v2574 = vsub.s32 1, %v2573
      %v2575 = vrot.slane %v2548, %v2574
      %v2576 = vlaneseq
      %v2577 = vshrl.u32 %v2576, 7
      %v2578 = vsub.s32 1, %v2577
      %v2579 = vrot.slane %v2549, %v2578
      %v2580 = vmul.f32 %v2570, %v2575
      %v2581 = vmul.f32 %v2570, %v2579
      %v2582 = vadd.f32 %v2566, %v2580
      %v2583 = vadd.f32 %v2567, %v2581
      %2584 = vset.pattern.permute.xlu0 30
      %2585 = vperm.xlu0 %2584, %v2550
      %v2586 = vpop.permute.xlu0 %2585
      %v2588 = vlaneseq
      %v2589 = vshrl.u32 %v2588, 7
      %v2590 = vsub.s32 2, %v2589
      %v2591 = vrot.slane %v2548, %v2590
      %v2592 = vlaneseq
      %v2593 = vshrl.u32 %v2592, 7
      %v2594 = vsub.s32 2, %v2593
      %v2595 = vrot.slane %v2549, %v2594
      %v2596 = vmul.f32 %v2586, %v2591
      %v2597 = vmul.f32 %v2586, %v2595
      %v2598 = vadd.f32 %v2582, %v2596
      %v2599 = vadd.f32 %v2583, %v2597
      %2600 = vset.pattern.permute.xlu0 31
      %2601 = vperm.xlu0 %2600, %v2550
      %v2602 = vpop.permute.xlu0 %2601
      %v2604 = vlaneseq
      %v2605 = vshrl.u32 %v2604, 7
      %v2606 = vsub.s32 3, %v2605
      %v2607 = vrot.slane %v2548, %v2606
      %v2608 = vlaneseq
      %v2609 = vshrl.u32 %v2608, 7
      %v2610 = vsub.s32 3, %v2609
      %v2611 = vrot.slane %v2549, %v2610
      %v2612 = vmul.f32 %v2602, %v2607
      %v2613 = vmul.f32 %v2602, %v2611
      %v2614 = vadd.f32 %v2598, %v2612
      %v2615 = vadd.f32 %v2599, %v2613
      %2616 = vrot.lane.b32.xlu0 %v490, 111
      %v2617 = vpop.permute.xlu0 %2616
      %2618 = vrot.lane.b32.xlu0 %v1988, 111
      %v2619 = vpop.permute.xlu0 %2618
      %v2620 = vsel %vm1202, %v2617, %v2619
      %v2621 = vsel %vm1202, %v2619, %v2617
      %v2622 = vmul.f32 %v2620, %v1208
      %v2623 = vmul.f32 %v2621, %v1212
      %v2624 = vld [vmem:[%s3] sm:$0xf]
      %2626 = vset.pattern.permute.xlu0 32
      %2627 = vperm.xlu0 %2626, %v2624
      %v2628 = vpop.permute.xlu0 %2627
      %v2630 = vlaneseq
      %v2631 = vshrl.u32 %v2630, 7
      %v2632 = vsub.s32 0, %v2631
      %v2633 = vrot.slane %v2622, %v2632
      %v2634 = vlaneseq
      %v2635 = vshrl.u32 %v2634, 7
      %v2636 = vsub.s32 0, %v2635
      %v2637 = vrot.slane %v2623, %v2636
      %v2638 = vmul.f32 %v2628, %v2633
      %v2639 = vmul.f32 %v2628, %v2637
      %v2640 = vadd.f32 %v2614, %v2638
      %v2641 = vadd.f32 %v2615, %v2639
      %2642 = vset.pattern.permute.xlu0 33
      %2643 = vperm.xlu0 %2642, %v2624
      %v2644 = vpop.permute.xlu0 %2643
      %v2646 = vlaneseq
      %v2647 = vshrl.u32 %v2646, 7
      %v2648 = vsub.s32 1, %v2647
      %v2649 = vrot.slane %v2622, %v2648
      %v2650 = vlaneseq
      %v2651 = vshrl.u32 %v2650, 7
      %v2652 = vsub.s32 1, %v2651
      %v2653 = vrot.slane %v2623, %v2652
      %v2654 = vmul.f32 %v2644, %v2649
      %v2655 = vmul.f32 %v2644, %v2653
      %v2656 = vadd.f32 %v2640, %v2654
      %v2657 = vadd.f32 %v2641, %v2655
      %2658 = vset.pattern.permute.xlu0 34
      %2659 = vperm.xlu0 %2658, %v2624
      %v2660 = vpop.permute.xlu0 %2659
      %v2662 = vlaneseq
      %v2663 = vshrl.u32 %v2662, 7
      %v2664 = vsub.s32 2, %v2663
      %v2665 = vrot.slane %v2622, %v2664
      %v2666 = vlaneseq
      %v2667 = vshrl.u32 %v2666, 7
      %v2668 = vsub.s32 2, %v2667
      %v2669 = vrot.slane %v2623, %v2668
      %v2670 = vmul.f32 %v2660, %v2665
      %v2671 = vmul.f32 %v2660, %v2669
      %v2672 = vadd.f32 %v2656, %v2670
      %v2673 = vadd.f32 %v2657, %v2671
      %2674 = vset.pattern.permute.xlu0 35
      %2675 = vperm.xlu0 %2674, %v2624
      %v2676 = vpop.permute.xlu0 %2675
      %v2678 = vlaneseq
      %v2679 = vshrl.u32 %v2678, 7
      %v2680 = vsub.s32 3, %v2679
      %v2681 = vrot.slane %v2622, %v2680
      %v2682 = vlaneseq
      %v2683 = vshrl.u32 %v2682, 7
      %v2684 = vsub.s32 3, %v2683
      %v2685 = vrot.slane %v2623, %v2684
      %v2686 = vmul.f32 %v2676, %v2681
      %v2687 = vmul.f32 %v2676, %v2685
      %v2688 = vadd.f32 %v2672, %v2686
      %v2689 = vadd.f32 %v2673, %v2687
      %v2690 = vld [vmem:[%s4] sm:$0xf]
      %2692 = vset.pattern.permute.xlu0 0
      %2693 = vperm.xlu0 %2692, %v2690
      %v2694 = vpop.permute.xlu0 %2693
      %v2696 = vadd.f32 %v2688, %v2694
      %v2697 = vadd.f32 %v2689, %v2694
      %v2698 = vsel %vm1289, %v2696, 0.0
      %v2699 = vsel %vm1289, %v2697, 0.0
      %v2700 = vadd.f32 %v2698, %v2699
      %2701 = vadd.xlane.f32.xlu0 %v2700
      %v2702 = vpop.xlane.xlu0 %2701
      %v2703 = vmul.f32 %v2702, %v1295
      %v2704 = vsub.f32 %v2696, %v2703
      %v2705 = vsub.f32 %v2697, %v2703
      %v2706 = vmul.f32 %v2704, %v2704
      %v2707 = vmul.f32 %v2705, %v2705
      %v2708 = vsel %vm1289, %v2706, 0.0
      %v2709 = vsel %vm1289, %v2707, 0.0
      %v2710 = vadd.f32 %v2708, %v2709
      %2711 = vadd.xlane.f32.xlu0 %v2710
      %v2712 = vpop.xlane.xlu0 %2711
      %v2713 = vmul.f32 %v2712, %v1295
      %v2714 = vadd.f32 %v2713, 1e-05
      %v2715 = vrsqrt.pop %v2714
      %v2716 = vmul.f32 %v2704, %v2715
      %v2717 = vmul.f32 %v2705, %v2715
      %v2718 = vmax.f32 %v2716, 0.0
      %v2719 = vmax.f32 %v2717, 0.0
      %2720 = vrot.lane.b32.xlu0 %v2718, 17
      %v2721 = vpop.permute.xlu0 %2720
      %2722 = vrot.lane.b32.xlu0 %v2719, 17
      %v2723 = vpop.permute.xlu0 %2722
      %v2724 = vsel %vm501, %v2721, %v2723
      %v2725 = vsel %vm501, %v2723, %v2721
      %v2726 = vmul.f32 %v2725, %v507
      %v2727 = vmul.f32 %v2724, %v511
      %v2728 = vld [vmem:[%s5] sm:$0xf]
      %2730 = vset.pattern.permute.xlu0 0
      %2731 = vperm.xlu0 %2730, %v2728
      %v2732 = vpop.permute.xlu0 %2731
      %v2734 = vlaneseq
      %v2735 = vshrl.u32 %v2734, 7
      %v2736 = vsub.s32 0, %v2735
      %v2737 = vrot.slane %v2726, %v2736
      %v2738 = vlaneseq
      %v2739 = vshrl.u32 %v2738, 7
      %v2740 = vsub.s32 0, %v2739
      %v2741 = vrot.slane %v2727, %v2740
      %v2742 = vmul.f32 %v2732, %v2737
      %v2743 = vmul.f32 %v2732, %v2741
      %v2744 = vadd.f32 %v2742, 0.0
      %v2745 = vadd.f32 %v2743, 0.0
      %2746 = vset.pattern.permute.xlu0 1
      %2747 = vperm.xlu0 %2746, %v2728
      %v2748 = vpop.permute.xlu0 %2747
      %v2750 = vlaneseq
      %v2751 = vshrl.u32 %v2750, 7
      %v2752 = vsub.s32 1, %v2751
      %v2753 = vrot.slane %v2726, %v2752
      %v2754 = vlaneseq
      %v2755 = vshrl.u32 %v2754, 7
      %v2756 = vsub.s32 1, %v2755
      %v2757 = vrot.slane %v2727, %v2756
      %v2758 = vmul.f32 %v2748, %v2753
      %v2759 = vmul.f32 %v2748, %v2757
      %v2760 = vadd.f32 %v2744, %v2758
      %v2761 = vadd.f32 %v2745, %v2759
      %2762 = vset.pattern.permute.xlu0 2
      %2763 = vperm.xlu0 %2762, %v2728
      %v2764 = vpop.permute.xlu0 %2763
      %v2766 = vlaneseq
      %v2767 = vshrl.u32 %v2766, 7
      %v2768 = vsub.s32 2, %v2767
      %v2769 = vrot.slane %v2726, %v2768
      %v2770 = vlaneseq
      %v2771 = vshrl.u32 %v2770, 7
      %v2772 = vsub.s32 2, %v2771
      %v2773 = vrot.slane %v2727, %v2772
      %v2774 = vmul.f32 %v2764, %v2769
      %v2775 = vmul.f32 %v2764, %v2773
      %v2776 = vadd.f32 %v2760, %v2774
      %v2777 = vadd.f32 %v2761, %v2775
      %2778 = vset.pattern.permute.xlu0 3
      %2779 = vperm.xlu0 %2778, %v2728
      %v2780 = vpop.permute.xlu0 %2779
      %v2782 = vlaneseq
      %v2783 = vshrl.u32 %v2782, 7
      %v2784 = vsub.s32 3, %v2783
      %v2785 = vrot.slane %v2726, %v2784
      %v2786 = vlaneseq
      %v2787 = vshrl.u32 %v2786, 7
      %v2788 = vsub.s32 3, %v2787
      %v2789 = vrot.slane %v2727, %v2788
      %v2790 = vmul.f32 %v2780, %v2785
      %v2791 = vmul.f32 %v2780, %v2789
      %v2792 = vadd.f32 %v2776, %v2790
      %v2793 = vadd.f32 %v2777, %v2791
      %2794 = vrot.lane.b32.xlu0 %v2718, 16
      %v2795 = vpop.permute.xlu0 %2794
      %2796 = vrot.lane.b32.xlu0 %v2719, 16
      %v2797 = vpop.permute.xlu0 %2796
      %v2798 = vsel %vm584, %v2795, %v2797
      %v2799 = vsel %vm584, %v2797, %v2795
      %v2800 = vmul.f32 %v2799, %v590
      %v2801 = vmul.f32 %v2798, %v594
      %2802 = vset.pattern.permute.xlu0 4
      %2803 = vperm.xlu0 %2802, %v2728
      %v2804 = vpop.permute.xlu0 %2803
      %v2806 = vlaneseq
      %v2807 = vshrl.u32 %v2806, 7
      %v2808 = vsub.s32 0, %v2807
      %v2809 = vrot.slane %v2800, %v2808
      %v2810 = vlaneseq
      %v2811 = vshrl.u32 %v2810, 7
      %v2812 = vsub.s32 0, %v2811
      %v2813 = vrot.slane %v2801, %v2812
      %v2814 = vmul.f32 %v2804, %v2809
      %v2815 = vmul.f32 %v2804, %v2813
      %v2816 = vadd.f32 %v2792, %v2814
      %v2817 = vadd.f32 %v2793, %v2815
      %2818 = vset.pattern.permute.xlu0 5
      %2819 = vperm.xlu0 %2818, %v2728
      %v2820 = vpop.permute.xlu0 %2819
      %v2822 = vlaneseq
      %v2823 = vshrl.u32 %v2822, 7
      %v2824 = vsub.s32 1, %v2823
      %v2825 = vrot.slane %v2800, %v2824
      %v2826 = vlaneseq
      %v2827 = vshrl.u32 %v2826, 7
      %v2828 = vsub.s32 1, %v2827
      %v2829 = vrot.slane %v2801, %v2828
      %v2830 = vmul.f32 %v2820, %v2825
      %v2831 = vmul.f32 %v2820, %v2829
      %v2832 = vadd.f32 %v2816, %v2830
      %v2833 = vadd.f32 %v2817, %v2831
      %2834 = vset.pattern.permute.xlu0 6
      %2835 = vperm.xlu0 %2834, %v2728
      %v2836 = vpop.permute.xlu0 %2835
      %v2838 = vlaneseq
      %v2839 = vshrl.u32 %v2838, 7
      %v2840 = vsub.s32 2, %v2839
      %v2841 = vrot.slane %v2800, %v2840
      %v2842 = vlaneseq
      %v2843 = vshrl.u32 %v2842, 7
      %v2844 = vsub.s32 2, %v2843
      %v2845 = vrot.slane %v2801, %v2844
      %v2846 = vmul.f32 %v2836, %v2841
      %v2847 = vmul.f32 %v2836, %v2845
      %v2848 = vadd.f32 %v2832, %v2846
      %v2849 = vadd.f32 %v2833, %v2847
      %2850 = vset.pattern.permute.xlu0 7
      %2851 = vperm.xlu0 %2850, %v2728
      %v2852 = vpop.permute.xlu0 %2851
      %v2854 = vlaneseq
      %v2855 = vshrl.u32 %v2854, 7
      %v2856 = vsub.s32 3, %v2855
      %v2857 = vrot.slane %v2800, %v2856
      %v2858 = vlaneseq
      %v2859 = vshrl.u32 %v2858, 7
      %v2860 = vsub.s32 3, %v2859
      %v2861 = vrot.slane %v2801, %v2860
      %v2862 = vmul.f32 %v2852, %v2857
      %v2863 = vmul.f32 %v2852, %v2861
      %v2864 = vadd.f32 %v2848, %v2862
      %v2865 = vadd.f32 %v2849, %v2863
      %2866 = vrot.lane.b32.xlu0 %v2718, 15
      %v2867 = vpop.permute.xlu0 %2866
      %2868 = vrot.lane.b32.xlu0 %v2719, 15
      %v2869 = vpop.permute.xlu0 %2868
      %v2870 = vsel %vm667, %v2867, %v2869
      %v2871 = vsel %vm667, %v2869, %v2867
      %v2872 = vmul.f32 %v2871, %v673
      %v2873 = vmul.f32 %v2870, %v677
      %2874 = vset.pattern.permute.xlu0 8
      %2875 = vperm.xlu0 %2874, %v2728
      %v2876 = vpop.permute.xlu0 %2875
      %v2878 = vlaneseq
      %v2879 = vshrl.u32 %v2878, 7
      %v2880 = vsub.s32 0, %v2879
      %v2881 = vrot.slane %v2872, %v2880
      %v2882 = vlaneseq
      %v2883 = vshrl.u32 %v2882, 7
      %v2884 = vsub.s32 0, %v2883
      %v2885 = vrot.slane %v2873, %v2884
      %v2886 = vmul.f32 %v2876, %v2881
      %v2887 = vmul.f32 %v2876, %v2885
      %v2888 = vadd.f32 %v2864, %v2886
      %v2889 = vadd.f32 %v2865, %v2887
      %2890 = vset.pattern.permute.xlu0 9
      %2891 = vperm.xlu0 %2890, %v2728
      %v2892 = vpop.permute.xlu0 %2891
      %v2894 = vlaneseq
      %v2895 = vshrl.u32 %v2894, 7
      %v2896 = vsub.s32 1, %v2895
      %v2897 = vrot.slane %v2872, %v2896
      %v2898 = vlaneseq
      %v2899 = vshrl.u32 %v2898, 7
      %v2900 = vsub.s32 1, %v2899
      %v2901 = vrot.slane %v2873, %v2900
      %v2902 = vmul.f32 %v2892, %v2897
      %v2903 = vmul.f32 %v2892, %v2901
      %v2904 = vadd.f32 %v2888, %v2902
      %v2905 = vadd.f32 %v2889, %v2903
      %2906 = vset.pattern.permute.xlu0 10
      %2907 = vperm.xlu0 %2906, %v2728
      %v2908 = vpop.permute.xlu0 %2907
      %v2910 = vlaneseq
      %v2911 = vshrl.u32 %v2910, 7
      %v2912 = vsub.s32 2, %v2911
      %v2913 = vrot.slane %v2872, %v2912
      %v2914 = vlaneseq
      %v2915 = vshrl.u32 %v2914, 7
      %v2916 = vsub.s32 2, %v2915
      %v2917 = vrot.slane %v2873, %v2916
      %v2918 = vmul.f32 %v2908, %v2913
      %v2919 = vmul.f32 %v2908, %v2917
      %v2920 = vadd.f32 %v2904, %v2918
      %v2921 = vadd.f32 %v2905, %v2919
      %2922 = vset.pattern.permute.xlu0 11
      %2923 = vperm.xlu0 %2922, %v2728
      %v2924 = vpop.permute.xlu0 %2923
      %v2926 = vlaneseq
      %v2927 = vshrl.u32 %v2926, 7
      %v2928 = vsub.s32 3, %v2927
      %v2929 = vrot.slane %v2872, %v2928
      %v2930 = vlaneseq
      %v2931 = vshrl.u32 %v2930, 7
      %v2932 = vsub.s32 3, %v2931
      %v2933 = vrot.slane %v2873, %v2932
      %v2934 = vmul.f32 %v2924, %v2929
      %v2935 = vmul.f32 %v2924, %v2933
      %v2936 = vadd.f32 %v2920, %v2934
      %v2937 = vadd.f32 %v2921, %v2935
      %2938 = vrot.lane.b32.xlu0 %v2718, 1
      %v2939 = vpop.permute.xlu0 %2938
      %2940 = vrot.lane.b32.xlu0 %v2719, 1
      %v2941 = vpop.permute.xlu0 %2940
      %v2942 = vsel %vm750, %v2939, %v2941
      %v2943 = vsel %vm750, %v2941, %v2939
      %v2944 = vmul.f32 %v2943, %v756
      %v2945 = vmul.f32 %v2942, %v760
      %2946 = vset.pattern.permute.xlu0 12
      %2947 = vperm.xlu0 %2946, %v2728
      %v2948 = vpop.permute.xlu0 %2947
      %v2950 = vlaneseq
      %v2951 = vshrl.u32 %v2950, 7
      %v2952 = vsub.s32 0, %v2951
      %v2953 = vrot.slane %v2944, %v2952
      %v2954 = vlaneseq
      %v2955 = vshrl.u32 %v2954, 7
      %v2956 = vsub.s32 0, %v2955
      %v2957 = vrot.slane %v2945, %v2956
      %v2958 = vmul.f32 %v2948, %v2953
      %v2959 = vmul.f32 %v2948, %v2957
      %v2960 = vadd.f32 %v2936, %v2958
      %v2961 = vadd.f32 %v2937, %v2959
      %2962 = vset.pattern.permute.xlu0 13
      %2963 = vperm.xlu0 %2962, %v2728
      %v2964 = vpop.permute.xlu0 %2963
      %v2966 = vlaneseq
      %v2967 = vshrl.u32 %v2966, 7
      %v2968 = vsub.s32 1, %v2967
      %v2969 = vrot.slane %v2944, %v2968
      %v2970 = vlaneseq
      %v2971 = vshrl.u32 %v2970, 7
      %v2972 = vsub.s32 1, %v2971
      %v2973 = vrot.slane %v2945, %v2972
      %v2974 = vmul.f32 %v2964, %v2969
      %v2975 = vmul.f32 %v2964, %v2973
      %v2976 = vadd.f32 %v2960, %v2974
      %v2977 = vadd.f32 %v2961, %v2975
      %2978 = vset.pattern.permute.xlu0 14
      %2979 = vperm.xlu0 %2978, %v2728
      %v2980 = vpop.permute.xlu0 %2979
      %v2982 = vlaneseq
      %v2983 = vshrl.u32 %v2982, 7
      %v2984 = vsub.s32 2, %v2983
      %v2985 = vrot.slane %v2944, %v2984
      %v2986 = vlaneseq
      %v2987 = vshrl.u32 %v2986, 7
      %v2988 = vsub.s32 2, %v2987
      %v2989 = vrot.slane %v2945, %v2988
      %v2990 = vmul.f32 %v2980, %v2985
      %v2991 = vmul.f32 %v2980, %v2989
      %v2992 = vadd.f32 %v2976, %v2990
      %v2993 = vadd.f32 %v2977, %v2991
      %2994 = vset.pattern.permute.xlu0 15
      %2995 = vperm.xlu0 %2994, %v2728
      %v2996 = vpop.permute.xlu0 %2995
      %v2998 = vlaneseq
      %v2999 = vshrl.u32 %v2998, 7
      %v3000 = vsub.s32 3, %v2999
      %v3001 = vrot.slane %v2944, %v3000
      %v3002 = vlaneseq
      %v3003 = vshrl.u32 %v3002, 7
      %v3004 = vsub.s32 3, %v3003
      %v3005 = vrot.slane %v2945, %v3004
      %v3006 = vmul.f32 %v2996, %v3001
      %v3007 = vmul.f32 %v2996, %v3005
      %v3008 = vadd.f32 %v2992, %v3006
      %v3009 = vadd.f32 %v2993, %v3007
      %v3010 = vmul.f32 %v2718, %v832
      %v3011 = vmul.f32 %v2719, %v836
      %3012 = vset.pattern.permute.xlu0 16
      %3013 = vperm.xlu0 %3012, %v2728
      %v3014 = vpop.permute.xlu0 %3013
      %v3016 = vlaneseq
      %v3017 = vshrl.u32 %v3016, 7
      %v3018 = vsub.s32 0, %v3017
      %v3019 = vrot.slane %v3010, %v3018
      %v3020 = vlaneseq
      %v3021 = vshrl.u32 %v3020, 7
      %v3022 = vsub.s32 0, %v3021
      %v3023 = vrot.slane %v3011, %v3022
      %v3024 = vmul.f32 %v3014, %v3019
      %v3025 = vmul.f32 %v3014, %v3023
      %v3026 = vadd.f32 %v3008, %v3024
      %v3027 = vadd.f32 %v3009, %v3025
      %3028 = vset.pattern.permute.xlu0 17
      %3029 = vperm.xlu0 %3028, %v2728
      %v3030 = vpop.permute.xlu0 %3029
      %v3032 = vlaneseq
      %v3033 = vshrl.u32 %v3032, 7
      %v3034 = vsub.s32 1, %v3033
      %v3035 = vrot.slane %v3010, %v3034
      %v3036 = vlaneseq
      %v3037 = vshrl.u32 %v3036, 7
      %v3038 = vsub.s32 1, %v3037
      %v3039 = vrot.slane %v3011, %v3038
      %v3040 = vmul.f32 %v3030, %v3035
      %v3041 = vmul.f32 %v3030, %v3039
      %v3042 = vadd.f32 %v3026, %v3040
      %v3043 = vadd.f32 %v3027, %v3041
      %3044 = vset.pattern.permute.xlu0 18
      %3045 = vperm.xlu0 %3044, %v2728
      %v3046 = vpop.permute.xlu0 %3045
      %v3048 = vlaneseq
      %v3049 = vshrl.u32 %v3048, 7
      %v3050 = vsub.s32 2, %v3049
      %v3051 = vrot.slane %v3010, %v3050
      %v3052 = vlaneseq
      %v3053 = vshrl.u32 %v3052, 7
      %v3054 = vsub.s32 2, %v3053
      %v3055 = vrot.slane %v3011, %v3054
      %v3056 = vmul.f32 %v3046, %v3051
      %v3057 = vmul.f32 %v3046, %v3055
      %v3058 = vadd.f32 %v3042, %v3056
      %v3059 = vadd.f32 %v3043, %v3057
      %3060 = vset.pattern.permute.xlu0 19
      %3061 = vperm.xlu0 %3060, %v2728
      %v3062 = vpop.permute.xlu0 %3061
      %v3064 = vlaneseq
      %v3065 = vshrl.u32 %v3064, 7
      %v3066 = vsub.s32 3, %v3065
      %v3067 = vrot.slane %v3010, %v3066
      %v3068 = vlaneseq
      %v3069 = vshrl.u32 %v3068, 7
      %v3070 = vsub.s32 3, %v3069
      %v3071 = vrot.slane %v3011, %v3070
      %v3072 = vmul.f32 %v3062, %v3067
      %v3073 = vmul.f32 %v3062, %v3071
      %v3074 = vadd.f32 %v3058, %v3072
      %v3075 = vadd.f32 %v3059, %v3073
      %3076 = vrot.lane.b32.xlu0 %v2718, 127
      %v3077 = vpop.permute.xlu0 %3076
      %3078 = vrot.lane.b32.xlu0 %v2719, 127
      %v3079 = vpop.permute.xlu0 %3078
      %v3080 = vsel %vm953, %v3077, %v3079
      %v3081 = vsel %vm953, %v3079, %v3077
      %v3082 = vmul.f32 %v3080, %v959
      %v3083 = vmul.f32 %v3081, %v963
      %3084 = vset.pattern.permute.xlu0 20
      %3085 = vperm.xlu0 %3084, %v2728
      %v3086 = vpop.permute.xlu0 %3085
      %v3088 = vlaneseq
      %v3089 = vshrl.u32 %v3088, 7
      %v3090 = vsub.s32 0, %v3089
      %v3091 = vrot.slane %v3082, %v3090
      %v3092 = vlaneseq
      %v3093 = vshrl.u32 %v3092, 7
      %v3094 = vsub.s32 0, %v3093
      %v3095 = vrot.slane %v3083, %v3094
      %v3096 = vmul.f32 %v3086, %v3091
      %v3097 = vmul.f32 %v3086, %v3095
      %v3098 = vadd.f32 %v3074, %v3096
      %v3099 = vadd.f32 %v3075, %v3097
      %3100 = vset.pattern.permute.xlu0 21
      %3101 = vperm.xlu0 %3100, %v2728
      %v3102 = vpop.permute.xlu0 %3101
      %v3104 = vlaneseq
      %v3105 = vshrl.u32 %v3104, 7
      %v3106 = vsub.s32 1, %v3105
      %v3107 = vrot.slane %v3082, %v3106
      %v3108 = vlaneseq
      %v3109 = vshrl.u32 %v3108, 7
      %v3110 = vsub.s32 1, %v3109
      %v3111 = vrot.slane %v3083, %v3110
      %v3112 = vmul.f32 %v3102, %v3107
      %v3113 = vmul.f32 %v3102, %v3111
      %v3114 = vadd.f32 %v3098, %v3112
      %v3115 = vadd.f32 %v3099, %v3113
      %3116 = vset.pattern.permute.xlu0 22
      %3117 = vperm.xlu0 %3116, %v2728
      %v3118 = vpop.permute.xlu0 %3117
      %v3120 = vlaneseq
      %v3121 = vshrl.u32 %v3120, 7
      %v3122 = vsub.s32 2, %v3121
      %v3123 = vrot.slane %v3082, %v3122
      %v3124 = vlaneseq
      %v3125 = vshrl.u32 %v3124, 7
      %v3126 = vsub.s32 2, %v3125
      %v3127 = vrot.slane %v3083, %v3126
      %v3128 = vmul.f32 %v3118, %v3123
      %v3129 = vmul.f32 %v3118, %v3127
      %v3130 = vadd.f32 %v3114, %v3128
      %v3131 = vadd.f32 %v3115, %v3129
      %3132 = vset.pattern.permute.xlu0 23
      %3133 = vperm.xlu0 %3132, %v2728
      %v3134 = vpop.permute.xlu0 %3133
      %v3136 = vlaneseq
      %v3137 = vshrl.u32 %v3136, 7
      %v3138 = vsub.s32 3, %v3137
      %v3139 = vrot.slane %v3082, %v3138
      %v3140 = vlaneseq
      %v3141 = vshrl.u32 %v3140, 7
      %v3142 = vsub.s32 3, %v3141
      %v3143 = vrot.slane %v3083, %v3142
      %v3144 = vmul.f32 %v3134, %v3139
      %v3145 = vmul.f32 %v3134, %v3143
      %v3146 = vadd.f32 %v3130, %v3144
      %v3147 = vadd.f32 %v3131, %v3145
      %3148 = vrot.lane.b32.xlu0 %v2718, 113
      %v3149 = vpop.permute.xlu0 %3148
      %3150 = vrot.lane.b32.xlu0 %v2719, 113
      %v3151 = vpop.permute.xlu0 %3150
      %v3152 = vsel %vm1036, %v3149, %v3151
      %v3153 = vsel %vm1036, %v3151, %v3149
      %v3154 = vmul.f32 %v3152, %v1042
      %v3155 = vmul.f32 %v3153, %v1046
      %3156 = vset.pattern.permute.xlu0 24
      %3157 = vperm.xlu0 %3156, %v2728
      %v3158 = vpop.permute.xlu0 %3157
      %v3160 = vlaneseq
      %v3161 = vshrl.u32 %v3160, 7
      %v3162 = vsub.s32 0, %v3161
      %v3163 = vrot.slane %v3154, %v3162
      %v3164 = vlaneseq
      %v3165 = vshrl.u32 %v3164, 7
      %v3166 = vsub.s32 0, %v3165
      %v3167 = vrot.slane %v3155, %v3166
      %v3168 = vmul.f32 %v3158, %v3163
      %v3169 = vmul.f32 %v3158, %v3167
      %v3170 = vadd.f32 %v3146, %v3168
      %v3171 = vadd.f32 %v3147, %v3169
      %3172 = vset.pattern.permute.xlu0 25
      %3173 = vperm.xlu0 %3172, %v2728
      %v3174 = vpop.permute.xlu0 %3173
      %v3176 = vlaneseq
      %v3177 = vshrl.u32 %v3176, 7
      %v3178 = vsub.s32 1, %v3177
      %v3179 = vrot.slane %v3154, %v3178
      %v3180 = vlaneseq
      %v3181 = vshrl.u32 %v3180, 7
      %v3182 = vsub.s32 1, %v3181
      %v3183 = vrot.slane %v3155, %v3182
      %v3184 = vmul.f32 %v3174, %v3179
      %v3185 = vmul.f32 %v3174, %v3183
      %v3186 = vadd.f32 %v3170, %v3184
      %v3187 = vadd.f32 %v3171, %v3185
      %3188 = vset.pattern.permute.xlu0 26
      %3189 = vperm.xlu0 %3188, %v2728
      %v3190 = vpop.permute.xlu0 %3189
      %v3192 = vlaneseq
      %v3193 = vshrl.u32 %v3192, 7
      %v3194 = vsub.s32 2, %v3193
      %v3195 = vrot.slane %v3154, %v3194
      %v3196 = vlaneseq
      %v3197 = vshrl.u32 %v3196, 7
      %v3198 = vsub.s32 2, %v3197
      %v3199 = vrot.slane %v3155, %v3198
      %v3200 = vmul.f32 %v3190, %v3195
      %v3201 = vmul.f32 %v3190, %v3199
      %v3202 = vadd.f32 %v3186, %v3200
      %v3203 = vadd.f32 %v3187, %v3201
      %3204 = vset.pattern.permute.xlu0 27
      %3205 = vperm.xlu0 %3204, %v2728
      %v3206 = vpop.permute.xlu0 %3205
      %v3208 = vlaneseq
      %v3209 = vshrl.u32 %v3208, 7
      %v3210 = vsub.s32 3, %v3209
      %v3211 = vrot.slane %v3154, %v3210
      %v3212 = vlaneseq
      %v3213 = vshrl.u32 %v3212, 7
      %v3214 = vsub.s32 3, %v3213
      %v3215 = vrot.slane %v3155, %v3214
      %v3216 = vmul.f32 %v3206, %v3211
      %v3217 = vmul.f32 %v3206, %v3215
      %v3218 = vadd.f32 %v3202, %v3216
      %v3219 = vadd.f32 %v3203, %v3217
      %3220 = vrot.lane.b32.xlu0 %v2718, 112
      %v3221 = vpop.permute.xlu0 %3220
      %3222 = vrot.lane.b32.xlu0 %v2719, 112
      %v3223 = vpop.permute.xlu0 %3222
      %v3224 = vsel %vm1119, %v3221, %v3223
      %v3225 = vsel %vm1119, %v3223, %v3221
      %v3226 = vmul.f32 %v3224, %v1125
      %v3227 = vmul.f32 %v3225, %v1129
      %3228 = vset.pattern.permute.xlu0 28
      %3229 = vperm.xlu0 %3228, %v2728
      %v3230 = vpop.permute.xlu0 %3229
      %v3232 = vlaneseq
      %v3233 = vshrl.u32 %v3232, 7
      %v3234 = vsub.s32 0, %v3233
      %v3235 = vrot.slane %v3226, %v3234
      %v3236 = vlaneseq
      %v3237 = vshrl.u32 %v3236, 7
      %v3238 = vsub.s32 0, %v3237
      %v3239 = vrot.slane %v3227, %v3238
      %v3240 = vmul.f32 %v3230, %v3235
      %v3241 = vmul.f32 %v3230, %v3239
      %v3242 = vadd.f32 %v3218, %v3240
      %v3243 = vadd.f32 %v3219, %v3241
      %3244 = vset.pattern.permute.xlu0 29
      %3245 = vperm.xlu0 %3244, %v2728
      %v3246 = vpop.permute.xlu0 %3245
      %v3248 = vlaneseq
      %v3249 = vshrl.u32 %v3248, 7
      %v3250 = vsub.s32 1, %v3249
      %v3251 = vrot.slane %v3226, %v3250
      %v3252 = vlaneseq
      %v3253 = vshrl.u32 %v3252, 7
      %v3254 = vsub.s32 1, %v3253
      %v3255 = vrot.slane %v3227, %v3254
      %v3256 = vmul.f32 %v3246, %v3251
      %v3257 = vmul.f32 %v3246, %v3255
      %v3258 = vadd.f32 %v3242, %v3256
      %v3259 = vadd.f32 %v3243, %v3257
      %3260 = vset.pattern.permute.xlu0 30
      %3261 = vperm.xlu0 %3260, %v2728
      %v3262 = vpop.permute.xlu0 %3261
      %v3264 = vlaneseq
      %v3265 = vshrl.u32 %v3264, 7
      %v3266 = vsub.s32 2, %v3265
      %v3267 = vrot.slane %v3226, %v3266
      %v3268 = vlaneseq
      %v3269 = vshrl.u32 %v3268, 7
      %v3270 = vsub.s32 2, %v3269
      %v3271 = vrot.slane %v3227, %v3270
      %v3272 = vmul.f32 %v3262, %v3267
      %v3273 = vmul.f32 %v3262, %v3271
      %v3274 = vadd.f32 %v3258, %v3272
      %v3275 = vadd.f32 %v3259, %v3273
      %3276 = vset.pattern.permute.xlu0 31
      %3277 = vperm.xlu0 %3276, %v2728
      %v3278 = vpop.permute.xlu0 %3277
      %v3280 = vlaneseq
      %v3281 = vshrl.u32 %v3280, 7
      %v3282 = vsub.s32 3, %v3281
      %v3283 = vrot.slane %v3226, %v3282
      %v3284 = vlaneseq
      %v3285 = vshrl.u32 %v3284, 7
      %v3286 = vsub.s32 3, %v3285
      %v3287 = vrot.slane %v3227, %v3286
      %v3288 = vmul.f32 %v3278, %v3283
      %v3289 = vmul.f32 %v3278, %v3287
      %v3290 = vadd.f32 %v3274, %v3288
      %v3291 = vadd.f32 %v3275, %v3289
      %3292 = vrot.lane.b32.xlu0 %v2718, 111
      %v3293 = vpop.permute.xlu0 %3292
      %3294 = vrot.lane.b32.xlu0 %v2719, 111
      %v3295 = vpop.permute.xlu0 %3294
      %v3296 = vsel %vm1202, %v3293, %v3295
      %v3297 = vsel %vm1202, %v3295, %v3293
      %v3298 = vmul.f32 %v3296, %v1208
      %v3299 = vmul.f32 %v3297, %v1212
      %3300 = vset.pattern.permute.xlu0 32
      %3301 = vperm.xlu0 %3300, %v2728
      %v3302 = vpop.permute.xlu0 %3301
      %v3304 = vlaneseq
      %v3305 = vshrl.u32 %v3304, 7
      %v3306 = vsub.s32 0, %v3305
      %v3307 = vrot.slane %v3298, %v3306
      %v3308 = vlaneseq
      %v3309 = vshrl.u32 %v3308, 7
      %v3310 = vsub.s32 0, %v3309
      %v3311 = vrot.slane %v3299, %v3310
      %v3312 = vmul.f32 %v3302, %v3307
      %v3313 = vmul.f32 %v3302, %v3311
      %v3314 = vadd.f32 %v3290, %v3312
      %v3315 = vadd.f32 %v3291, %v3313
      %3316 = vset.pattern.permute.xlu0 33
      %3317 = vperm.xlu0 %3316, %v2728
      %v3318 = vpop.permute.xlu0 %3317
      %v3320 = vlaneseq
      %v3321 = vshrl.u32 %v3320, 7
      %v3322 = vsub.s32 1, %v3321
      %v3323 = vrot.slane %v3298, %v3322
      %v3324 = vlaneseq
      %v3325 = vshrl.u32 %v3324, 7
      %v3326 = vsub.s32 1, %v3325
      %v3327 = vrot.slane %v3299, %v3326
      %v3328 = vmul.f32 %v3318, %v3323
      %v3329 = vmul.f32 %v3318, %v3327
      %v3330 = vadd.f32 %v3314, %v3328
      %v3331 = vadd.f32 %v3315, %v3329
      %3332 = vset.pattern.permute.xlu0 34
      %3333 = vperm.xlu0 %3332, %v2728
      %v3334 = vpop.permute.xlu0 %3333
      %v3336 = vlaneseq
      %v3337 = vshrl.u32 %v3336, 7
      %v3338 = vsub.s32 2, %v3337
      %v3339 = vrot.slane %v3298, %v3338
      %v3340 = vlaneseq
      %v3341 = vshrl.u32 %v3340, 7
      %v3342 = vsub.s32 2, %v3341
      %v3343 = vrot.slane %v3299, %v3342
      %v3344 = vmul.f32 %v3334, %v3339
      %v3345 = vmul.f32 %v3334, %v3343
      %v3346 = vadd.f32 %v3330, %v3344
      %v3347 = vadd.f32 %v3331, %v3345
      %3348 = vset.pattern.permute.xlu0 35
      %3349 = vperm.xlu0 %3348, %v2728
      %v3350 = vpop.permute.xlu0 %3349
      %v3352 = vlaneseq
      %v3353 = vshrl.u32 %v3352, 7
      %v3354 = vsub.s32 3, %v3353
      %v3355 = vrot.slane %v3298, %v3354
      %v3356 = vlaneseq
      %v3357 = vshrl.u32 %v3356, 7
      %v3358 = vsub.s32 3, %v3357
      %v3359 = vrot.slane %v3299, %v3358
      %v3360 = vmul.f32 %v3350, %v3355
      %v3361 = vmul.f32 %v3350, %v3359
      %v3362 = vadd.f32 %v3346, %v3360
      %v3363 = vadd.f32 %v3347, %v3361
      %v3364 = vld [vmem:[%s6] sm:$0xf]
      %3366 = vset.pattern.permute.xlu0 0
      %3367 = vperm.xlu0 %3366, %v3364
      %v3368 = vpop.permute.xlu0 %3367
      %v3370 = vadd.f32 %v3362, %v3368
      %v3371 = vadd.f32 %v3363, %v3368
      %v3372 = vsel %vm1289, %v3370, 0.0
      %v3373 = vsel %vm1289, %v3371, 0.0
      %v3374 = vadd.f32 %v3372, %v3373
      %3375 = vadd.xlane.f32.xlu0 %v3374
      %v3376 = vpop.xlane.xlu0 %3375
      %v3377 = vmul.f32 %v3376, %v1295
      %v3378 = vsub.f32 %v3370, %v3377
      %v3379 = vsub.f32 %v3371, %v3377
      %v3380 = vmul.f32 %v3378, %v3378
      %v3381 = vmul.f32 %v3379, %v3379
      %v3382 = vsel %vm1289, %v3380, 0.0
      %v3383 = vsel %vm1289, %v3381, 0.0
      %v3384 = vadd.f32 %v3382, %v3383
      %3385 = vadd.xlane.f32.xlu0 %v3384
      %v3386 = vpop.xlane.xlu0 %3385
      %v3387 = vmul.f32 %v3386, %v1295
      %v3388 = vadd.f32 %v3387, 1e-05
      %v3389 = vrsqrt.pop %v3388
      %v3390 = vmul.f32 %v3378, %v3389
      %v3391 = vmul.f32 %v3379, %v3389
      %v3392 = vmax.f32 %v3390, 0.0
      %v3393 = vmax.f32 %v3391, 0.0
      %v3394 = vsub.f32 0.0, %v1985
      %v3395 = vsub.f32 0.0, %v1986
      %v3396 = vmul.f32 %v3394, 1.442695
      %v3397 = vpow.pop %v3396
      %v3398 = vmul.f32 %v3395, 1.442695
      %v3399 = vpow.pop %v3398
      %v3400 = vadd.f32 %v3397, 1.0
      %v3401 = vadd.f32 %v3399, 1.0
      %v3402 = vrcp.pop %v3400
      %v3403 = vrcp.pop %v3401
      %v3404 = vmul.f32 %v3392, %v3402
      %v3405 = vmul.f32 %v3393, %v3403
      %v3406 = vadd.f32 %v3404, %v490
      %v3407 = vadd.f32 %v3405, %v1988
      %v3410 = vcombine.low %v3406, %v3407
      %3412 = vst [vmem:[%s475] sm:$0xff] %v3410
      %v3415 = vcombine.low %v1985, %v1986
      %3417 = vst [vmem:[%s480] sm:$0xff] %v3415
      %v3420 = vcombine.low %v3404, %v3405
      %3422 = vst [vmem:[%s485] sm:$0xff] %v3420
      %p3423 = scmp.lt.s32.totalorder %s25, 1
      %s3424 = scalar_select %p3423, %s25, 1
      %s3425 = smul.addr %s3424, 2
      %s3426 = smul.addr %s3425, 4
      %s3427 = scalar_lea.vmem %s11, %s3426
      %p3428 = scmp.lt.s32.totalorder %s25, 1
      %s3429 = scalar_select %p3428, %s25, 1
      %s3430 = smul.addr %s3429, 2
      %s3431 = smul.addr %s3430, 4
      %s3432 = scalar_lea.vmem %s12, %s3431
      %p3433 = scmp.lt.s32.totalorder %s25, 1
      %s3434 = scalar_select %p3433, %s25, 1
      %s3435 = smul.addr %s3434, 2
      %s3436 = smul.addr %s3435, 4
      %s3437 = scalar_lea.vmem %s13, %s3436
      // Predicated region
      $region65: #{style_attention_block_forward.1} parent=63 // pred_check
        %p3438 = pneg %p284
      $region66: #{style_attention_block_forward.1} parent=63 // pred_check_branch
        %3440 = sbr.rel (%p3438) target = $region68
      $region67: #{style_attention_block_forward.1} parent=63 // pred_region
        _
      $region68: #{style_attention_block_forward.1} parent=63 // pred_fallthru
        _
      // Predicated region
      $region69: #{style_attention_block_forward.1} parent=63 // pred_check
        %p3441 = pneg %p310
      $region70: #{style_attention_block_forward.1} parent=63 // pred_check_branch
        %3443 = sbr.rel (%p3441) target = $region72
      $region71: #{style_attention_block_forward.1} parent=63 // pred_region
        _
      $region72: #{style_attention_block_forward.1} parent=63 // pred_fallthru
        _
      // Predicated region
      $region73: #{style_attention_block_forward.1} parent=63 // pred_check
        %p3444 = pneg %p336
      $region74: #{style_attention_block_forward.1} parent=63 // pred_check_branch
        %3446 = sbr.rel (%p3444) target = $region76
      $region75: #{style_attention_block_forward.1} parent=63 // pred_region
        _
      $region76: #{style_attention_block_forward.1} parent=63 // pred_fallthru
        _
    $region64: #{style_attention_block_forward.1} parent=5 // pred_fallthru
      _
    %p3447 = scmp.le.s32.totalorder 2, %s20
    // Predicated region
    $region77: #{style_attention_block_forward.1} parent=5 // pred_check
      %p3448 = pneg %p3447
    $region78: #{style_attention_block_forward.1} parent=5 // pred_check_branch
      %3450 = sbr.rel (%p3448) target = $region80
    $region79: #{style_attention_block_forward.1} parent=5 // pred_region
      %s3451 = ssub.s32 %s20, 2
      // Predicated region
      $region81: #{style_attention_block_forward.1} parent=79 // pred_check
        %p3452 = pneg %p290
      $region82: #{style_attention_block_forward.1} parent=79 // pred_check_branch
        %3454 = sbr.rel (%p3452) target = $region84
      $region83: #{style_attention_block_forward.1} parent=79 // pred_region
        %p3455 = scmp.lt.s32.totalorder %s26, 1
        %s3456 = scalar_select %p3455, %s26, 1
        %s3457 = smul.addr %s3456, 2
        %s3458 = smul.addr %s3457, 4
        %s3459 = scalar_lea.vmem %s11, %s3458
      $region84: #{style_attention_block_forward.1} parent=79 // pred_fallthru
        _
      // Predicated region
      $region85: #{style_attention_block_forward.1} parent=79 // pred_check
        %p3460 = pneg %p316
      $region86: #{style_attention_block_forward.1} parent=79 // pred_check_branch
        %3462 = sbr.rel (%p3460) target = $region88
      $region87: #{style_attention_block_forward.1} parent=79 // pred_region
        %p3463 = scmp.lt.s32.totalorder %s26, 1
        %s3464 = scalar_select %p3463, %s26, 1
        %s3465 = smul.addr %s3464, 2
        %s3466 = smul.addr %s3465, 4
        %s3467 = scalar_lea.vmem %s12, %s3466
      $region88: #{style_attention_block_forward.1} parent=79 // pred_fallthru
        _
      // Predicated region
      $region89: #{style_attention_block_forward.1} parent=79 // pred_check
        %p3468 = pneg %p342
      $region90: #{style_attention_block_forward.1} parent=79 // pred_check_branch
        %3470 = sbr.rel (%p3468) target = $region92
      $region91: #{style_attention_block_forward.1} parent=79 // pred_region
        %p3471 = scmp.lt.s32.totalorder %s26, 1
        %s3472 = scalar_select %p3471, %s26, 1
        %s3473 = smul.addr %s3472, 2
        %s3474 = smul.addr %s3473, 4
        %s3475 = scalar_lea.vmem %s13, %s3474
      $region92: #{style_attention_block_forward.1} parent=79 // pred_fallthru
        _
    $region80: #{style_attention_block_forward.1} parent=5 // pred_fallthru
      _
  $region6: #{style_attention_block_forward.1} parent=0 // loop_footer
    %s24 = sadd.s32 1, %s20
  $region7: #{style_attention_block_forward.1} parent=0 // loop_footer_branch
    %19 = sbr.rel target = $region3
  $region8: #{style_attention_block_forward.1} parent=0 // loop_exit
    _

</llo_original>
